<compile_context>
chip_gen: v5e
topology: v5e:2x2
jax: 0.10.0
libtpu: 0.0.40
codegen_flags: <defaults>
</compile_context>

<pallas_src>
import numpy as np

import jax
import jax.numpy as jnp
from jax.experimental import pallas as pl
from jax.experimental.pallas import tpu as pltpu

BN_EPS = 1e-5
F32 = jnp.float32


# ----------------------------------------------------------- static planning

def build_plan(cfg):
    assert cfg["kernel_size"] == 3 and cfg["stride"] == 1 and cfg["padding"] == 1, (
        "kernel hard-codes the size-preserving 3x3/stride1/pad1 convolution "
        "the module is used with")
    B = cfg["batch"]
    img = cfg["img_size"]
    cin = cfg["in_channels"]
    c0 = cin + 1
    hidden = list(cfg["hidden_dims"])
    scales = list(cfg["scale_strategy"])
    assert len(scales) <= len(hidden)

    layers = []
    H = W = img
    prev = c0
    for i, h in enumerate(hidden):
        down_from = (H, W)
        if i < len(scales):
            H, W = int(H * scales[i]), int(W * scales[i])
        layers.append(dict(
            cin=prev, cout=h, H=H, W=W, rows=B * H * W,
            down=(i if i < len(scales) else None), down_from=down_from,
            bias=(i == len(hidden) - 1),
            act=("tanh" if i == len(hidden) - 1 else "leaky")))
        prev = h

    margin = max(l["W"] for l in layers) + 1     # >= max |tap offset| = W + 1
    rows_max = max(l["rows"] for l in layers)
    cmax = max(l["cin"] for l in layers)
    return dict(
        B=B, img=img, S=img * img, rows_stem=B * img * img,
        cin=cin, c0=c0, nc=cfg["num_classes"], L=cfg["latent_size"],
        hidden=hidden, scales=scales, layers=layers,
        n_final=H, flat=hidden[-1] * H * W,
        margin=margin, rows_max=rows_max,
        act_cols=margin + rows_max + margin,
        cmax=cmax, rhs_rows=9 * cmax,
    )


def _nearest_select_block(H, W, Ho, Wo):
    """Per-image 0/1 matrix so x(C, H*W) @ S == F.interpolate(x, 'nearest')
    flattened.  (Block-diagonal structure over the batch is exploited by
    applying this block per batch slice inside the kernel.)"""
    hi = np.floor(np.arange(Ho) * (H / Ho)).astype(np.int64)
    wi = np.floor(np.arange(Wo) * (W / Wo)).astype(np.int64)
    sel = np.zeros((H * W, Ho * Wo), np.float32)
    for ho in range(Ho):
        for wo in range(Wo):
            sel[hi[ho] * W + wi[wo], ho * Wo + wo] = 1.0
    return jnp.asarray(sel)


def _tap_masks(B, H, W):
    """mask[t, b*H*W + h*W + w] == 1 iff 3x3 tap t stays inside the image."""
    m = np.zeros((9, B * H * W), np.float32)
    hs, ws = np.arange(H), np.arange(W)
    t = 0
    for dh in (-1, 0, 1):
        for dw in (-1, 0, 1):
            vh = (hs + dh >= 0) & (hs + dh < H)
            vw = (ws + dw >= 0) & (ws + dw < W)
            valid = (vh[:, None] & vw[None, :]).astype(np.float32)
            m[t] = np.tile(valid.reshape(-1), B)
            t += 1
    return jnp.asarray(m)


def build_constants(plan):
    downs, masks = [], []
    for l in plan["layers"]:
        if l["down"] is not None:
            hf, wf = l["down_from"]
            downs.append(_nearest_select_block(hf, wf, l["H"], l["W"]))
        masks.append(_tap_masks(plan["B"], l["H"], l["W"]))
    return dict(downs=downs, masks=masks)


# ----------------------------------------------------------------- parameters

def init_params(key, plan):
    """Init like the PyTorch module (U(-0.08,0.08) weights, zero biases) and
    store pre-packed in the layouts the fused kernel consumes."""
    u = lambda k, shape: jax.random.uniform(k, shape, F32, minval=-0.08, maxval=0.08)
    n_layers = len(plan["layers"])
    keys = jax.random.split(key, 4 + n_layers)
    nc, S, cin, L, flat = plan["nc"], plan["S"], plan["cin"], plan["L"], plan["flat"]

    params = {}
    # embed_class: nn.Linear(nc, S) -- torch weight (S, nc) -> packed (nc, S)
    params["wec"] = u(keys[0], (S, nc)).T
    params["bec"] = jnp.zeros((1, S), F32)
    # embed_data: nn.Conv2d(cin, cin, 1) -- torch weight (cin, cin, 1, 1) -> (cin, cin)
    params["wed"] = u(keys[1], (cin, cin, 1, 1)).reshape(cin, cin)
    params["bed"] = jnp.zeros((cin, 1), F32)
    # conv trunk: torch (cout, cin, 3, 3) -> packed (cout, 9*cin), tap-major cols
    wconv = []
    for i, l in enumerate(plan["layers"]):
        w = u(keys[4 + i], (l["cout"], l["cin"], 3, 3))
        wconv.append(jnp.transpose(w, (0, 2, 3, 1)).reshape(l["cout"], 9 * l["cin"]))
    params["wconv"] = wconv
    # only the last conv has a bias in the reference model
    params["bconv_last"] = jnp.zeros((plan["hidden"][-1], 1), F32)
    # fc_mu / fc_var fused: torch weights (L, flat) each -> packed (flat, 2L)
    wmu, wvar = u(keys[2], (L, flat)), u(keys[3], (L, flat))
    params["wfc"] = jnp.concatenate([wmu.T, wvar.T], axis=1)
    params["bfc"] = jnp.zeros((1, 2 * L), F32)
    return params


# --------------------------------------------------------------------- kernel

def _bn_rows(y, n):
    """Training-mode BatchNorm2d (gamma=1, beta=0) on a (C, N*H*W) slab:
    per-channel batch stats over the lane axis, two-pass variance.
    TODO(synk): running_mean/var buffers are not tracked (forward-only,
    batch statistics); eval-mode stats are not supported."""
    inv_n = 1.0 / float(n)
    mean = jnp.sum(y, axis=1, keepdims=True) * inv_n
    d = y - mean
    var = jnp.sum(d * d, axis=1, keepdims=True) * inv_n
    return d * jax.lax.rsqrt(var + BN_EPS)


def _bn_all(y, n):
    """BatchNorm of the single class-embedding channel held as (B, S):
    stats over all B*S elements (identical to BN on the concatenated tensor
    because per-channel statistics never mix channels)."""
    inv_n = 1.0 / float(n)
    s = jnp.sum(y, axis=1, keepdims=True)
    mean = jnp.sum(s, axis=0, keepdims=True) * inv_n
    d = y - mean
    v = jnp.sum(d * d, axis=1, keepdims=True)
    var = jnp.sum(v, axis=0, keepdims=True) * inv_n
    return d * jax.lax.rsqrt(var + BN_EPS)


def make_kernel(plan):
    B, S, cin = plan["B"], plan["S"], plan["cin"]
    L, layers, margin = plan["L"], plan["layers"], plan["margin"]
    n_final = plan["n_final"]
    n_layers = len(layers)
    n_down = sum(1 for l in layers if l["down"] is not None)

    def kernel(*refs):
        x_ref, y1h_ref, eps_ref, wec_ref, bec_ref, wed_ref, bed_ref = refs[:7]
        p = 7
        wconv_refs = refs[p:p + n_layers]; p += n_layers
        bconv_ref = refs[p]; p += 1
        down_refs = refs[p:p + n_down]; p += n_down
        mask_refs = refs[p:p + n_layers]; p += n_layers
        wfc_ref, bfc_ref = refs[p], refs[p + 1]; p += 2
        z_ref = refs[p]; p += 1
        act_ref, rhs_ref, xf_ref = refs[p], refs[p + 1], refs[p + 2]

        # zero the padded tap-staging buffer once so out-of-image taps read 0
        act_ref[...] = jnp.zeros_like(act_ref)

        # ---- stem: embed_data 1x1 conv, embed_class Linear, per-channel BN ---
        # (kept in registers; the channel concat happens implicitly when the
        #  two pieces are written into the conv staging buffer below)
        ei = jnp.dot(wed_ref[...], x_ref[...],
                     preferred_element_type=F32) + bed_ref[...]     # (cin, B*S)
        ec = jnp.dot(y1h_ref[...], wec_ref[...],
                     preferred_element_type=F32) + bec_ref[...]     # (B, S)
        ei = _bn_rows(ei, B * S)
        ec = _bn_all(ec, B * S)

        cur = None
        # ---- conv trunk: everything stays resident in VMEM -------------------
        for i, l in enumerate(layers):
            c_in, c_out, rows, W = l["cin"], l["cout"], l["rows"], l["W"]
            hwo = l["H"] * l["W"]

            # stage this layer's input into the zero-padded scratch.  If the
            # layer has a nearest-interpolate, it is fused here as a per-image
            # selection matmul whose result lands directly in the scratch.
            if l["down"] is not None:
                hf, wf = l["down_from"]
                hwf = hf * wf
                sel = down_refs[l["down"]][...]                    # (hwf, hwo)
                for b in range(B):
                    lo = margin + b * hwo
                    if i == 0:
                        act_ref[0:cin, lo:lo + hwo] = jnp.dot(
                            ei[:, b * hwf:(b + 1) * hwf], sel,
                            preferred_element_type=F32)
                        act_ref[cin:cin + 1, lo:lo + hwo] = jnp.dot(
                            ec[b:b + 1, :], sel, preferred_element_type=F32)
                    else:
                        act_ref[0:c_in, lo:lo + hwo] = jnp.dot(
                            cur[:, b * hwf:(b + 1) * hwf], sel,
                            preferred_element_type=F32)
            else:
                if i == 0:
                    act_ref[0:cin, margin:margin + rows] = ei
                    for b in range(B):
                        act_ref[cin:cin + 1, margin + b * S:margin + (b + 1) * S] = \
                            ec[b:b + 1, :]
                else:
                    act_ref[0:c_in, margin:margin + rows] = cur

            # in-VMEM im2col: 9 shifted static-slice loads (masked at the
            # borders) stacked into a (9*c_in, rows) slab -> ONE MXU matmul.
            msk = mask_refs[i][...]                                # (9, rows)
            t = 0
            for dh in (-1, 0, 1):
                for dw in (-1, 0, 1):
                    off = dh * W + dw
                    xs = act_ref[0:c_in, margin + off:margin + off + rows]
                    rhs_ref[t * c_in:(t + 1) * c_in, 0:rows] = xs * msk[t:t + 1, :]
                    t += 1
            acc = jnp.dot(wconv_refs[i][...], rhs_ref[0:9 * c_in, 0:rows],
                          preferred_element_type=F32)
            if l["bias"]:                        # only the last conv has a bias
                acc = acc + bconv_ref[...]
            acc = _bn_rows(acc, rows)
            cur = (jnp.tanh(acc) if l["act"] == "tanh"
                   else jnp.where(acc >= 0.0, acc, 0.2 * acc))     # LeakyReLU(0.2)

        # ---- flatten (torch NCHW order) + fused fc_mu/fc_var + reparam -------
        npx = n_final * n_final
        c_last = layers[-1]["cout"]
        for b in range(B):                       # direct register->scratch copies
            for c in range(c_last):
                xf_ref[b:b + 1, c * npx:(c + 1) * npx] = \
                    cur[c:c + 1, b * npx:(b + 1) * npx]
        out = jnp.dot(xf_ref[...], wfc_ref[...],
                      preferred_element_type=F32) + bfc_ref[...]
        mu = out[:, 0:L]
        lv = jnp.clip(out[:, L:2 * L], -5.0, 3.0)
        # TODO(synk): torch.randn_like noise is drawn with jax.random outside
        # the kernel (no bit-exact Pallas RNG equivalent); the clip/exp/affine
        # reparameterization math runs in-kernel.
        epsv = jnp.clip(eps_ref[...], -10.0, 10.0)
        z_ref[...] = epsv * jnp.exp(0.5 * lv) + mu

    return kernel


# -------------------------------------------------------------------- forward

def make_encoder_forward(cfg):
    plan = build_plan(cfg)
    consts = build_constants(plan)
    kernel = make_kernel(plan)
    B, L, S = plan["B"], plan["L"], plan["S"]

    # rough advisory cost estimate for XLA scheduling around the custom call
    flops = 2 * plan["cin"] * plan["cin"] * plan["rows_stem"]
    flops += 2 * B * plan["nc"] * S
    for l in plan["layers"]:
        if l["down"] is not None:
            hf, wf = l["down_from"]
            flops += 2 * l["cin"] * (hf * wf) * (l["H"] * l["W"]) * B
        flops += 2 * 9 * l["cin"] * l["cout"] * l["rows"]
    flops += 2 * B * plan["flat"] * (2 * L)
    trans = plan["layers"][-1]["cout"] * plan["layers"][-1]["rows"] + 2 * B * L

    def forward(params, inputs, labels, eps):
        bsz, c_in, h, w = inputs.shape
        # lane-dense channel-major layout: (Cin, B*H*W)
        x_cm = jnp.transpose(inputs, (1, 0, 2, 3)).reshape(c_in, bsz * h * w)
        y1h = jax.nn.one_hot(labels, plan["nc"], dtype=F32)
        args = [x_cm.astype(F32), y1h, eps.astype(F32),
                params["wec"], params["bec"], params["wed"], params["bed"],
                *params["wconv"], params["bconv_last"],
                *consts["downs"], *consts["masks"],
                params["wfc"], params["bfc"]]
        bytes_accessed = 4 * (sum(int(a.size) for a in args) + B * L)
        vmem = pltpu.MemorySpace.VMEM
        return pl.pallas_call(
            kernel,
            out_shape=jax.ShapeDtypeStruct((B, L), F32),
            in_specs=[pl.BlockSpec(memory_space=vmem) for _ in args],
            out_specs=pl.BlockSpec(memory_space=vmem),
            scratch_shapes=[
                pltpu.VMEM((plan["cmax"], plan["act_cols"]), F32),    # padded taps
                pltpu.VMEM((plan["rhs_rows"], plan["rows_max"]), F32),  # im2col slab
                pltpu.VMEM((B, plan["flat"]), F32),                   # flatten buf
            ],
            cost_estimate=pl.CostEstimate(
                flops=int(flops), transcendentals=int(trans),
                bytes_accessed=int(bytes_accessed)),
        )(*args)

    return jax.jit(forward)


# ----------------------------------------------------------------------- main

if __name__ == "__main__":
    cfg = dict(
        batch=2,
        in_channels=3,
        num_classes=4,
        latent_size=8,
        img_size=16,
        hidden_dims=[8, 16, 16, 16],
        scale_strategy=[0.5, 0.5],
        # passed via **kwargs in the reference model; size-preserving conv
        kernel_size=3, stride=1, padding=1,
    )
    plan = build_plan(cfg)

    key = jax.random.PRNGKey(0)
    k_inp, k_lab, k_eps, k_par = jax.random.split(key, 4)
    inputs = jax.random.normal(
        k_inp, (cfg["batch"], cfg["in_channels"], cfg["img_size"], cfg["img_size"]),
        F32)
    labels = jax.random.randint(k_lab, (cfg["batch"],), 0, cfg["num_classes"])
    eps = jax.random.normal(k_eps, (cfg["batch"], cfg["latent_size"]), F32)

    params = init_params(k_par, plan)
    forward = make_encoder_forward(cfg)

    z = forward(params, inputs, labels, eps)
    jax.block_until_ready(z)
    assert z.shape == (cfg["batch"], cfg["latent_size"])
    assert bool(jnp.all(jnp.isfinite(z)))
    print("KERNEL_OK")
</pallas_src>

<mosaic_0001>
module attributes {stable_mosaic.version = 11 : i64} {
  func.func @kernel(%arg0: memref<3x512xf32, #tpu.memory_space<vmem>>, %arg1: memref<2x4xf32, #tpu.memory_space<vmem>>, %arg2: memref<2x8xf32, #tpu.memory_space<vmem>>, %arg3: memref<4x256xf32, #tpu.memory_space<vmem>>, %arg4: memref<1x256xf32, #tpu.memory_space<vmem>>, %arg5: memref<3x3xf32, #tpu.memory_space<vmem>>, %arg6: memref<3x1xf32, #tpu.memory_space<vmem>>, %arg7: memref<8x36xf32, #tpu.memory_space<vmem>>, %arg8: memref<16x72xf32, #tpu.memory_space<vmem>>, %arg9: memref<16x144xf32, #tpu.memory_space<vmem>>, %arg10: memref<16x144xf32, #tpu.memory_space<vmem>>, %arg11: memref<16x1xf32, #tpu.memory_space<vmem>>, %arg12: memref<256x64xf32, #tpu.memory_space<vmem>>, %arg13: memref<64x16xf32, #tpu.memory_space<vmem>>, %arg14: memref<9x128xf32, #tpu.memory_space<vmem>>, %arg15: memref<9x32xf32, #tpu.memory_space<vmem>>, %arg16: memref<9x32xf32, #tpu.memory_space<vmem>>, %arg17: memref<9x32xf32, #tpu.memory_space<vmem>>, %arg18: memref<256x16xf32, #tpu.memory_space<vmem>>, %arg19: memref<1x16xf32, #tpu.memory_space<vmem>>, %arg20: memref<2x8xf32, #tpu.memory_space<vmem>>, %arg21: memref<16x146xf32, #tpu.memory_space<vmem>>, %arg22: memref<144x128xf32, #tpu.memory_space<vmem>>, %arg23: memref<2x256xf32, #tpu.memory_space<vmem>>) attributes {dimension_semantics = [], scalar_prefetch = 0 : i64, scratch_operands = 3 : i64, tpu.core_type = #tpu.core_type<tc>} {
    %cst = arith.constant 0.000000e+00 : f32
    %0 = vector.broadcast %cst : f32 to vector<16x146xf32>
    %c0 = arith.constant 0 : index
    %c0_0 = arith.constant 0 : index
    %1 = vector.load %arg21[%c0, %c0_0] : memref<16x146xf32, #tpu.memory_space<vmem>>, vector<16x146xf32>
    tpu.vector_store %arg21[%c0, %c0_0], %0 {strides = array<i32>} : memref<16x146xf32, #tpu.memory_space<vmem>>, vector<16x146xf32>,
    %c0_1 = arith.constant 0 : index
    %c0_2 = arith.constant 0 : index
    %2 = vector.load %arg5[%c0_1, %c0_2] : memref<3x3xf32, #tpu.memory_space<vmem>>, vector<3x3xf32>
    %c0_3 = arith.constant 0 : index
    %c0_4 = arith.constant 0 : index
    %3 = vector.load %arg0[%c0_3, %c0_4] : memref<3x512xf32, #tpu.memory_space<vmem>>, vector<3x512xf32>
    %cst_5 = arith.constant dense<0.000000e+00> : vector<3x512xf32>
    %4 = tpu.matmul %2, %3, %cst_5 {dimension_numbers = #tpu.dot_dimension_numbers<[1], [0], [0], [1], [0, 0, 1, 1], [], []>} : vector<3x3xf32>, vector<3x512xf32>, vector<3x512xf32> -> vector<3x512xf32>
    %c0_6 = arith.constant 0 : index
    %c0_7 = arith.constant 0 : index
    %5 = vector.load %arg6[%c0_6, %c0_7] : memref<3x1xf32, #tpu.memory_space<vmem>>, vector<3x1xf32>
    %6 = vector.broadcast %5 : vector<3x1xf32> to vector<3x512xf32>
    %7 = arith.addf %4, %6 : vector<3x512xf32>
    %c0_8 = arith.constant 0 : index
    %c0_9 = arith.constant 0 : index
    %8 = vector.load %arg1[%c0_8, %c0_9] : memref<2x4xf32, #tpu.memory_space<vmem>>, vector<2x4xf32>
    %c0_10 = arith.constant 0 : index
    %c0_11 = arith.constant 0 : index
    %9 = vector.load %arg3[%c0_10, %c0_11] : memref<4x256xf32, #tpu.memory_space<vmem>>, vector<4x256xf32>
    %cst_12 = arith.constant dense<0.000000e+00> : vector<2x256xf32>
    %10 = tpu.matmul %8, %9, %cst_12 {dimension_numbers = #tpu.dot_dimension_numbers<[1], [0], [0], [1], [0, 0, 1, 1], [], []>} : vector<2x4xf32>, vector<4x256xf32>, vector<2x256xf32> -> vector<2x256xf32>
    %c0_13 = arith.constant 0 : index
    %c0_14 = arith.constant 0 : index
    %11 = vector.load %arg4[%c0_13, %c0_14] : memref<1x256xf32, #tpu.memory_space<vmem>>, vector<1x256xf32>
    %12 = vector.broadcast %11 : vector<1x256xf32> to vector<2x256xf32>
    %13 = arith.addf %10, %12 : vector<2x256xf32>
    %cst_15 = arith.constant dense<0.000000e+00> : vector<3xf32>
    %14 = vector.multi_reduction <add>, %7, %cst_15 [1] : vector<3x512xf32> to vector<3xf32>
    %15 = vector.shape_cast %14 : vector<3xf32> to vector<3x1xf32>
    %cst_16 = arith.constant 0.001953125 : f32
    %16 = vector.broadcast %cst_16 : f32 to vector<3x1xf32>
    %17 = arith.mulf %15, %16 : vector<3x1xf32>
    %18 = vector.broadcast %17 : vector<3x1xf32> to vector<3x512xf32>
    %19 = arith.subf %7, %18 : vector<3x512xf32>
    %20 = arith.mulf %19, %19 : vector<3x512xf32>
    %cst_17 = arith.constant dense<0.000000e+00> : vector<3xf32>
    %21 = vector.multi_reduction <add>, %20, %cst_17 [1] : vector<3x512xf32> to vector<3xf32>
    %22 = vector.shape_cast %21 : vector<3xf32> to vector<3x1xf32>
    %cst_18 = arith.constant 0.001953125 : f32
    %23 = vector.broadcast %cst_18 : f32 to vector<3x1xf32>
    %24 = arith.mulf %22, %23 : vector<3x1xf32>
    %cst_19 = arith.constant 9.99999974E-6 : f32
    %25 = vector.broadcast %cst_19 : f32 to vector<3x1xf32>
    %26 = arith.addf %24, %25 : vector<3x1xf32>
    %27 = math.rsqrt %26 : vector<3x1xf32>
    %28 = vector.broadcast %27 : vector<3x1xf32> to vector<3x512xf32>
    %29 = arith.mulf %19, %28 : vector<3x512xf32>
    %cst_20 = arith.constant dense<0.000000e+00> : vector<2xf32>
    %30 = vector.multi_reduction <add>, %13, %cst_20 [1] : vector<2x256xf32> to vector<2xf32>
    %31 = vector.shape_cast %30 : vector<2xf32> to vector<2x1xf32>
    %cst_21 = arith.constant dense<0.000000e+00> : vector<1xf32>
    %32 = vector.multi_reduction <add>, %31, %cst_21 [0] : vector<2x1xf32> to vector<1xf32>
    %33 = vector.shape_cast %32 : vector<1xf32> to vector<1x1xf32>
    %cst_22 = arith.constant 0.001953125 : f32
    %34 = vector.broadcast %cst_22 : f32 to vector<1x1xf32>
    %35 = arith.mulf %33, %34 : vector<1x1xf32>
    %36 = vector.broadcast %35 : vector<1x1xf32> to vector<2x256xf32>
    %37 = arith.subf %13, %36 : vector<2x256xf32>
    %38 = arith.mulf %37, %37 : vector<2x256xf32>
    %cst_23 = arith.constant dense<0.000000e+00> : vector<2xf32>
    %39 = vector.multi_reduction <add>, %38, %cst_23 [1] : vector<2x256xf32> to vector<2xf32>
    %40 = vector.shape_cast %39 : vector<2xf32> to vector<2x1xf32>
    %cst_24 = arith.constant dense<0.000000e+00> : vector<1xf32>
    %41 = vector.multi_reduction <add>, %40, %cst_24 [0] : vector<2x1xf32> to vector<1xf32>
    %42 = vector.shape_cast %41 : vector<1xf32> to vector<1x1xf32>
    %cst_25 = arith.constant 0.001953125 : f32
    %43 = vector.broadcast %cst_25 : f32 to vector<1x1xf32>
    %44 = arith.mulf %42, %43 : vector<1x1xf32>
    %cst_26 = arith.constant 9.99999974E-6 : f32
    %45 = vector.broadcast %cst_26 : f32 to vector<1x1xf32>
    %46 = arith.addf %44, %45 : vector<1x1xf32>
    %47 = math.rsqrt %46 : vector<1x1xf32>
    %48 = vector.broadcast %47 : vector<1x1xf32> to vector<2x256xf32>
    %49 = arith.mulf %37, %48 : vector<2x256xf32>
    %c0_27 = arith.constant 0 : index
    %c0_28 = arith.constant 0 : index
    %50 = vector.load %arg12[%c0_27, %c0_28] : memref<256x64xf32, #tpu.memory_space<vmem>>, vector<256x64xf32>
    %51 = vector.extract_strided_slice %29 {offsets = [0, 0], sizes = [3, 256], strides = [1, 1]} : vector<3x512xf32> to vector<3x256xf32>
    %cst_29 = arith.constant dense<0.000000e+00> : vector<3x64xf32>
    %52 = tpu.matmul %51, %50, %cst_29 {dimension_numbers = #tpu.dot_dimension_numbers<[1], [0], [0], [1], [0, 0, 1, 1], [], []>} : vector<3x256xf32>, vector<256x64xf32>, vector<3x64xf32> -> vector<3x64xf32>
    %c0_30 = arith.constant 0 : index
    %c9 = arith.constant 9 : index
    %53 = vector.load %arg21[%c0_30, %c9] : memref<16x146xf32, #tpu.memory_space<vmem>>, vector<3x64xf32>
    tpu.vector_store %arg21[%c0_30, %c9], %52 {strides = array<i32>} : memref<16x146xf32, #tpu.memory_space<vmem>>, vector<3x64xf32>,
    %54 = vector.extract_strided_slice %49 {offsets = [0, 0], sizes = [1, 256], strides = [1, 1]} : vector<2x256xf32> to vector<1x256xf32>
    %cst_31 = arith.constant dense<0.000000e+00> : vector<1x64xf32>
    %55 = tpu.matmul %54, %50, %cst_31 {dimension_numbers = #tpu.dot_dimension_numbers<[1], [0], [0], [1], [0, 0, 1, 1], [], []>} : vector<1x256xf32>, vector<256x64xf32>, vector<1x64xf32> -> vector<1x64xf32>
    %c3 = arith.constant 3 : index
    %c9_32 = arith.constant 9 : index
    %56 = vector.load %arg21[%c3, %c9_32] : memref<16x146xf32, #tpu.memory_space<vmem>>, vector<1x64xf32>
    tpu.vector_store %arg21[%c3, %c9_32], %55 {strides = array<i32>} : memref<16x146xf32, #tpu.memory_space<vmem>>, vector<1x64xf32>,
    %57 = vector.extract_strided_slice %29 {offsets = [0, 256], sizes = [3, 256], strides = [1, 1]} : vector<3x512xf32> to vector<3x256xf32>
    %cst_33 = arith.constant dense<0.000000e+00> : vector<3x64xf32>
    %58 = tpu.matmul %57, %50, %cst_33 {dimension_numbers = #tpu.dot_dimension_numbers<[1], [0], [0], [1], [0, 0, 1, 1], [], []>} : vector<3x256xf32>, vector<256x64xf32>, vector<3x64xf32> -> vector<3x64xf32>
    %c0_34 = arith.constant 0 : index
    %c73 = arith.constant 73 : index
    %59 = vector.load %arg21[%c0_34, %c73] : memref<16x146xf32, #tpu.memory_space<vmem>>, vector<3x64xf32>
    tpu.vector_store %arg21[%c0_34, %c73], %58 {strides = array<i32>} : memref<16x146xf32, #tpu.memory_space<vmem>>, vector<3x64xf32>,
    %60 = vector.extract_strided_slice %49 {offsets = [1, 0], sizes = [1, 256], strides = [1, 1]} : vector<2x256xf32> to vector<1x256xf32>
    %cst_35 = arith.constant dense<0.000000e+00> : vector<1x64xf32>
    %61 = tpu.matmul %60, %50, %cst_35 {dimension_numbers = #tpu.dot_dimension_numbers<[1], [0], [0], [1], [0, 0, 1, 1], [], []>} : vector<1x256xf32>, vector<256x64xf32>, vector<1x64xf32> -> vector<1x64xf32>
    %c3_36 = arith.constant 3 : index
    %c73_37 = arith.constant 73 : index
    %62 = vector.load %arg21[%c3_36, %c73_37] : memref<16x146xf32, #tpu.memory_space<vmem>>, vector<1x64xf32>
    tpu.vector_store %arg21[%c3_36, %c73_37], %61 {strides = array<i32>} : memref<16x146xf32, #tpu.memory_space<vmem>>, vector<1x64xf32>,
    %c0_38 = arith.constant 0 : index
    %c0_39 = arith.constant 0 : index
    %63 = vector.load %arg14[%c0_38, %c0_39] : memref<9x128xf32, #tpu.memory_space<vmem>>, vector<9x128xf32>
    %c0_40 = arith.constant 0 : index
    %c0_41 = arith.constant 0 : index
    %64 = vector.load %arg21[%c0_40, %c0_41] : memref<16x146xf32, #tpu.memory_space<vmem>>, vector<4x128xf32>
    %65 = vector.extract_strided_slice %63 {offsets = [0, 0], sizes = [1, 128], strides = [1, 1]} : vector<9x128xf32> to vector<1x128xf32>
    %66 = vector.broadcast %65 : vector<1x128xf32> to vector<4x128xf32>
    %67 = arith.mulf %64, %66 : vector<4x128xf32>
    %c0_42 = arith.constant 0 : index
    %c0_43 = arith.constant 0 : index
    %68 = vector.load %arg22[%c0_42, %c0_43] : memref<144x128xf32, #tpu.memory_space<vmem>>, vector<4x128xf32>
    tpu.vector_store %arg22[%c0_42, %c0_43], %67 {strides = array<i32>} : memref<144x128xf32, #tpu.memory_space<vmem>>, vector<4x128xf32>,
    %c0_44 = arith.constant 0 : index
    %c1 = arith.constant 1 : index
    %69 = vector.load %arg21[%c0_44, %c1] : memref<16x146xf32, #tpu.memory_space<vmem>>, vector<4x128xf32>
    %70 = vector.extract_strided_slice %63 {offsets = [1, 0], sizes = [1, 128], strides = [1, 1]} : vector<9x128xf32> to vector<1x128xf32>
    %71 = vector.broadcast %70 : vector<1x128xf32> to vector<4x128xf32>
    %72 = arith.mulf %69, %71 : vector<4x128xf32>
    %c4 = arith.constant 4 : index
    %c0_45 = arith.constant 0 : index
    %73 = vector.load %arg22[%c4, %c0_45] : memref<144x128xf32, #tpu.memory_space<vmem>>, vector<4x128xf32>
    tpu.vector_store %arg22[%c4, %c0_45], %72 {strides = array<i32>} : memref<144x128xf32, #tpu.memory_space<vmem>>, vector<4x128xf32>,
    %c0_46 = arith.constant 0 : index
    %c2 = arith.constant 2 : index
    %74 = vector.load %arg21[%c0_46, %c2] : memref<16x146xf32, #tpu.memory_space<vmem>>, vector<4x128xf32>
    %75 = vector.extract_strided_slice %63 {offsets = [2, 0], sizes = [1, 128], strides = [1, 1]} : vector<9x128xf32> to vector<1x128xf32>
    %76 = vector.broadcast %75 : vector<1x128xf32> to vector<4x128xf32>
    %77 = arith.mulf %74, %76 : vector<4x128xf32>
    %c8 = arith.constant 8 : index
    %c0_47 = arith.constant 0 : index
    %78 = vector.load %arg22[%c8, %c0_47] : memref<144x128xf32, #tpu.memory_space<vmem>>, vector<4x128xf32>
    tpu.vector_store %arg22[%c8, %c0_47], %77 {strides = array<i32>} : memref<144x128xf32, #tpu.memory_space<vmem>>, vector<4x128xf32>,
    %c0_48 = arith.constant 0 : index
    %c8_49 = arith.constant 8 : index
    %79 = vector.load %arg21[%c0_48, %c8_49] : memref<16x146xf32, #tpu.memory_space<vmem>>, vector<4x128xf32>
    %80 = vector.extract_strided_slice %63 {offsets = [3, 0], sizes = [1, 128], strides = [1, 1]} : vector<9x128xf32> to vector<1x128xf32>
    %81 = vector.broadcast %80 : vector<1x128xf32> to vector<4x128xf32>
    %82 = arith.mulf %79, %81 : vector<4x128xf32>
    %c12 = arith.constant 12 : index
    %c0_50 = arith.constant 0 : index
    %83 = vector.load %arg22[%c12, %c0_50] : memref<144x128xf32, #tpu.memory_space<vmem>>, vector<4x128xf32>
    tpu.vector_store %arg22[%c12, %c0_50], %82 {strides = array<i32>} : memref<144x128xf32, #tpu.memory_space<vmem>>, vector<4x128xf32>,
    %c0_51 = arith.constant 0 : index
    %c9_52 = arith.constant 9 : index
    %84 = vector.load %arg21[%c0_51, %c9_52] : memref<16x146xf32, #tpu.memory_space<vmem>>, vector<4x128xf32>
    %85 = vector.extract_strided_slice %63 {offsets = [4, 0], sizes = [1, 128], strides = [1, 1]} : vector<9x128xf32> to vector<1x128xf32>
    %86 = vector.broadcast %85 : vector<1x128xf32> to vector<4x128xf32>
    %87 = arith.mulf %84, %86 : vector<4x128xf32>
    %c16 = arith.constant 16 : index
    %c0_53 = arith.constant 0 : index
    %88 = vector.load %arg22[%c16, %c0_53] : memref<144x128xf32, #tpu.memory_space<vmem>>, vector<4x128xf32>
    tpu.vector_store %arg22[%c16, %c0_53], %87 {strides = array<i32>} : memref<144x128xf32, #tpu.memory_space<vmem>>, vector<4x128xf32>,
    %c0_54 = arith.constant 0 : index
    %c10 = arith.constant 10 : index
    %89 = vector.load %arg21[%c0_54, %c10] : memref<16x146xf32, #tpu.memory_space<vmem>>, vector<4x128xf32>
    %90 = vector.extract_strided_slice %63 {offsets = [5, 0], sizes = [1, 128], strides = [1, 1]} : vector<9x128xf32> to vector<1x128xf32>
    %91 = vector.broadcast %90 : vector<1x128xf32> to vector<4x128xf32>
    %92 = arith.mulf %89, %91 : vector<4x128xf32>
    %c20 = arith.constant 20 : index
    %c0_55 = arith.constant 0 : index
    %93 = vector.load %arg22[%c20, %c0_55] : memref<144x128xf32, #tpu.memory_space<vmem>>, vector<4x128xf32>
    tpu.vector_store %arg22[%c20, %c0_55], %92 {strides = array<i32>} : memref<144x128xf32, #tpu.memory_space<vmem>>, vector<4x128xf32>,
    %c0_56 = arith.constant 0 : index
    %c16_57 = arith.constant 16 : index
    %94 = vector.load %arg21[%c0_56, %c16_57] : memref<16x146xf32, #tpu.memory_space<vmem>>, vector<4x128xf32>
    %95 = vector.extract_strided_slice %63 {offsets = [6, 0], sizes = [1, 128], strides = [1, 1]} : vector<9x128xf32> to vector<1x128xf32>
    %96 = vector.broadcast %95 : vector<1x128xf32> to vector<4x128xf32>
    %97 = arith.mulf %94, %96 : vector<4x128xf32>
    %c24 = arith.constant 24 : index
    %c0_58 = arith.constant 0 : index
    %98 = vector.load %arg22[%c24, %c0_58] : memref<144x128xf32, #tpu.memory_space<vmem>>, vector<4x128xf32>
    tpu.vector_store %arg22[%c24, %c0_58], %97 {strides = array<i32>} : memref<144x128xf32, #tpu.memory_space<vmem>>, vector<4x128xf32>,
    %c0_59 = arith.constant 0 : index
    %c17 = arith.constant 17 : index
    %99 = vector.load %arg21[%c0_59, %c17] : memref<16x146xf32, #tpu.memory_space<vmem>>, vector<4x128xf32>
    %100 = vector.extract_strided_slice %63 {offsets = [7, 0], sizes = [1, 128], strides = [1, 1]} : vector<9x128xf32> to vector<1x128xf32>
    %101 = vector.broadcast %100 : vector<1x128xf32> to vector<4x128xf32>
    %102 = arith.mulf %99, %101 : vector<4x128xf32>
    %c28 = arith.constant 28 : index
    %c0_60 = arith.constant 0 : index
    %103 = vector.load %arg22[%c28, %c0_60] : memref<144x128xf32, #tpu.memory_space<vmem>>, vector<4x128xf32>
    tpu.vector_store %arg22[%c28, %c0_60], %102 {strides = array<i32>} : memref<144x128xf32, #tpu.memory_space<vmem>>, vector<4x128xf32>,
    %c0_61 = arith.constant 0 : index
    %c18 = arith.constant 18 : index
    %104 = vector.load %arg21[%c0_61, %c18] : memref<16x146xf32, #tpu.memory_space<vmem>>, vector<4x128xf32>
    %105 = vector.extract_strided_slice %63 {offsets = [8, 0], sizes = [1, 128], strides = [1, 1]} : vector<9x128xf32> to vector<1x128xf32>
    %106 = vector.broadcast %105 : vector<1x128xf32> to vector<4x128xf32>
    %107 = arith.mulf %104, %106 : vector<4x128xf32>
    %c32 = arith.constant 32 : index
    %c0_62 = arith.constant 0 : index
    %108 = vector.load %arg22[%c32, %c0_62] : memref<144x128xf32, #tpu.memory_space<vmem>>, vector<4x128xf32>
    tpu.vector_store %arg22[%c32, %c0_62], %107 {strides = array<i32>} : memref<144x128xf32, #tpu.memory_space<vmem>>, vector<4x128xf32>,
    %c0_63 = arith.constant 0 : index
    %c0_64 = arith.constant 0 : index
    %109 = vector.load %arg7[%c0_63, %c0_64] : memref<8x36xf32, #tpu.memory_space<vmem>>, vector<8x36xf32>
    %c0_65 = arith.constant 0 : index
    %c0_66 = arith.constant 0 : index
    %110 = vector.load %arg22[%c0_65, %c0_66] : memref<144x128xf32, #tpu.memory_space<vmem>>, vector<36x128xf32>
    %cst_67 = arith.constant dense<0.000000e+00> : vector<8x128xf32>
    %111 = tpu.matmul %109, %110, %cst_67 {dimension_numbers = #tpu.dot_dimension_numbers<[1], [0], [0], [1], [0, 0, 1, 1], [], []>} : vector<8x36xf32>, vector<36x128xf32>, vector<8x128xf32> -> vector<8x128xf32>
    %cst_68 = arith.constant dense<0.000000e+00> : vector<8xf32>
    %112 = vector.multi_reduction <add>, %111, %cst_68 [1] : vector<8x128xf32> to vector<8xf32>
    %113 = vector.shape_cast %112 : vector<8xf32> to vector<8x1xf32>
    %cst_69 = arith.constant 7.812500e-03 : f32
    %114 = vector.broadcast %cst_69 : f32 to vector<8x1xf32>
    %115 = arith.mulf %113, %114 : vector<8x1xf32>
    %116 = vector.broadcast %115 : vector<8x1xf32> to vector<8x128xf32>
    %117 = arith.subf %111, %116 : vector<8x128xf32>
    %118 = arith.mulf %117, %117 : vector<8x128xf32>
    %cst_70 = arith.constant dense<0.000000e+00> : vector<8xf32>
    %119 = vector.multi_reduction <add>, %118, %cst_70 [1] : vector<8x128xf32> to vector<8xf32>
    %120 = vector.shape_cast %119 : vector<8xf32> to vector<8x1xf32>
    %cst_71 = arith.constant 7.812500e-03 : f32
    %121 = vector.broadcast %cst_71 : f32 to vector<8x1xf32>
    %122 = arith.mulf %120, %121 : vector<8x1xf32>
    %cst_72 = arith.constant 9.99999974E-6 : f32
    %123 = vector.broadcast %cst_72 : f32 to vector<8x1xf32>
    %124 = arith.addf %122, %123 : vector<8x1xf32>
    %125 = math.rsqrt %124 : vector<8x1xf32>
    %126 = vector.broadcast %125 : vector<8x1xf32> to vector<8x128xf32>
    %127 = arith.mulf %117, %126 : vector<8x128xf32>
    %cst_73 = arith.constant 0.000000e+00 : f32
    %128 = vector.broadcast %cst_73 : f32 to vector<8x128xf32>
    %129 = arith.cmpf oge, %127, %128 : vector<8x128xf32>
    %cst_74 = arith.constant 2.000000e-01 : f32
    %130 = vector.broadcast %cst_74 : f32 to vector<8x128xf32>
    %131 = arith.mulf %130, %127 : vector<8x128xf32>
    %132 = arith.select %129, %127, %131 : vector<8x128xi1>, vector<8x128xf32>
    %c0_75 = arith.constant 0 : index
    %c0_76 = arith.constant 0 : index
    %133 = vector.load %arg13[%c0_75, %c0_76] : memref<64x16xf32, #tpu.memory_space<vmem>>, vector<64x16xf32>
    %134 = vector.extract_strided_slice %132 {offsets = [0, 0], sizes = [8, 64], strides = [1, 1]} : vector<8x128xf32> to vector<8x64xf32>
    %cst_77 = arith.constant dense<0.000000e+00> : vector<8x16xf32>
    %135 = tpu.matmul %134, %133, %cst_77 {dimension_numbers = #tpu.dot_dimension_numbers<[1], [0], [0], [1], [0, 0, 1, 1], [], []>} : vector<8x64xf32>, vector<64x16xf32>, vector<8x16xf32> -> vector<8x16xf32>
    %c0_78 = arith.constant 0 : index
    %c9_79 = arith.constant 9 : index
    %136 = vector.load %arg21[%c0_78, %c9_79] : memref<16x146xf32, #tpu.memory_space<vmem>>, vector<8x16xf32>
    tpu.vector_store %arg21[%c0_78, %c9_79], %135 {strides = array<i32>} : memref<16x146xf32, #tpu.memory_space<vmem>>, vector<8x16xf32>,
    %137 = vector.extract_strided_slice %132 {offsets = [0, 64], sizes = [8, 64], strides = [1, 1]} : vector<8x128xf32> to vector<8x64xf32>
    %cst_80 = arith.constant dense<0.000000e+00> : vector<8x16xf32>
    %138 = tpu.matmul %137, %133, %cst_80 {dimension_numbers = #tpu.dot_dimension_numbers<[1], [0], [0], [1], [0, 0, 1, 1], [], []>} : vector<8x64xf32>, vector<64x16xf32>, vector<8x16xf32> -> vector<8x16xf32>
    %c0_81 = arith.constant 0 : index
    %c25 = arith.constant 25 : index
    %139 = vector.load %arg21[%c0_81, %c25] : memref<16x146xf32, #tpu.memory_space<vmem>>, vector<8x16xf32>
    tpu.vector_store %arg21[%c0_81, %c25], %138 {strides = array<i32>} : memref<16x146xf32, #tpu.memory_space<vmem>>, vector<8x16xf32>,
    %c0_82 = arith.constant 0 : index
    %c0_83 = arith.constant 0 : index
    %140 = vector.load %arg15[%c0_82, %c0_83] : memref<9x32xf32, #tpu.memory_space<vmem>>, vector<9x32xf32>
    %c0_84 = arith.constant 0 : index
    %c4_85 = arith.constant 4 : index
    %141 = vector.load %arg21[%c0_84, %c4_85] : memref<16x146xf32, #tpu.memory_space<vmem>>, vector<8x32xf32>
    %142 = vector.extract_strided_slice %140 {offsets = [0, 0], sizes = [1, 32], strides = [1, 1]} : vector<9x32xf32> to vector<1x32xf32>
    %143 = vector.broadcast %142 : vector<1x32xf32> to vector<8x32xf32>
    %144 = arith.mulf %141, %143 : vector<8x32xf32>
    %c0_86 = arith.constant 0 : index
    %c0_87 = arith.constant 0 : index
    %145 = vector.load %arg22[%c0_86, %c0_87] : memref<144x128xf32, #tpu.memory_space<vmem>>, vector<8x32xf32>
    tpu.vector_store %arg22[%c0_86, %c0_87], %144 {strides = array<i32>} : memref<144x128xf32, #tpu.memory_space<vmem>>, vector<8x32xf32>,
    %c0_88 = arith.constant 0 : index
    %c5 = arith.constant 5 : index
    %146 = vector.load %arg21[%c0_88, %c5] : memref<16x146xf32, #tpu.memory_space<vmem>>, vector<8x32xf32>
    %147 = vector.extract_strided_slice %140 {offsets = [1, 0], sizes = [1, 32], strides = [1, 1]} : vector<9x32xf32> to vector<1x32xf32>
    %148 = vector.broadcast %147 : vector<1x32xf32> to vector<8x32xf32>
    %149 = arith.mulf %146, %148 : vector<8x32xf32>
    %c8_89 = arith.constant 8 : index
    %c0_90 = arith.constant 0 : index
    %150 = vector.load %arg22[%c8_89, %c0_90] : memref<144x128xf32, #tpu.memory_space<vmem>>, vector<8x32xf32>
    tpu.vector_store %arg22[%c8_89, %c0_90], %149 {strides = array<i32>} : memref<144x128xf32, #tpu.memory_space<vmem>>, vector<8x32xf32>,
    %c0_91 = arith.constant 0 : index
    %c6 = arith.constant 6 : index
    %151 = vector.load %arg21[%c0_91, %c6] : memref<16x146xf32, #tpu.memory_space<vmem>>, vector<8x32xf32>
    %152 = vector.extract_strided_slice %140 {offsets = [2, 0], sizes = [1, 32], strides = [1, 1]} : vector<9x32xf32> to vector<1x32xf32>
    %153 = vector.broadcast %152 : vector<1x32xf32> to vector<8x32xf32>
    %154 = arith.mulf %151, %153 : vector<8x32xf32>
    %c16_92 = arith.constant 16 : index
    %c0_93 = arith.constant 0 : index
    %155 = vector.load %arg22[%c16_92, %c0_93] : memref<144x128xf32, #tpu.memory_space<vmem>>, vector<8x32xf32>
    tpu.vector_store %arg22[%c16_92, %c0_93], %154 {strides = array<i32>} : memref<144x128xf32, #tpu.memory_space<vmem>>, vector<8x32xf32>,
    %c0_94 = arith.constant 0 : index
    %c8_95 = arith.constant 8 : index
    %156 = vector.load %arg21[%c0_94, %c8_95] : memref<16x146xf32, #tpu.memory_space<vmem>>, vector<8x32xf32>
    %157 = vector.extract_strided_slice %140 {offsets = [3, 0], sizes = [1, 32], strides = [1, 1]} : vector<9x32xf32> to vector<1x32xf32>
    %158 = vector.broadcast %157 : vector<1x32xf32> to vector<8x32xf32>
    %159 = arith.mulf %156, %158 : vector<8x32xf32>
    %c24_96 = arith.constant 24 : index
    %c0_97 = arith.constant 0 : index
    %160 = vector.load %arg22[%c24_96, %c0_97] : memref<144x128xf32, #tpu.memory_space<vmem>>, vector<8x32xf32>
    tpu.vector_store %arg22[%c24_96, %c0_97], %159 {strides = array<i32>} : memref<144x128xf32, #tpu.memory_space<vmem>>, vector<8x32xf32>,
    %c0_98 = arith.constant 0 : index
    %c9_99 = arith.constant 9 : index
    %161 = vector.load %arg21[%c0_98, %c9_99] : memref<16x146xf32, #tpu.memory_space<vmem>>, vector<8x32xf32>
    %162 = vector.extract_strided_slice %140 {offsets = [4, 0], sizes = [1, 32], strides = [1, 1]} : vector<9x32xf32> to vector<1x32xf32>
    %163 = vector.broadcast %162 : vector<1x32xf32> to vector<8x32xf32>
    %164 = arith.mulf %161, %163 : vector<8x32xf32>
    %c32_100 = arith.constant 32 : index
    %c0_101 = arith.constant 0 : index
    %165 = vector.load %arg22[%c32_100, %c0_101] : memref<144x128xf32, #tpu.memory_space<vmem>>, vector<8x32xf32>
    tpu.vector_store %arg22[%c32_100, %c0_101], %164 {strides = array<i32>} : memref<144x128xf32, #tpu.memory_space<vmem>>, vector<8x32xf32>,
    %c0_102 = arith.constant 0 : index
    %c10_103 = arith.constant 10 : index
    %166 = vector.load %arg21[%c0_102, %c10_103] : memref<16x146xf32, #tpu.memory_space<vmem>>, vector<8x32xf32>
    %167 = vector.extract_strided_slice %140 {offsets = [5, 0], sizes = [1, 32], strides = [1, 1]} : vector<9x32xf32> to vector<1x32xf32>
    %168 = vector.broadcast %167 : vector<1x32xf32> to vector<8x32xf32>
    %169 = arith.mulf %166, %168 : vector<8x32xf32>
    %c40 = arith.constant 40 : index
    %c0_104 = arith.constant 0 : index
    %170 = vector.load %arg22[%c40, %c0_104] : memref<144x128xf32, #tpu.memory_space<vmem>>, vector<8x32xf32>
    tpu.vector_store %arg22[%c40, %c0_104], %169 {strides = array<i32>} : memref<144x128xf32, #tpu.memory_space<vmem>>, vector<8x32xf32>,
    %c0_105 = arith.constant 0 : index
    %c12_106 = arith.constant 12 : index
    %171 = vector.load %arg21[%c0_105, %c12_106] : memref<16x146xf32, #tpu.memory_space<vmem>>, vector<8x32xf32>
    %172 = vector.extract_strided_slice %140 {offsets = [6, 0], sizes = [1, 32], strides = [1, 1]} : vector<9x32xf32> to vector<1x32xf32>
    %173 = vector.broadcast %172 : vector<1x32xf32> to vector<8x32xf32>
    %174 = arith.mulf %171, %173 : vector<8x32xf32>
    %c48 = arith.constant 48 : index
    %c0_107 = arith.constant 0 : index
    %175 = vector.load %arg22[%c48, %c0_107] : memref<144x128xf32, #tpu.memory_space<vmem>>, vector<8x32xf32>
    tpu.vector_store %arg22[%c48, %c0_107], %174 {strides = array<i32>} : memref<144x128xf32, #tpu.memory_space<vmem>>, vector<8x32xf32>,
    %c0_108 = arith.constant 0 : index
    %c13 = arith.constant 13 : index
    %176 = vector.load %arg21[%c0_108, %c13] : memref<16x146xf32, #tpu.memory_space<vmem>>, vector<8x32xf32>
    %177 = vector.extract_strided_slice %140 {offsets = [7, 0], sizes = [1, 32], strides = [1, 1]} : vector<9x32xf32> to vector<1x32xf32>
    %178 = vector.broadcast %177 : vector<1x32xf32> to vector<8x32xf32>
    %179 = arith.mulf %176, %178 : vector<8x32xf32>
    %c56 = arith.constant 56 : index
    %c0_109 = arith.constant 0 : index
    %180 = vector.load %arg22[%c56, %c0_109] : memref<144x128xf32, #tpu.memory_space<vmem>>, vector<8x32xf32>
    tpu.vector_store %arg22[%c56, %c0_109], %179 {strides = array<i32>} : memref<144x128xf32, #tpu.memory_space<vmem>>, vector<8x32xf32>,
    %c0_110 = arith.constant 0 : index
    %c14 = arith.constant 14 : index
    %181 = vector.load %arg21[%c0_110, %c14] : memref<16x146xf32, #tpu.memory_space<vmem>>, vector<8x32xf32>
    %182 = vector.extract_strided_slice %140 {offsets = [8, 0], sizes = [1, 32], strides = [1, 1]} : vector<9x32xf32> to vector<1x32xf32>
    %183 = vector.broadcast %182 : vector<1x32xf32> to vector<8x32xf32>
    %184 = arith.mulf %181, %183 : vector<8x32xf32>
    %c64 = arith.constant 64 : index
    %c0_111 = arith.constant 0 : index
    %185 = vector.load %arg22[%c64, %c0_111] : memref<144x128xf32, #tpu.memory_space<vmem>>, vector<8x32xf32>
    tpu.vector_store %arg22[%c64, %c0_111], %184 {strides = array<i32>} : memref<144x128xf32, #tpu.memory_space<vmem>>, vector<8x32xf32>,
    %c0_112 = arith.constant 0 : index
    %c0_113 = arith.constant 0 : index
    %186 = vector.load %arg8[%c0_112, %c0_113] : memref<16x72xf32, #tpu.memory_space<vmem>>, vector<16x72xf32>
    %c0_114 = arith.constant 0 : index
    %c0_115 = arith.constant 0 : index
    %187 = vector.load %arg22[%c0_114, %c0_115] : memref<144x128xf32, #tpu.memory_space<vmem>>, vector<72x32xf32>
    %cst_116 = arith.constant dense<0.000000e+00> : vector<16x32xf32>
    %188 = tpu.matmul %186, %187, %cst_116 {dimension_numbers = #tpu.dot_dimension_numbers<[1], [0], [0], [1], [0, 0, 1, 1], [], []>} : vector<16x72xf32>, vector<72x32xf32>, vector<16x32xf32> -> vector<16x32xf32>
    %cst_117 = arith.constant dense<0.000000e+00> : vector<16xf32>
    %189 = vector.multi_reduction <add>, %188, %cst_117 [1] : vector<16x32xf32> to vector<16xf32>
    %190 = vector.shape_cast %189 : vector<16xf32> to vector<16x1xf32>
    %cst_118 = arith.constant 3.125000e-02 : f32
    %191 = vector.broadcast %cst_118 : f32 to vector<16x1xf32>
    %192 = arith.mulf %190, %191 : vector<16x1xf32>
    %193 = vector.broadcast %192 : vector<16x1xf32> to vector<16x32xf32>
    %194 = arith.subf %188, %193 : vector<16x32xf32>
    %195 = arith.mulf %194, %194 : vector<16x32xf32>
    %cst_119 = arith.constant dense<0.000000e+00> : vector<16xf32>
    %196 = vector.multi_reduction <add>, %195, %cst_119 [1] : vector<16x32xf32> to vector<16xf32>
    %197 = vector.shape_cast %196 : vector<16xf32> to vector<16x1xf32>
    %cst_120 = arith.constant 3.125000e-02 : f32
    %198 = vector.broadcast %cst_120 : f32 to vector<16x1xf32>
    %199 = arith.mulf %197, %198 : vector<16x1xf32>
    %cst_121 = arith.constant 9.99999974E-6 : f32
    %200 = vector.broadcast %cst_121 : f32 to vector<16x1xf32>
    %201 = arith.addf %199, %200 : vector<16x1xf32>
    %202 = math.rsqrt %201 : vector<16x1xf32>
    %203 = vector.broadcast %202 : vector<16x1xf32> to vector<16x32xf32>
    %204 = arith.mulf %194, %203 : vector<16x32xf32>
    %cst_122 = arith.constant 0.000000e+00 : f32
    %205 = vector.broadcast %cst_122 : f32 to vector<16x32xf32>
    %206 = arith.cmpf oge, %204, %205 : vector<16x32xf32>
    %cst_123 = arith.constant 2.000000e-01 : f32
    %207 = vector.broadcast %cst_123 : f32 to vector<16x32xf32>
    %208 = arith.mulf %207, %204 : vector<16x32xf32>
    %209 = arith.select %206, %204, %208 : vector<16x32xi1>, vector<16x32xf32>
    %c0_124 = arith.constant 0 : index
    %c9_125 = arith.constant 9 : index
    %210 = vector.load %arg21[%c0_124, %c9_125] : memref<16x146xf32, #tpu.memory_space<vmem>>, vector<16x32xf32>
    tpu.vector_store %arg21[%c0_124, %c9_125], %209 {strides = array<i32>} : memref<16x146xf32, #tpu.memory_space<vmem>>, vector<16x32xf32>,
    %c0_126 = arith.constant 0 : index
    %c0_127 = arith.constant 0 : index
    %211 = vector.load %arg16[%c0_126, %c0_127] : memref<9x32xf32, #tpu.memory_space<vmem>>, vector<9x32xf32>
    %c0_128 = arith.constant 0 : index
    %c4_129 = arith.constant 4 : index
    %212 = vector.load %arg21[%c0_128, %c4_129] : memref<16x146xf32, #tpu.memory_space<vmem>>, vector<16x32xf32>
    %213 = vector.extract_strided_slice %211 {offsets = [0, 0], sizes = [1, 32], strides = [1, 1]} : vector<9x32xf32> to vector<1x32xf32>
    %214 = vector.broadcast %213 : vector<1x32xf32> to vector<16x32xf32>
    %215 = arith.mulf %212, %214 : vector<16x32xf32>
    %c0_130 = arith.constant 0 : index
    %c0_131 = arith.constant 0 : index
    %216 = vector.load %arg22[%c0_130, %c0_131] : memref<144x128xf32, #tpu.memory_space<vmem>>, vector<16x32xf32>
    tpu.vector_store %arg22[%c0_130, %c0_131], %215 {strides = array<i32>} : memref<144x128xf32, #tpu.memory_space<vmem>>, vector<16x32xf32>,
    %c0_132 = arith.constant 0 : index
    %c5_133 = arith.constant 5 : index
    %217 = vector.load %arg21[%c0_132, %c5_133] : memref<16x146xf32, #tpu.memory_space<vmem>>, vector<16x32xf32>
    %218 = vector.extract_strided_slice %211 {offsets = [1, 0], sizes = [1, 32], strides = [1, 1]} : vector<9x32xf32> to vector<1x32xf32>
    %219 = vector.broadcast %218 : vector<1x32xf32> to vector<16x32xf32>
    %220 = arith.mulf %217, %219 : vector<16x32xf32>
    %c16_134 = arith.constant 16 : index
    %c0_135 = arith.constant 0 : index
    %221 = vector.load %arg22[%c16_134, %c0_135] : memref<144x128xf32, #tpu.memory_space<vmem>>, vector<16x32xf32>
    tpu.vector_store %arg22[%c16_134, %c0_135], %220 {strides = array<i32>} : memref<144x128xf32, #tpu.memory_space<vmem>>, vector<16x32xf32>,
    %c0_136 = arith.constant 0 : index
    %c6_137 = arith.constant 6 : index
    %222 = vector.load %arg21[%c0_136, %c6_137] : memref<16x146xf32, #tpu.memory_space<vmem>>, vector<16x32xf32>
    %223 = vector.extract_strided_slice %211 {offsets = [2, 0], sizes = [1, 32], strides = [1, 1]} : vector<9x32xf32> to vector<1x32xf32>
    %224 = vector.broadcast %223 : vector<1x32xf32> to vector<16x32xf32>
    %225 = arith.mulf %222, %224 : vector<16x32xf32>
    %c32_138 = arith.constant 32 : index
    %c0_139 = arith.constant 0 : index
    %226 = vector.load %arg22[%c32_138, %c0_139] : memref<144x128xf32, #tpu.memory_space<vmem>>, vector<16x32xf32>
    tpu.vector_store %arg22[%c32_138, %c0_139], %225 {strides = array<i32>} : memref<144x128xf32, #tpu.memory_space<vmem>>, vector<16x32xf32>,
    %c0_140 = arith.constant 0 : index
    %c8_141 = arith.constant 8 : index
    %227 = vector.load %arg21[%c0_140, %c8_141] : memref<16x146xf32, #tpu.memory_space<vmem>>, vector<16x32xf32>
    %228 = vector.extract_strided_slice %211 {offsets = [3, 0], sizes = [1, 32], strides = [1, 1]} : vector<9x32xf32> to vector<1x32xf32>
    %229 = vector.broadcast %228 : vector<1x32xf32> to vector<16x32xf32>
    %230 = arith.mulf %227, %229 : vector<16x32xf32>
    %c48_142 = arith.constant 48 : index
    %c0_143 = arith.constant 0 : index
    %231 = vector.load %arg22[%c48_142, %c0_143] : memref<144x128xf32, #tpu.memory_space<vmem>>, vector<16x32xf32>
    tpu.vector_store %arg22[%c48_142, %c0_143], %230 {strides = array<i32>} : memref<144x128xf32, #tpu.memory_space<vmem>>, vector<16x32xf32>,
    %c0_144 = arith.constant 0 : index
    %c9_145 = arith.constant 9 : index
    %232 = vector.load %arg21[%c0_144, %c9_145] : memref<16x146xf32, #tpu.memory_space<vmem>>, vector<16x32xf32>
    %233 = vector.extract_strided_slice %211 {offsets = [4, 0], sizes = [1, 32], strides = [1, 1]} : vector<9x32xf32> to vector<1x32xf32>
    %234 = vector.broadcast %233 : vector<1x32xf32> to vector<16x32xf32>
    %235 = arith.mulf %232, %234 : vector<16x32xf32>
    %c64_146 = arith.constant 64 : index
    %c0_147 = arith.constant 0 : index
    %236 = vector.load %arg22[%c64_146, %c0_147] : memref<144x128xf32, #tpu.memory_space<vmem>>, vector<16x32xf32>
    tpu.vector_store %arg22[%c64_146, %c0_147], %235 {strides = array<i32>} : memref<144x128xf32, #tpu.memory_space<vmem>>, vector<16x32xf32>,
    %c0_148 = arith.constant 0 : index
    %c10_149 = arith.constant 10 : index
    %237 = vector.load %arg21[%c0_148, %c10_149] : memref<16x146xf32, #tpu.memory_space<vmem>>, vector<16x32xf32>
    %238 = vector.extract_strided_slice %211 {offsets = [5, 0], sizes = [1, 32], strides = [1, 1]} : vector<9x32xf32> to vector<1x32xf32>
    %239 = vector.broadcast %238 : vector<1x32xf32> to vector<16x32xf32>
    %240 = arith.mulf %237, %239 : vector<16x32xf32>
    %c80 = arith.constant 80 : index
    %c0_150 = arith.constant 0 : index
    %241 = vector.load %arg22[%c80, %c0_150] : memref<144x128xf32, #tpu.memory_space<vmem>>, vector<16x32xf32>
    tpu.vector_store %arg22[%c80, %c0_150], %240 {strides = array<i32>} : memref<144x128xf32, #tpu.memory_space<vmem>>, vector<16x32xf32>,
    %c0_151 = arith.constant 0 : index
    %c12_152 = arith.constant 12 : index
    %242 = vector.load %arg21[%c0_151, %c12_152] : memref<16x146xf32, #tpu.memory_space<vmem>>, vector<16x32xf32>
    %243 = vector.extract_strided_slice %211 {offsets = [6, 0], sizes = [1, 32], strides = [1, 1]} : vector<9x32xf32> to vector<1x32xf32>
    %244 = vector.broadcast %243 : vector<1x32xf32> to vector<16x32xf32>
    %245 = arith.mulf %242, %244 : vector<16x32xf32>
    %c96 = arith.constant 96 : index
    %c0_153 = arith.constant 0 : index
    %246 = vector.load %arg22[%c96, %c0_153] : memref<144x128xf32, #tpu.memory_space<vmem>>, vector<16x32xf32>
    tpu.vector_store %arg22[%c96, %c0_153], %245 {strides = array<i32>} : memref<144x128xf32, #tpu.memory_space<vmem>>, vector<16x32xf32>,
    %c0_154 = arith.constant 0 : index
    %c13_155 = arith.constant 13 : index
    %247 = vector.load %arg21[%c0_154, %c13_155] : memref<16x146xf32, #tpu.memory_space<vmem>>, vector<16x32xf32>
    %248 = vector.extract_strided_slice %211 {offsets = [7, 0], sizes = [1, 32], strides = [1, 1]} : vector<9x32xf32> to vector<1x32xf32>
    %249 = vector.broadcast %248 : vector<1x32xf32> to vector<16x32xf32>
    %250 = arith.mulf %247, %249 : vector<16x32xf32>
    %c112 = arith.constant 112 : index
    %c0_156 = arith.constant 0 : index
    %251 = vector.load %arg22[%c112, %c0_156] : memref<144x128xf32, #tpu.memory_space<vmem>>, vector<16x32xf32>
    tpu.vector_store %arg22[%c112, %c0_156], %250 {strides = array<i32>} : memref<144x128xf32, #tpu.memory_space<vmem>>, vector<16x32xf32>,
    %c0_157 = arith.constant 0 : index
    %c14_158 = arith.constant 14 : index
    %252 = vector.load %arg21[%c0_157, %c14_158] : memref<16x146xf32, #tpu.memory_space<vmem>>, vector<16x32xf32>
    %253 = vector.extract_strided_slice %211 {offsets = [8, 0], sizes = [1, 32], strides = [1, 1]} : vector<9x32xf32> to vector<1x32xf32>
    %254 = vector.broadcast %253 : vector<1x32xf32> to vector<16x32xf32>
    %255 = arith.mulf %252, %254 : vector<16x32xf32>
    %c128 = arith.constant 128 : index
    %c0_159 = arith.constant 0 : index
    %256 = vector.load %arg22[%c128, %c0_159] : memref<144x128xf32, #tpu.memory_space<vmem>>, vector<16x32xf32>
    tpu.vector_store %arg22[%c128, %c0_159], %255 {strides = array<i32>} : memref<144x128xf32, #tpu.memory_space<vmem>>, vector<16x32xf32>,
    %c0_160 = arith.constant 0 : index
    %c0_161 = arith.constant 0 : index
    %257 = vector.load %arg9[%c0_160, %c0_161] : memref<16x144xf32, #tpu.memory_space<vmem>>, vector<16x144xf32>
    %c0_162 = arith.constant 0 : index
    %c0_163 = arith.constant 0 : index
    %258 = vector.load %arg22[%c0_162, %c0_163] : memref<144x128xf32, #tpu.memory_space<vmem>>, vector<144x32xf32>
    %cst_164 = arith.constant dense<0.000000e+00> : vector<16x32xf32>
    %259 = tpu.matmul %257, %258, %cst_164 {dimension_numbers = #tpu.dot_dimension_numbers<[1], [0], [0], [1], [0, 0, 1, 1], [], []>} : vector<16x144xf32>, vector<144x32xf32>, vector<16x32xf32> -> vector<16x32xf32>
    %cst_165 = arith.constant dense<0.000000e+00> : vector<16xf32>
    %260 = vector.multi_reduction <add>, %259, %cst_165 [1] : vector<16x32xf32> to vector<16xf32>
    %261 = vector.shape_cast %260 : vector<16xf32> to vector<16x1xf32>
    %cst_166 = arith.constant 3.125000e-02 : f32
    %262 = vector.broadcast %cst_166 : f32 to vector<16x1xf32>
    %263 = arith.mulf %261, %262 : vector<16x1xf32>
    %264 = vector.broadcast %263 : vector<16x1xf32> to vector<16x32xf32>
    %265 = arith.subf %259, %264 : vector<16x32xf32>
    %266 = arith.mulf %265, %265 : vector<16x32xf32>
    %cst_167 = arith.constant dense<0.000000e+00> : vector<16xf32>
    %267 = vector.multi_reduction <add>, %266, %cst_167 [1] : vector<16x32xf32> to vector<16xf32>
    %268 = vector.shape_cast %267 : vector<16xf32> to vector<16x1xf32>
    %cst_168 = arith.constant 3.125000e-02 : f32
    %269 = vector.broadcast %cst_168 : f32 to vector<16x1xf32>
    %270 = arith.mulf %268, %269 : vector<16x1xf32>
    %cst_169 = arith.constant 9.99999974E-6 : f32
    %271 = vector.broadcast %cst_169 : f32 to vector<16x1xf32>
    %272 = arith.addf %270, %271 : vector<16x1xf32>
    %273 = math.rsqrt %272 : vector<16x1xf32>
    %274 = vector.broadcast %273 : vector<16x1xf32> to vector<16x32xf32>
    %275 = arith.mulf %265, %274 : vector<16x32xf32>
    %cst_170 = arith.constant 0.000000e+00 : f32
    %276 = vector.broadcast %cst_170 : f32 to vector<16x32xf32>
    %277 = arith.cmpf oge, %275, %276 : vector<16x32xf32>
    %cst_171 = arith.constant 2.000000e-01 : f32
    %278 = vector.broadcast %cst_171 : f32 to vector<16x32xf32>
    %279 = arith.mulf %278, %275 : vector<16x32xf32>
    %280 = arith.select %277, %275, %279 : vector<16x32xi1>, vector<16x32xf32>
    %c0_172 = arith.constant 0 : index
    %c9_173 = arith.constant 9 : index
    %281 = vector.load %arg21[%c0_172, %c9_173] : memref<16x146xf32, #tpu.memory_space<vmem>>, vector<16x32xf32>
    tpu.vector_store %arg21[%c0_172, %c9_173], %280 {strides = array<i32>} : memref<16x146xf32, #tpu.memory_space<vmem>>, vector<16x32xf32>,
    %c0_174 = arith.constant 0 : index
    %c0_175 = arith.constant 0 : index
    %282 = vector.load %arg17[%c0_174, %c0_175] : memref<9x32xf32, #tpu.memory_space<vmem>>, vector<9x32xf32>
    %c0_176 = arith.constant 0 : index
    %c4_177 = arith.constant 4 : index
    %283 = vector.load %arg21[%c0_176, %c4_177] : memref<16x146xf32, #tpu.memory_space<vmem>>, vector<16x32xf32>
    %284 = vector.extract_strided_slice %282 {offsets = [0, 0], sizes = [1, 32], strides = [1, 1]} : vector<9x32xf32> to vector<1x32xf32>
    %285 = vector.broadcast %284 : vector<1x32xf32> to vector<16x32xf32>
    %286 = arith.mulf %283, %285 : vector<16x32xf32>
    %c0_178 = arith.constant 0 : index
    %c0_179 = arith.constant 0 : index
    %287 = vector.load %arg22[%c0_178, %c0_179] : memref<144x128xf32, #tpu.memory_space<vmem>>, vector<16x32xf32>
    tpu.vector_store %arg22[%c0_178, %c0_179], %286 {strides = array<i32>} : memref<144x128xf32, #tpu.memory_space<vmem>>, vector<16x32xf32>,
    %c0_180 = arith.constant 0 : index
    %c5_181 = arith.constant 5 : index
    %288 = vector.load %arg21[%c0_180, %c5_181] : memref<16x146xf32, #tpu.memory_space<vmem>>, vector<16x32xf32>
    %289 = vector.extract_strided_slice %282 {offsets = [1, 0], sizes = [1, 32], strides = [1, 1]} : vector<9x32xf32> to vector<1x32xf32>
    %290 = vector.broadcast %289 : vector<1x32xf32> to vector<16x32xf32>
    %291 = arith.mulf %288, %290 : vector<16x32xf32>
    %c16_182 = arith.constant 16 : index
    %c0_183 = arith.constant 0 : index
    %292 = vector.load %arg22[%c16_182, %c0_183] : memref<144x128xf32, #tpu.memory_space<vmem>>, vector<16x32xf32>
    tpu.vector_store %arg22[%c16_182, %c0_183], %291 {strides = array<i32>} : memref<144x128xf32, #tpu.memory_space<vmem>>, vector<16x32xf32>,
    %c0_184 = arith.constant 0 : index
    %c6_185 = arith.constant 6 : index
    %293 = vector.load %arg21[%c0_184, %c6_185] : memref<16x146xf32, #tpu.memory_space<vmem>>, vector<16x32xf32>
    %294 = vector.extract_strided_slice %282 {offsets = [2, 0], sizes = [1, 32], strides = [1, 1]} : vector<9x32xf32> to vector<1x32xf32>
    %295 = vector.broadcast %294 : vector<1x32xf32> to vector<16x32xf32>
    %296 = arith.mulf %293, %295 : vector<16x32xf32>
    %c32_186 = arith.constant 32 : index
    %c0_187 = arith.constant 0 : index
    %297 = vector.load %arg22[%c32_186, %c0_187] : memref<144x128xf32, #tpu.memory_space<vmem>>, vector<16x32xf32>
    tpu.vector_store %arg22[%c32_186, %c0_187], %296 {strides = array<i32>} : memref<144x128xf32, #tpu.memory_space<vmem>>, vector<16x32xf32>,
    %c0_188 = arith.constant 0 : index
    %c8_189 = arith.constant 8 : index
    %298 = vector.load %arg21[%c0_188, %c8_189] : memref<16x146xf32, #tpu.memory_space<vmem>>, vector<16x32xf32>
    %299 = vector.extract_strided_slice %282 {offsets = [3, 0], sizes = [1, 32], strides = [1, 1]} : vector<9x32xf32> to vector<1x32xf32>
    %300 = vector.broadcast %299 : vector<1x32xf32> to vector<16x32xf32>
    %301 = arith.mulf %298, %300 : vector<16x32xf32>
    %c48_190 = arith.constant 48 : index
    %c0_191 = arith.constant 0 : index
    %302 = vector.load %arg22[%c48_190, %c0_191] : memref<144x128xf32, #tpu.memory_space<vmem>>, vector<16x32xf32>
    tpu.vector_store %arg22[%c48_190, %c0_191], %301 {strides = array<i32>} : memref<144x128xf32, #tpu.memory_space<vmem>>, vector<16x32xf32>,
    %c0_192 = arith.constant 0 : index
    %c9_193 = arith.constant 9 : index
    %303 = vector.load %arg21[%c0_192, %c9_193] : memref<16x146xf32, #tpu.memory_space<vmem>>, vector<16x32xf32>
    %304 = vector.extract_strided_slice %282 {offsets = [4, 0], sizes = [1, 32], strides = [1, 1]} : vector<9x32xf32> to vector<1x32xf32>
    %305 = vector.broadcast %304 : vector<1x32xf32> to vector<16x32xf32>
    %306 = arith.mulf %303, %305 : vector<16x32xf32>
    %c64_194 = arith.constant 64 : index
    %c0_195 = arith.constant 0 : index
    %307 = vector.load %arg22[%c64_194, %c0_195] : memref<144x128xf32, #tpu.memory_space<vmem>>, vector<16x32xf32>
    tpu.vector_store %arg22[%c64_194, %c0_195], %306 {strides = array<i32>} : memref<144x128xf32, #tpu.memory_space<vmem>>, vector<16x32xf32>,
    %c0_196 = arith.constant 0 : index
    %c10_197 = arith.constant 10 : index
    %308 = vector.load %arg21[%c0_196, %c10_197] : memref<16x146xf32, #tpu.memory_space<vmem>>, vector<16x32xf32>
    %309 = vector.extract_strided_slice %282 {offsets = [5, 0], sizes = [1, 32], strides = [1, 1]} : vector<9x32xf32> to vector<1x32xf32>
    %310 = vector.broadcast %309 : vector<1x32xf32> to vector<16x32xf32>
    %311 = arith.mulf %308, %310 : vector<16x32xf32>
    %c80_198 = arith.constant 80 : index
    %c0_199 = arith.constant 0 : index
    %312 = vector.load %arg22[%c80_198, %c0_199] : memref<144x128xf32, #tpu.memory_space<vmem>>, vector<16x32xf32>
    tpu.vector_store %arg22[%c80_198, %c0_199], %311 {strides = array<i32>} : memref<144x128xf32, #tpu.memory_space<vmem>>, vector<16x32xf32>,
    %c0_200 = arith.constant 0 : index
    %c12_201 = arith.constant 12 : index
    %313 = vector.load %arg21[%c0_200, %c12_201] : memref<16x146xf32, #tpu.memory_space<vmem>>, vector<16x32xf32>
    %314 = vector.extract_strided_slice %282 {offsets = [6, 0], sizes = [1, 32], strides = [1, 1]} : vector<9x32xf32> to vector<1x32xf32>
    %315 = vector.broadcast %314 : vector<1x32xf32> to vector<16x32xf32>
    %316 = arith.mulf %313, %315 : vector<16x32xf32>
    %c96_202 = arith.constant 96 : index
    %c0_203 = arith.constant 0 : index
    %317 = vector.load %arg22[%c96_202, %c0_203] : memref<144x128xf32, #tpu.memory_space<vmem>>, vector<16x32xf32>
    tpu.vector_store %arg22[%c96_202, %c0_203], %316 {strides = array<i32>} : memref<144x128xf32, #tpu.memory_space<vmem>>, vector<16x32xf32>,
    %c0_204 = arith.constant 0 : index
    %c13_205 = arith.constant 13 : index
    %318 = vector.load %arg21[%c0_204, %c13_205] : memref<16x146xf32, #tpu.memory_space<vmem>>, vector<16x32xf32>
    %319 = vector.extract_strided_slice %282 {offsets = [7, 0], sizes = [1, 32], strides = [1, 1]} : vector<9x32xf32> to vector<1x32xf32>
    %320 = vector.broadcast %319 : vector<1x32xf32> to vector<16x32xf32>
    %321 = arith.mulf %318, %320 : vector<16x32xf32>
    %c112_206 = arith.constant 112 : index
    %c0_207 = arith.constant 0 : index
    %322 = vector.load %arg22[%c112_206, %c0_207] : memref<144x128xf32, #tpu.memory_space<vmem>>, vector<16x32xf32>
    tpu.vector_store %arg22[%c112_206, %c0_207], %321 {strides = array<i32>} : memref<144x128xf32, #tpu.memory_space<vmem>>, vector<16x32xf32>,
    %c0_208 = arith.constant 0 : index
    %c14_209 = arith.constant 14 : index
    %323 = vector.load %arg21[%c0_208, %c14_209] : memref<16x146xf32, #tpu.memory_space<vmem>>, vector<16x32xf32>
    %324 = vector.extract_strided_slice %282 {offsets = [8, 0], sizes = [1, 32], strides = [1, 1]} : vector<9x32xf32> to vector<1x32xf32>
    %325 = vector.broadcast %324 : vector<1x32xf32> to vector<16x32xf32>
    %326 = arith.mulf %323, %325 : vector<16x32xf32>
    %c128_210 = arith.constant 128 : index
    %c0_211 = arith.constant 0 : index
    %327 = vector.load %arg22[%c128_210, %c0_211] : memref<144x128xf32, #tpu.memory_space<vmem>>, vector<16x32xf32>
    tpu.vector_store %arg22[%c128_210, %c0_211], %326 {strides = array<i32>} : memref<144x128xf32, #tpu.memory_space<vmem>>, vector<16x32xf32>,
    %c0_212 = arith.constant 0 : index
    %c0_213 = arith.constant 0 : index
    %328 = vector.load %arg10[%c0_212, %c0_213] : memref<16x144xf32, #tpu.memory_space<vmem>>, vector<16x144xf32>
    %c0_214 = arith.constant 0 : index
    %c0_215 = arith.constant 0 : index
    %329 = vector.load %arg22[%c0_214, %c0_215] : memref<144x128xf32, #tpu.memory_space<vmem>>, vector<144x32xf32>
    %cst_216 = arith.constant dense<0.000000e+00> : vector<16x32xf32>
    %330 = tpu.matmul %328, %329, %cst_216 {dimension_numbers = #tpu.dot_dimension_numbers<[1], [0], [0], [1], [0, 0, 1, 1], [], []>} : vector<16x144xf32>, vector<144x32xf32>, vector<16x32xf32> -> vector<16x32xf32>
    %c0_217 = arith.constant 0 : index
    %c0_218 = arith.constant 0 : index
    %331 = vector.load %arg11[%c0_217, %c0_218] : memref<16x1xf32, #tpu.memory_space<vmem>>, vector<16x1xf32>
    %332 = vector.broadcast %331 : vector<16x1xf32> to vector<16x32xf32>
    %333 = arith.addf %330, %332 : vector<16x32xf32>
    %cst_219 = arith.constant dense<0.000000e+00> : vector<16xf32>
    %334 = vector.multi_reduction <add>, %333, %cst_219 [1] : vector<16x32xf32> to vector<16xf32>
    %335 = vector.shape_cast %334 : vector<16xf32> to vector<16x1xf32>
    %cst_220 = arith.constant 3.125000e-02 : f32
    %336 = vector.broadcast %cst_220 : f32 to vector<16x1xf32>
    %337 = arith.mulf %335, %336 : vector<16x1xf32>
    %338 = vector.broadcast %337 : vector<16x1xf32> to vector<16x32xf32>
    %339 = arith.subf %333, %338 : vector<16x32xf32>
    %340 = arith.mulf %339, %339 : vector<16x32xf32>
    %cst_221 = arith.constant dense<0.000000e+00> : vector<16xf32>
    %341 = vector.multi_reduction <add>, %340, %cst_221 [1] : vector<16x32xf32> to vector<16xf32>
    %342 = vector.shape_cast %341 : vector<16xf32> to vector<16x1xf32>
    %cst_222 = arith.constant 3.125000e-02 : f32
    %343 = vector.broadcast %cst_222 : f32 to vector<16x1xf32>
    %344 = arith.mulf %342, %343 : vector<16x1xf32>
    %cst_223 = arith.constant 9.99999974E-6 : f32
    %345 = vector.broadcast %cst_223 : f32 to vector<16x1xf32>
    %346 = arith.addf %344, %345 : vector<16x1xf32>
    %347 = math.rsqrt %346 : vector<16x1xf32>
    %348 = vector.broadcast %347 : vector<16x1xf32> to vector<16x32xf32>
    %349 = arith.mulf %339, %348 : vector<16x32xf32>
    %350 = math.tanh %349 : vector<16x32xf32>
    %351 = vector.extract_strided_slice %350 {offsets = [0, 0], sizes = [1, 16], strides = [1, 1]} : vector<16x32xf32> to vector<1x16xf32>
    %c0_224 = arith.constant 0 : index
    %c0_225 = arith.constant 0 : index
    %352 = vector.load %arg23[%c0_224, %c0_225] : memref<2x256xf32, #tpu.memory_space<vmem>>, vector<1x16xf32>
    tpu.vector_store %arg23[%c0_224, %c0_225], %351 {strides = array<i32>} : memref<2x256xf32, #tpu.memory_space<vmem>>, vector<1x16xf32>,
    %353 = vector.extract_strided_slice %350 {offsets = [1, 0], sizes = [1, 16], strides = [1, 1]} : vector<16x32xf32> to vector<1x16xf32>
    %c0_226 = arith.constant 0 : index
    %c16_227 = arith.constant 16 : index
    %354 = vector.load %arg23[%c0_226, %c16_227] : memref<2x256xf32, #tpu.memory_space<vmem>>, vector<1x16xf32>
    tpu.vector_store %arg23[%c0_226, %c16_227], %353 {strides = array<i32>} : memref<2x256xf32, #tpu.memory_space<vmem>>, vector<1x16xf32>,
    %355 = vector.extract_strided_slice %350 {offsets = [2, 0], sizes = [1, 16], strides = [1, 1]} : vector<16x32xf32> to vector<1x16xf32>
    %c0_228 = arith.constant 0 : index
    %c32_229 = arith.constant 32 : index
    %356 = vector.load %arg23[%c0_228, %c32_229] : memref<2x256xf32, #tpu.memory_space<vmem>>, vector<1x16xf32>
    tpu.vector_store %arg23[%c0_228, %c32_229], %355 {strides = array<i32>} : memref<2x256xf32, #tpu.memory_space<vmem>>, vector<1x16xf32>,
    %357 = vector.extract_strided_slice %350 {offsets = [3, 0], sizes = [1, 16], strides = [1, 1]} : vector<16x32xf32> to vector<1x16xf32>
    %c0_230 = arith.constant 0 : index
    %c48_231 = arith.constant 48 : index
    %358 = vector.load %arg23[%c0_230, %c48_231] : memref<2x256xf32, #tpu.memory_space<vmem>>, vector<1x16xf32>
    tpu.vector_store %arg23[%c0_230, %c48_231], %357 {strides = array<i32>} : memref<2x256xf32, #tpu.memory_space<vmem>>, vector<1x16xf32>,
    %359 = vector.extract_strided_slice %350 {offsets = [4, 0], sizes = [1, 16], strides = [1, 1]} : vector<16x32xf32> to vector<1x16xf32>
    %c0_232 = arith.constant 0 : index
    %c64_233 = arith.constant 64 : index
    %360 = vector.load %arg23[%c0_232, %c64_233] : memref<2x256xf32, #tpu.memory_space<vmem>>, vector<1x16xf32>
    tpu.vector_store %arg23[%c0_232, %c64_233], %359 {strides = array<i32>} : memref<2x256xf32, #tpu.memory_space<vmem>>, vector<1x16xf32>,
    %361 = vector.extract_strided_slice %350 {offsets = [5, 0], sizes = [1, 16], strides = [1, 1]} : vector<16x32xf32> to vector<1x16xf32>
    %c0_234 = arith.constant 0 : index
    %c80_235 = arith.constant 80 : index
    %362 = vector.load %arg23[%c0_234, %c80_235] : memref<2x256xf32, #tpu.memory_space<vmem>>, vector<1x16xf32>
    tpu.vector_store %arg23[%c0_234, %c80_235], %361 {strides = array<i32>} : memref<2x256xf32, #tpu.memory_space<vmem>>, vector<1x16xf32>,
    %363 = vector.extract_strided_slice %350 {offsets = [6, 0], sizes = [1, 16], strides = [1, 1]} : vector<16x32xf32> to vector<1x16xf32>
    %c0_236 = arith.constant 0 : index
    %c96_237 = arith.constant 96 : index
    %364 = vector.load %arg23[%c0_236, %c96_237] : memref<2x256xf32, #tpu.memory_space<vmem>>, vector<1x16xf32>
    tpu.vector_store %arg23[%c0_236, %c96_237], %363 {strides = array<i32>} : memref<2x256xf32, #tpu.memory_space<vmem>>, vector<1x16xf32>,
    %365 = vector.extract_strided_slice %350 {offsets = [7, 0], sizes = [1, 16], strides = [1, 1]} : vector<16x32xf32> to vector<1x16xf32>
    %c0_238 = arith.constant 0 : index
    %c112_239 = arith.constant 112 : index
    %366 = vector.load %arg23[%c0_238, %c112_239] : memref<2x256xf32, #tpu.memory_space<vmem>>, vector<1x16xf32>
    tpu.vector_store %arg23[%c0_238, %c112_239], %365 {strides = array<i32>} : memref<2x256xf32, #tpu.memory_space<vmem>>, vector<1x16xf32>,
    %367 = vector.extract_strided_slice %350 {offsets = [8, 0], sizes = [1, 16], strides = [1, 1]} : vector<16x32xf32> to vector<1x16xf32>
    %c0_240 = arith.constant 0 : index
    %c128_241 = arith.constant 128 : index
    %368 = vector.load %arg23[%c0_240, %c128_241] : memref<2x256xf32, #tpu.memory_space<vmem>>, vector<1x16xf32>
    tpu.vector_store %arg23[%c0_240, %c128_241], %367 {strides = array<i32>} : memref<2x256xf32, #tpu.memory_space<vmem>>, vector<1x16xf32>,
    %369 = vector.extract_strided_slice %350 {offsets = [9, 0], sizes = [1, 16], strides = [1, 1]} : vector<16x32xf32> to vector<1x16xf32>
    %c0_242 = arith.constant 0 : index
    %c144 = arith.constant 144 : index
    %370 = vector.load %arg23[%c0_242, %c144] : memref<2x256xf32, #tpu.memory_space<vmem>>, vector<1x16xf32>
    tpu.vector_store %arg23[%c0_242, %c144], %369 {strides = array<i32>} : memref<2x256xf32, #tpu.memory_space<vmem>>, vector<1x16xf32>,
    %371 = vector.extract_strided_slice %350 {offsets = [10, 0], sizes = [1, 16], strides = [1, 1]} : vector<16x32xf32> to vector<1x16xf32>
    %c0_243 = arith.constant 0 : index
    %c160 = arith.constant 160 : index
    %372 = vector.load %arg23[%c0_243, %c160] : memref<2x256xf32, #tpu.memory_space<vmem>>, vector<1x16xf32>
    tpu.vector_store %arg23[%c0_243, %c160], %371 {strides = array<i32>} : memref<2x256xf32, #tpu.memory_space<vmem>>, vector<1x16xf32>,
    %373 = vector.extract_strided_slice %350 {offsets = [11, 0], sizes = [1, 16], strides = [1, 1]} : vector<16x32xf32> to vector<1x16xf32>
    %c0_244 = arith.constant 0 : index
    %c176 = arith.constant 176 : index
    %374 = vector.load %arg23[%c0_244, %c176] : memref<2x256xf32, #tpu.memory_space<vmem>>, vector<1x16xf32>
    tpu.vector_store %arg23[%c0_244, %c176], %373 {strides = array<i32>} : memref<2x256xf32, #tpu.memory_space<vmem>>, vector<1x16xf32>,
    %375 = vector.extract_strided_slice %350 {offsets = [12, 0], sizes = [1, 16], strides = [1, 1]} : vector<16x32xf32> to vector<1x16xf32>
    %c0_245 = arith.constant 0 : index
    %c192 = arith.constant 192 : index
    %376 = vector.load %arg23[%c0_245, %c192] : memref<2x256xf32, #tpu.memory_space<vmem>>, vector<1x16xf32>
    tpu.vector_store %arg23[%c0_245, %c192], %375 {strides = array<i32>} : memref<2x256xf32, #tpu.memory_space<vmem>>, vector<1x16xf32>,
    %377 = vector.extract_strided_slice %350 {offsets = [13, 0], sizes = [1, 16], strides = [1, 1]} : vector<16x32xf32> to vector<1x16xf32>
    %c0_246 = arith.constant 0 : index
    %c208 = arith.constant 208 : index
    %378 = vector.load %arg23[%c0_246, %c208] : memref<2x256xf32, #tpu.memory_space<vmem>>, vector<1x16xf32>
    tpu.vector_store %arg23[%c0_246, %c208], %377 {strides = array<i32>} : memref<2x256xf32, #tpu.memory_space<vmem>>, vector<1x16xf32>,
    %379 = vector.extract_strided_slice %350 {offsets = [14, 0], sizes = [1, 16], strides = [1, 1]} : vector<16x32xf32> to vector<1x16xf32>
    %c0_247 = arith.constant 0 : index
    %c224 = arith.constant 224 : index
    %380 = vector.load %arg23[%c0_247, %c224] : memref<2x256xf32, #tpu.memory_space<vmem>>, vector<1x16xf32>
    tpu.vector_store %arg23[%c0_247, %c224], %379 {strides = array<i32>} : memref<2x256xf32, #tpu.memory_space<vmem>>, vector<1x16xf32>,
    %381 = vector.extract_strided_slice %350 {offsets = [15, 0], sizes = [1, 16], strides = [1, 1]} : vector<16x32xf32> to vector<1x16xf32>
    %c0_248 = arith.constant 0 : index
    %c240 = arith.constant 240 : index
    %382 = vector.load %arg23[%c0_248, %c240] : memref<2x256xf32, #tpu.memory_space<vmem>>, vector<1x16xf32>
    tpu.vector_store %arg23[%c0_248, %c240], %381 {strides = array<i32>} : memref<2x256xf32, #tpu.memory_space<vmem>>, vector<1x16xf32>,
    %383 = vector.extract_strided_slice %350 {offsets = [0, 16], sizes = [1, 16], strides = [1, 1]} : vector<16x32xf32> to vector<1x16xf32>
    %c1_249 = arith.constant 1 : index
    %c0_250 = arith.constant 0 : index
    %384 = vector.load %arg23[%c1_249, %c0_250] : memref<2x256xf32, #tpu.memory_space<vmem>>, vector<1x16xf32>
    tpu.vector_store %arg23[%c1_249, %c0_250], %383 {strides = array<i32>} : memref<2x256xf32, #tpu.memory_space<vmem>>, vector<1x16xf32>,
    %385 = vector.extract_strided_slice %350 {offsets = [1, 16], sizes = [1, 16], strides = [1, 1]} : vector<16x32xf32> to vector<1x16xf32>
    %c1_251 = arith.constant 1 : index
    %c16_252 = arith.constant 16 : index
    %386 = vector.load %arg23[%c1_251, %c16_252] : memref<2x256xf32, #tpu.memory_space<vmem>>, vector<1x16xf32>
    tpu.vector_store %arg23[%c1_251, %c16_252], %385 {strides = array<i32>} : memref<2x256xf32, #tpu.memory_space<vmem>>, vector<1x16xf32>,
    %387 = vector.extract_strided_slice %350 {offsets = [2, 16], sizes = [1, 16], strides = [1, 1]} : vector<16x32xf32> to vector<1x16xf32>
    %c1_253 = arith.constant 1 : index
    %c32_254 = arith.constant 32 : index
    %388 = vector.load %arg23[%c1_253, %c32_254] : memref<2x256xf32, #tpu.memory_space<vmem>>, vector<1x16xf32>
    tpu.vector_store %arg23[%c1_253, %c32_254], %387 {strides = array<i32>} : memref<2x256xf32, #tpu.memory_space<vmem>>, vector<1x16xf32>,
    %389 = vector.extract_strided_slice %350 {offsets = [3, 16], sizes = [1, 16], strides = [1, 1]} : vector<16x32xf32> to vector<1x16xf32>
    %c1_255 = arith.constant 1 : index
    %c48_256 = arith.constant 48 : index
    %390 = vector.load %arg23[%c1_255, %c48_256] : memref<2x256xf32, #tpu.memory_space<vmem>>, vector<1x16xf32>
    tpu.vector_store %arg23[%c1_255, %c48_256], %389 {strides = array<i32>} : memref<2x256xf32, #tpu.memory_space<vmem>>, vector<1x16xf32>,
    %391 = vector.extract_strided_slice %350 {offsets = [4, 16], sizes = [1, 16], strides = [1, 1]} : vector<16x32xf32> to vector<1x16xf32>
    %c1_257 = arith.constant 1 : index
    %c64_258 = arith.constant 64 : index
    %392 = vector.load %arg23[%c1_257, %c64_258] : memref<2x256xf32, #tpu.memory_space<vmem>>, vector<1x16xf32>
    tpu.vector_store %arg23[%c1_257, %c64_258], %391 {strides = array<i32>} : memref<2x256xf32, #tpu.memory_space<vmem>>, vector<1x16xf32>,
    %393 = vector.extract_strided_slice %350 {offsets = [5, 16], sizes = [1, 16], strides = [1, 1]} : vector<16x32xf32> to vector<1x16xf32>
    %c1_259 = arith.constant 1 : index
    %c80_260 = arith.constant 80 : index
    %394 = vector.load %arg23[%c1_259, %c80_260] : memref<2x256xf32, #tpu.memory_space<vmem>>, vector<1x16xf32>
    tpu.vector_store %arg23[%c1_259, %c80_260], %393 {strides = array<i32>} : memref<2x256xf32, #tpu.memory_space<vmem>>, vector<1x16xf32>,
    %395 = vector.extract_strided_slice %350 {offsets = [6, 16], sizes = [1, 16], strides = [1, 1]} : vector<16x32xf32> to vector<1x16xf32>
    %c1_261 = arith.constant 1 : index
    %c96_262 = arith.constant 96 : index
    %396 = vector.load %arg23[%c1_261, %c96_262] : memref<2x256xf32, #tpu.memory_space<vmem>>, vector<1x16xf32>
    tpu.vector_store %arg23[%c1_261, %c96_262], %395 {strides = array<i32>} : memref<2x256xf32, #tpu.memory_space<vmem>>, vector<1x16xf32>,
    %397 = vector.extract_strided_slice %350 {offsets = [7, 16], sizes = [1, 16], strides = [1, 1]} : vector<16x32xf32> to vector<1x16xf32>
    %c1_263 = arith.constant 1 : index
    %c112_264 = arith.constant 112 : index
    %398 = vector.load %arg23[%c1_263, %c112_264] : memref<2x256xf32, #tpu.memory_space<vmem>>, vector<1x16xf32>
    tpu.vector_store %arg23[%c1_263, %c112_264], %397 {strides = array<i32>} : memref<2x256xf32, #tpu.memory_space<vmem>>, vector<1x16xf32>,
    %399 = vector.extract_strided_slice %350 {offsets = [8, 16], sizes = [1, 16], strides = [1, 1]} : vector<16x32xf32> to vector<1x16xf32>
    %c1_265 = arith.constant 1 : index
    %c128_266 = arith.constant 128 : index
    %400 = vector.load %arg23[%c1_265, %c128_266] : memref<2x256xf32, #tpu.memory_space<vmem>>, vector<1x16xf32>
    tpu.vector_store %arg23[%c1_265, %c128_266], %399 {strides = array<i32>} : memref<2x256xf32, #tpu.memory_space<vmem>>, vector<1x16xf32>,
    %401 = vector.extract_strided_slice %350 {offsets = [9, 16], sizes = [1, 16], strides = [1, 1]} : vector<16x32xf32> to vector<1x16xf32>
    %c1_267 = arith.constant 1 : index
    %c144_268 = arith.constant 144 : index
    %402 = vector.load %arg23[%c1_267, %c144_268] : memref<2x256xf32, #tpu.memory_space<vmem>>, vector<1x16xf32>
    tpu.vector_store %arg23[%c1_267, %c144_268], %401 {strides = array<i32>} : memref<2x256xf32, #tpu.memory_space<vmem>>, vector<1x16xf32>,
    %403 = vector.extract_strided_slice %350 {offsets = [10, 16], sizes = [1, 16], strides = [1, 1]} : vector<16x32xf32> to vector<1x16xf32>
    %c1_269 = arith.constant 1 : index
    %c160_270 = arith.constant 160 : index
    %404 = vector.load %arg23[%c1_269, %c160_270] : memref<2x256xf32, #tpu.memory_space<vmem>>, vector<1x16xf32>
    tpu.vector_store %arg23[%c1_269, %c160_270], %403 {strides = array<i32>} : memref<2x256xf32, #tpu.memory_space<vmem>>, vector<1x16xf32>,
    %405 = vector.extract_strided_slice %350 {offsets = [11, 16], sizes = [1, 16], strides = [1, 1]} : vector<16x32xf32> to vector<1x16xf32>
    %c1_271 = arith.constant 1 : index
    %c176_272 = arith.constant 176 : index
    %406 = vector.load %arg23[%c1_271, %c176_272] : memref<2x256xf32, #tpu.memory_space<vmem>>, vector<1x16xf32>
    tpu.vector_store %arg23[%c1_271, %c176_272], %405 {strides = array<i32>} : memref<2x256xf32, #tpu.memory_space<vmem>>, vector<1x16xf32>,
    %407 = vector.extract_strided_slice %350 {offsets = [12, 16], sizes = [1, 16], strides = [1, 1]} : vector<16x32xf32> to vector<1x16xf32>
    %c1_273 = arith.constant 1 : index
    %c192_274 = arith.constant 192 : index
    %408 = vector.load %arg23[%c1_273, %c192_274] : memref<2x256xf32, #tpu.memory_space<vmem>>, vector<1x16xf32>
    tpu.vector_store %arg23[%c1_273, %c192_274], %407 {strides = array<i32>} : memref<2x256xf32, #tpu.memory_space<vmem>>, vector<1x16xf32>,
    %409 = vector.extract_strided_slice %350 {offsets = [13, 16], sizes = [1, 16], strides = [1, 1]} : vector<16x32xf32> to vector<1x16xf32>
    %c1_275 = arith.constant 1 : index
    %c208_276 = arith.constant 208 : index
    %410 = vector.load %arg23[%c1_275, %c208_276] : memref<2x256xf32, #tpu.memory_space<vmem>>, vector<1x16xf32>
    tpu.vector_store %arg23[%c1_275, %c208_276], %409 {strides = array<i32>} : memref<2x256xf32, #tpu.memory_space<vmem>>, vector<1x16xf32>,
    %411 = vector.extract_strided_slice %350 {offsets = [14, 16], sizes = [1, 16], strides = [1, 1]} : vector<16x32xf32> to vector<1x16xf32>
    %c1_277 = arith.constant 1 : index
    %c224_278 = arith.constant 224 : index
    %412 = vector.load %arg23[%c1_277, %c224_278] : memref<2x256xf32, #tpu.memory_space<vmem>>, vector<1x16xf32>
    tpu.vector_store %arg23[%c1_277, %c224_278], %411 {strides = array<i32>} : memref<2x256xf32, #tpu.memory_space<vmem>>, vector<1x16xf32>,
    %413 = vector.extract_strided_slice %350 {offsets = [15, 16], sizes = [1, 16], strides = [1, 1]} : vector<16x32xf32> to vector<1x16xf32>
    %c1_279 = arith.constant 1 : index
    %c240_280 = arith.constant 240 : index
    %414 = vector.load %arg23[%c1_279, %c240_280] : memref<2x256xf32, #tpu.memory_space<vmem>>, vector<1x16xf32>
    tpu.vector_store %arg23[%c1_279, %c240_280], %413 {strides = array<i32>} : memref<2x256xf32, #tpu.memory_space<vmem>>, vector<1x16xf32>,
    %c0_281 = arith.constant 0 : index
    %c0_282 = arith.constant 0 : index
    %415 = vector.load %arg23[%c0_281, %c0_282] : memref<2x256xf32, #tpu.memory_space<vmem>>, vector<2x256xf32>
    %c0_283 = arith.constant 0 : index
    %c0_284 = arith.constant 0 : index
    %416 = vector.load %arg18[%c0_283, %c0_284] : memref<256x16xf32, #tpu.memory_space<vmem>>, vector<256x16xf32>
    %cst_285 = arith.constant dense<0.000000e+00> : vector<2x16xf32>
    %417 = tpu.matmul %415, %416, %cst_285 {dimension_numbers = #tpu.dot_dimension_numbers<[1], [0], [0], [1], [0, 0, 1, 1], [], []>} : vector<2x256xf32>, vector<256x16xf32>, vector<2x16xf32> -> vector<2x16xf32>
    %c0_286 = arith.constant 0 : index
    %c0_287 = arith.constant 0 : index
    %418 = vector.load %arg19[%c0_286, %c0_287] : memref<1x16xf32, #tpu.memory_space<vmem>>, vector<1x16xf32>
    %419 = vector.broadcast %418 : vector<1x16xf32> to vector<2x16xf32>
    %420 = arith.addf %417, %419 : vector<2x16xf32>
    %421 = vector.extract_strided_slice %420 {offsets = [0, 0], sizes = [2, 8], strides = [1, 1]} : vector<2x16xf32> to vector<2x8xf32>
    %422 = vector.extract_strided_slice %420 {offsets = [0, 8], sizes = [2, 8], strides = [1, 1]} : vector<2x16xf32> to vector<2x8xf32>
    %cst_288 = arith.constant -5.000000e+00 : f32
    %cst_289 = arith.constant 3.000000e+00 : f32
    %423 = vector.broadcast %cst_288 : f32 to vector<2x8xf32>
    %424 = arith.maximumf %423, %422 : vector<2x8xf32>
    %425 = vector.broadcast %cst_289 : f32 to vector<2x8xf32>
    %426 = arith.minimumf %425, %424 : vector<2x8xf32>
    %c0_290 = arith.constant 0 : index
    %c0_291 = arith.constant 0 : index
    %427 = vector.load %arg2[%c0_290, %c0_291] : memref<2x8xf32, #tpu.memory_space<vmem>>, vector<2x8xf32>
    %cst_292 = arith.constant -1.000000e+01 : f32
    %cst_293 = arith.constant 1.000000e+01 : f32
    %428 = vector.broadcast %cst_292 : f32 to vector<2x8xf32>
    %429 = arith.maximumf %428, %427 : vector<2x8xf32>
    %430 = vector.broadcast %cst_293 : f32 to vector<2x8xf32>
    %431 = arith.minimumf %430, %429 : vector<2x8xf32>
    %cst_294 = arith.constant 5.000000e-01 : f32
    %432 = vector.broadcast %cst_294 : f32 to vector<2x8xf32>
    %433 = arith.mulf %432, %426 : vector<2x8xf32>
    %434 = math.exp %433 : vector<2x8xf32>
    %435 = arith.mulf %431, %434 : vector<2x8xf32>
    %436 = arith.addf %435, %421 : vector<2x8xf32>
    %c0_295 = arith.constant 0 : index
    %c0_296 = arith.constant 0 : index
    %437 = vector.load %arg20[%c0_295, %c0_296] : memref<2x8xf32, #tpu.memory_space<vmem>>, vector<2x8xf32>
    tpu.vector_store %arg20[%c0_295, %c0_296], %436 {strides = array<i32>} : memref<2x8xf32, #tpu.memory_space<vmem>>, vector<2x8xf32>,
    return
  }
}

</mosaic_0001>

<llo_original>
// kernel: forward.1
$region0: #{forward.1}
  #allocation0 [shape = 'u32[]', space=smem, size = 0x4, offset = 0x4, fixed_abs, tag = 'smem constant byte address 0x4 - core index']
  #allocation1 [shape = 'u32[72,128]{1,0:T(1,128)}', space=vmem, size = 0x9000, scoped, tag = 'internal scratch']
  #allocation2 [shape = 'f32[16,146]{1,0:T(8,128)}', space=vmem, size = 0x4000, scoped, tag = 'scratch operand']
  #allocation3 [shape = 'f32[144,128]{1,0:T(8,128)}', space=vmem, size = 0x12000, scoped, tag = 'scratch operand']
  #allocation4 [shape = 'f32[2,256]{1,0:T(2,128)}', space=vmem, size = 0x800, scoped, tag = 'scratch operand']
  %s0 = inlined_call_operand.vmem [shape: f32[3,512], index: 0, kind: input, shape index: {}]
  %s1 = inlined_call_operand.vmem [shape: f32[2,4], index: 1, kind: input, shape index: {}]
  %s2 = inlined_call_operand.vmem [shape: f32[2,8], index: 2, kind: input, shape index: {}]
  %s3 = inlined_call_operand.vmem [shape: f32[4,256], index: 3, kind: input, shape index: {}]
  %s4 = inlined_call_operand.vmem [shape: f32[1,256], index: 4, kind: input, shape index: {}]
  %s5 = inlined_call_operand.vmem [shape: f32[3,3], index: 5, kind: input, shape index: {}]
  %s6 = inlined_call_operand.vmem [shape: f32[3,1], index: 6, kind: input, shape index: {}]
  %s7 = inlined_call_operand.vmem [shape: f32[8,36], index: 7, kind: input, shape index: {}]
  %s8 = inlined_call_operand.vmem [shape: f32[16,72], index: 8, kind: input, shape index: {}]
  %s9 = inlined_call_operand.vmem [shape: f32[16,144], index: 9, kind: input, shape index: {}]
  %s10 = inlined_call_operand.vmem [shape: f32[16,144], index: 10, kind: input, shape index: {}]
  %s11 = inlined_call_operand.vmem [shape: f32[16,1], index: 11, kind: input, shape index: {}]
  %s12 = inlined_call_operand.vmem [shape: f32[256,64], index: 12, kind: input, shape index: {}]
  %s13 = inlined_call_operand.vmem [shape: f32[64,16], index: 13, kind: input, shape index: {}]
  %s14 = inlined_call_operand.vmem [shape: f32[9,128], index: 14, kind: input, shape index: {}]
  %s15 = inlined_call_operand.vmem [shape: f32[9,32], index: 15, kind: input, shape index: {}, may-alias: {15,16,17}]
  %s16 = inlined_call_operand.vmem [shape: f32[9,32], index: 16, kind: input, shape index: {}, may-alias: {15,16,17}]
  %s17 = inlined_call_operand.vmem [shape: f32[9,32], index: 17, kind: input, shape index: {}, may-alias: {15,16,17}]
  %s18 = inlined_call_operand.vmem [shape: f32[256,16], index: 18, kind: input, shape index: {}]
  %s19 = inlined_call_operand.vmem [shape: f32[1,16], index: 19, kind: input, shape index: {}]
  %s20 = inlined_call_operand.hbm [shape: f32[2,8], index: 20, kind: output, shape index: {}]
  %s21 = sld [smem:[#allocation0]]
  $region90: #{forward.1} parent=0
    _
  %s23 = ssub.s32 1, %s21
  %s24 = scalar_select 0, %s23, %s21
  $region1: #{forward.1} parent=0
    #allocation5 [shape = 'u8[1024]{0}', space=vmem, size = 0x400, scoped, tag = 'output window, operand 0, single buffered']
    #allocation6 [shape = 's32[1]{0}', space=sflag, size = 0x4, scoped, tag = 'scoped memory for forward.1']
    %25 = vsyncpa [#allocation6], 0
    // Predicated region
    $region2: #{forward.1} parent=1 // pred_check
      _
    $region3: #{forward.1} parent=1 // pred_check_branch
      %27 = sbr.rel (0) target = $region5
    $region4: #{forward.1} parent=1 // pred_region
      _
    $region5: #{forward.1} parent=1 // pred_fallthru
      _
    // Predicated region
    $region6: #{forward.1} parent=1 // pred_check
      _
    $region7: #{forward.1} parent=1 // pred_check_branch
      %29 = sbr.rel (0) target = $region9
    $region8: #{forward.1} parent=1 // pred_region
      _
    $region9: #{forward.1} parent=1 // pred_fallthru
      _
    // Predicated region
    $region10: #{forward.1} parent=1 // pred_check
      _
    $region11: #{forward.1} parent=1 // pred_check_branch
      %31 = sbr.rel (0) target = $region13
    $region12: #{forward.1} parent=1 // pred_region
      _
    $region13: #{forward.1} parent=1 // pred_fallthru
      _
    // Predicated region
    $region14: #{forward.1} parent=1 // pred_check
      _
    $region15: #{forward.1} parent=1 // pred_check_branch
      %33 = sbr.rel (0) target = $region17
    $region16: #{forward.1} parent=1 // pred_region
      _
    $region17: #{forward.1} parent=1 // pred_fallthru
      _
    // Predicated region
    $region18: #{forward.1} parent=1 // pred_check
      _
    $region19: #{forward.1} parent=1 // pred_check_branch
      %35 = sbr.rel (0) target = $region21
    $region20: #{forward.1} parent=1 // pred_region
      _
    $region21: #{forward.1} parent=1 // pred_fallthru
      _
    // Predicated region
    $region22: #{forward.1} parent=1 // pred_check
      _
    $region23: #{forward.1} parent=1 // pred_check_branch
      %37 = sbr.rel (0) target = $region25
    $region24: #{forward.1} parent=1 // pred_region
      _
    $region25: #{forward.1} parent=1 // pred_fallthru
      _
    // Predicated region
    $region26: #{forward.1} parent=1 // pred_check
      _
    $region27: #{forward.1} parent=1 // pred_check_branch
      %39 = sbr.rel (0) target = $region29
    $region28: #{forward.1} parent=1 // pred_region
      _
    $region29: #{forward.1} parent=1 // pred_fallthru
      _
    // Predicated region
    $region30: #{forward.1} parent=1 // pred_check
      _
    $region31: #{forward.1} parent=1 // pred_check_branch
      %41 = sbr.rel (0) target = $region33
    $region32: #{forward.1} parent=1 // pred_region
      _
    $region33: #{forward.1} parent=1 // pred_fallthru
      _
    // Predicated region
    $region34: #{forward.1} parent=1 // pred_check
      _
    $region35: #{forward.1} parent=1 // pred_check_branch
      %43 = sbr.rel (0) target = $region37
    $region36: #{forward.1} parent=1 // pred_region
      _
    $region37: #{forward.1} parent=1 // pred_fallthru
      _
    // Predicated region
    $region38: #{forward.1} parent=1 // pred_check
      _
    $region39: #{forward.1} parent=1 // pred_check_branch
      %45 = sbr.rel (0) target = $region41
    $region40: #{forward.1} parent=1 // pred_region
      _
    $region41: #{forward.1} parent=1 // pred_fallthru
      _
    // Predicated region
    $region42: #{forward.1} parent=1 // pred_check
      _
    $region43: #{forward.1} parent=1 // pred_check_branch
      %47 = sbr.rel (0) target = $region45
    $region44: #{forward.1} parent=1 // pred_region
      _
    $region45: #{forward.1} parent=1 // pred_fallthru
      _
    // Predicated region
    $region46: #{forward.1} parent=1 // pred_check
      _
    $region47: #{forward.1} parent=1 // pred_check_branch
      %49 = sbr.rel (0) target = $region49
    $region48: #{forward.1} parent=1 // pred_region
      _
    $region49: #{forward.1} parent=1 // pred_fallthru
      _
    // Predicated region
    $region50: #{forward.1} parent=1 // pred_check
      _
    $region51: #{forward.1} parent=1 // pred_check_branch
      %51 = sbr.rel (0) target = $region53
    $region52: #{forward.1} parent=1 // pred_region
      _
    $region53: #{forward.1} parent=1 // pred_fallthru
      _
    // Predicated region
    $region54: #{forward.1} parent=1 // pred_check
      _
    $region55: #{forward.1} parent=1 // pred_check_branch
      %53 = sbr.rel (0) target = $region57
    $region56: #{forward.1} parent=1 // pred_region
      _
    $region57: #{forward.1} parent=1 // pred_fallthru
      _
    // Predicated region
    $region58: #{forward.1} parent=1 // pred_check
      _
    $region59: #{forward.1} parent=1 // pred_check_branch
      %55 = sbr.rel (0) target = $region61
    $region60: #{forward.1} parent=1 // pred_region
      _
    $region61: #{forward.1} parent=1 // pred_fallthru
      _
    // Predicated region
    $region62: #{forward.1} parent=1 // pred_check
      _
    $region63: #{forward.1} parent=1 // pred_check_branch
      %57 = sbr.rel (0) target = $region65
    $region64: #{forward.1} parent=1 // pred_region
      _
    $region65: #{forward.1} parent=1 // pred_fallthru
      _
    // Predicated region
    $region66: #{forward.1} parent=1 // pred_check
      _
    $region67: #{forward.1} parent=1 // pred_check_branch
      %59 = sbr.rel (0) target = $region69
    $region68: #{forward.1} parent=1 // pred_region
      _
    $region69: #{forward.1} parent=1 // pred_fallthru
      _
    // Predicated region
    $region70: #{forward.1} parent=1 // pred_check
      _
    $region71: #{forward.1} parent=1 // pred_check_branch
      %61 = sbr.rel (0) target = $region73
    $region72: #{forward.1} parent=1 // pred_region
      _
    $region73: #{forward.1} parent=1 // pred_fallthru
      _
    // Predicated region
    $region74: #{forward.1} parent=1 // pred_check
      _
    $region75: #{forward.1} parent=1 // pred_check_branch
      %63 = sbr.rel (0) target = $region77
    $region76: #{forward.1} parent=1 // pred_region
      _
    $region77: #{forward.1} parent=1 // pred_fallthru
      _
    // Predicated region
    $region78: #{forward.1} parent=1 // pred_check
      _
    $region79: #{forward.1} parent=1 // pred_check_branch
      %65 = sbr.rel (0) target = $region81
    $region80: #{forward.1} parent=1 // pred_region
      _
    $region81: #{forward.1} parent=1 // pred_fallthru
      _
    %66 = vst [vmem:[#allocation2] sm:$0xff] 0.0
    %vm67 = vcmask 146432
    %68 = vst.msk [vmem:[#allocation2 + $0x8] sm:$0xff] %vm67, 0.0
    %69 = vst [vmem:[#allocation2 + $0x10] sm:$0xff] 0.0
    %70 = vst.msk [vmem:[#allocation2 + $0x18] sm:$0xff] %vm67, 0.0
    %v71 = vld [vmem:[%s5] sm:$0x7]
    %v72 = vld [vmem:[%s0] sm:$0x77]
    %v73 = vld [vmem:[%s0 + $0x8] sm:$0x77]
    %v74 = vld [vmem:[%s6] sm:$0x7]
    %76 = vset.pattern.permute.xlu0 0
    %77 = vperm.xlu0 %76, %v74
    %v78 = vpop.permute.xlu0 %77
    %82 = vst [vmem:[#allocation1] ss:$2 sm:$0xff] %v72
    %s83 = scalar_lea.vmem [#allocation1], 16
    %84 = vst [vmem:[%s83] ss:$2 sm:$0xff] %v73
    %v85 = vld.sshfl [vmem:[#allocation1] sm:$0xff pattern:$0x75316420]
    %v86 = vld.sshfl [vmem:[#allocation1 + $0x8] sm:$0xff pattern:$0x75316420]
    %v87 = vld.sshfl [vmem:[#allocation1 + $0x10] sm:$0xff pattern:$0x75316420]
    %v88 = vld.sshfl [vmem:[#allocation1 + $0x18] sm:$0xff pattern:$0x75316420]
    %vm89 = vcmask 23552
    %v91 = vsel %vm89, %v71, 0
    %vm93 = vcmask 1042432
    %v94 = vsel %vm93, %v85, 0
    %v96 = vsel %vm93, %v86, 0
    %v98 = vsel %vm93, %v87, 0
    %v100 = vsel %vm93, %v88, 0
    %102 = vmatpush.msra.mxu0 0.0
    %103 = vmatpush.msra.mxu0 0.0
    %104 = vmatpush.msra.mxu0 0.0
    %105 = vmatpush.msra.mxu0 0.0
    %106 = vmatpush.msra.mxu0 0.0
    %107 = vmatpush.msra.mxu0 0.0
    %108 = vmatpush.msra.mxu0 0.0
    %109 = vmatpush.msra.mxu0 0.0
    %110 = vmatpush.msra.mxu0 0.0
    %111 = vmatpush.msra.mxu0 0.0
    %112 = vmatpush.msra.mxu0 0.0
    %113 = vmatpush.msra.mxu0 0.0
    %114 = vmatpush.msra.mxu0 0.0
    %115 = vmatpush.msra.mxu0 0.0
    %116 = vmatpush.msra.mxu0 0.0
    %117 = vmatpush.msra.mxu0 %v94
    %118 = vmatmul.f32.gmra.mxu0 %v91
    %v119 = vpop.f32.mrf.mxu0
    %v120 = vadd.f32 %v78, %v119
    %121 = vdwg.mxu0
    %122 = vmatpush.msra.mxu0 0.0
    %123 = vmatpush.msra.mxu0 0.0
    %124 = vmatpush.msra.mxu0 0.0
    %125 = vmatpush.msra.mxu0 0.0
    %126 = vmatpush.msra.mxu0 0.0
    %127 = vmatpush.msra.mxu0 0.0
    %128 = vmatpush.msra.mxu0 0.0
    %129 = vmatpush.msra.mxu0 0.0
    %130 = vmatpush.msra.mxu0 0.0
    %131 = vmatpush.msra.mxu0 0.0
    %132 = vmatpush.msra.mxu0 0.0
    %133 = vmatpush.msra.mxu0 0.0
    %134 = vmatpush.msra.mxu0 0.0
    %135 = vmatpush.msra.mxu0 0.0
    %136 = vmatpush.msra.mxu0 0.0
    %137 = vmatpush.msra.mxu0 %v96
    %138 = vmatmul.f32.gmra.mxu0 %v91
    %v139 = vpop.f32.mrf.mxu0
    %v140 = vadd.f32 %v78, %v139
    %141 = vdwg.mxu0
    %142 = vmatpush.msra.mxu0 0.0
    %143 = vmatpush.msra.mxu0 0.0
    %144 = vmatpush.msra.mxu0 0.0
    %145 = vmatpush.msra.mxu0 0.0
    %146 = vmatpush.msra.mxu0 0.0
    %147 = vmatpush.msra.mxu0 0.0
    %148 = vmatpush.msra.mxu0 0.0
    %149 = vmatpush.msra.mxu0 0.0
    %150 = vmatpush.msra.mxu0 0.0
    %151 = vmatpush.msra.mxu0 0.0
    %152 = vmatpush.msra.mxu0 0.0
    %153 = vmatpush.msra.mxu0 0.0
    %154 = vmatpush.msra.mxu0 0.0
    %155 = vmatpush.msra.mxu0 0.0
    %156 = vmatpush.msra.mxu0 0.0
    %157 = vmatpush.msra.mxu0 %v98
    %158 = vmatmul.f32.gmra.mxu0 %v91
    %v159 = vpop.f32.mrf.mxu0
    %v160 = vadd.f32 %v78, %v159
    %161 = vdwg.mxu0
    %162 = vmatpush.msra.mxu0 0.0
    %163 = vmatpush.msra.mxu0 0.0
    %164 = vmatpush.msra.mxu0 0.0
    %165 = vmatpush.msra.mxu0 0.0
    %166 = vmatpush.msra.mxu0 0.0
    %167 = vmatpush.msra.mxu0 0.0
    %168 = vmatpush.msra.mxu0 0.0
    %169 = vmatpush.msra.mxu0 0.0
    %170 = vmatpush.msra.mxu0 0.0
    %171 = vmatpush.msra.mxu0 0.0
    %172 = vmatpush.msra.mxu0 0.0
    %173 = vmatpush.msra.mxu0 0.0
    %174 = vmatpush.msra.mxu0 0.0
    %175 = vmatpush.msra.mxu0 0.0
    %176 = vmatpush.msra.mxu0 0.0
    %177 = vmatpush.msra.mxu0 %v100
    %178 = vmatmul.f32.gmra.mxu0 %v91
    %v179 = vpop.f32.mrf.mxu0
    %v180 = vadd.f32 %v78, %v179
    %181 = vdwg.mxu0
    %v182 = vld [vmem:[%s1] sm:$0x3]
    %v183 = vld [vmem:[%s3] sm:$0xff]
    %v184 = vld [vmem:[%s4] sm:$0x3]
    %v186 = vperm.slane %v184, 0
    %v187 = vperm.slane %v184, 1
    %191 = vst [vmem:[#allocation1] ss:$2 sm:$0xff] %v183
    %v192 = vld.sshfl [vmem:[#allocation1] sm:$0xff pattern:$0x75316420]
    %v193 = vld.sshfl [vmem:[#allocation1 + $0x8] sm:$0xff pattern:$0x75316420]
    %vm194 = vcmask 31744
    %v196 = vsel %vm194, %v182, 0
    %vm198 = vcmask 1043456
    %v199 = vsel %vm198, %v192, 0
    %v201 = vsel %vm198, %v193, 0
    %203 = vmatpush.msra.mxu0 0.0
    %204 = vmatpush.msra.mxu0 0.0
    %205 = vmatpush.msra.mxu0 0.0
    %206 = vmatpush.msra.mxu0 0.0
    %207 = vmatpush.msra.mxu0 0.0
    %208 = vmatpush.msra.mxu0 0.0
    %209 = vmatpush.msra.mxu0 0.0
    %210 = vmatpush.msra.mxu0 0.0
    %211 = vmatpush.msra.mxu0 0.0
    %212 = vmatpush.msra.mxu0 0.0
    %213 = vmatpush.msra.mxu0 0.0
    %214 = vmatpush.msra.mxu0 0.0
    %215 = vmatpush.msra.mxu0 0.0
    %216 = vmatpush.msra.mxu0 0.0
    %217 = vmatpush.msra.mxu0 0.0
    %218 = vmatpush.msra.mxu0 %v199
    %219 = vmatmul.f32.gmra.mxu0 %v196
    %v220 = vpop.f32.mrf.mxu0
    %v221 = vadd.f32 %v186, %v220
    %222 = vdwg.mxu0
    %223 = vmatpush.msra.mxu0 0.0
    %224 = vmatpush.msra.mxu0 0.0
    %225 = vmatpush.msra.mxu0 0.0
    %226 = vmatpush.msra.mxu0 0.0
    %227 = vmatpush.msra.mxu0 0.0
    %228 = vmatpush.msra.mxu0 0.0
    %229 = vmatpush.msra.mxu0 0.0
    %230 = vmatpush.msra.mxu0 0.0
    %231 = vmatpush.msra.mxu0 0.0
    %232 = vmatpush.msra.mxu0 0.0
    %233 = vmatpush.msra.mxu0 0.0
    %234 = vmatpush.msra.mxu0 0.0
    %235 = vmatpush.msra.mxu0 0.0
    %236 = vmatpush.msra.mxu0 0.0
    %237 = vmatpush.msra.mxu0 0.0
    %238 = vmatpush.msra.mxu0 %v201
    %239 = vmatmul.f32.gmra.mxu0 %v196
    %v240 = vpop.f32.mrf.mxu0
    %v241 = vadd.f32 %v187, %v240
    %242 = vdwg.mxu0
    %v243 = vsel %vm93, %v120, 0.0
    %v244 = vsel %vm93, %v140, 0.0
    %v245 = vadd.f32 %v243, %v244
    %v246 = vsel %vm93, %v160, 0.0
    %v247 = vadd.f32 %v245, %v246
    %v248 = vsel %vm93, %v180, 0.0
    %v249 = vadd.f32 %v247, %v248
    %250 = vadd.xlane.f32.xlu0 %v249
    %v251 = vpop.xlane.xlu0 %250
    %v252 = vmul.f32 %v251, 0.001953125
    %v253 = vsub.f32 %v120, %v252
    %v254 = vsub.f32 %v140, %v252
    %v255 = vsub.f32 %v160, %v252
    %v256 = vsub.f32 %v180, %v252
    %v257 = vmul.f32 %v253, %v253
    %v258 = vmul.f32 %v254, %v254
    %v259 = vmul.f32 %v255, %v255
    %v260 = vmul.f32 %v256, %v256
    %v261 = vsel %vm93, %v257, 0.0
    %v262 = vsel %vm93, %v258, 0.0
    %v263 = vadd.f32 %v261, %v262
    %v264 = vsel %vm93, %v259, 0.0
    %v265 = vadd.f32 %v263, %v264
    %v266 = vsel %vm93, %v260, 0.0
    %v267 = vadd.f32 %v265, %v266
    %268 = vadd.xlane.f32.xlu0 %v267
    %v269 = vpop.xlane.xlu0 %268
    %v270 = vmul.f32 %v269, 0.001953125
    %v271 = vadd.f32 %v270, 1e-05
    %v272 = vrsqrt.pop %v271
    %v273 = vmul.f32 %v272, %v271
    %v274 = vmul.f32 %v273, %v272
    %v275 = vmul.f32 0.5, %v274
    %v276 = vsub.f32 1.5, %v275
    %v277 = vmul.f32 %v272, %v276
    %vm278 = vweird.f32 %v271
    %vm279 = vweird.f32 %v272
    %vm280 = vmor %vm278, %vm279
    %v281 = vsel %vm280, %v272, %v277
    %v282 = vmul.f32 %v253, %v281
    %v283 = vmul.f32 %v254, %v281
    %v284 = vmul.f32 %v255, %v281
    %v285 = vmul.f32 %v256, %v281
    %vm286 = vcmask 1041408
    %v287 = vsel %vm286, %v221, 0.0
    %v288 = vsel %vm286, %v241, 0.0
    %v289 = vadd.f32 %v287, %v288
    %290 = vadd.xlane.f32.xlu0 %v289
    %v291 = vpop.xlane.xlu0 %290
    %v292 = vsel %vm286, %v291, 0.0
    %v293 = vrot.slane %v292, 4
    %v294 = vadd.f32 %v292, %v293
    %v295 = vrot.slane %v294, 2
    %v296 = vadd.f32 %v294, %v295
    %v297 = vrot.slane %v296, 1
    %v298 = vadd.f32 %v296, %v297
    %v299 = vmul.f32 %v298, 0.001953125
    %v300 = vsub.f32 %v221, %v299
    %v301 = vsub.f32 %v241, %v299
    %v302 = vmul.f32 %v300, %v300
    %v303 = vmul.f32 %v301, %v301
    %v304 = vsel %vm286, %v302, 0.0
    %v305 = vsel %vm286, %v303, 0.0
    %v306 = vadd.f32 %v304, %v305
    %307 = vadd.xlane.f32.xlu0 %v306
    %v308 = vpop.xlane.xlu0 %307
    %v309 = vsel %vm286, %v308, 0.0
    %v310 = vrot.slane %v309, 4
    %v311 = vadd.f32 %v309, %v310
    %v312 = vrot.slane %v311, 2
    %v313 = vadd.f32 %v311, %v312
    %v314 = vrot.slane %v313, 1
    %v315 = vadd.f32 %v313, %v314
    %v316 = vmul.f32 %v315, 0.001953125
    %v317 = vadd.f32 %v316, 1e-05
    %v318 = vrsqrt.pop %v317
    %v319 = vmul.f32 %v318, %v317
    %v320 = vmul.f32 %v319, %v318
    %v321 = vmul.f32 0.5, %v320
    %v322 = vsub.f32 1.5, %v321
    %v323 = vmul.f32 %v318, %v322
    %vm324 = vweird.f32 %v317
    %vm325 = vweird.f32 %v318
    %vm326 = vmor %vm324, %vm325
    %v327 = vsel %vm326, %v318, %v323
    %v328 = vmul.f32 %v300, %v327
    %v329 = vmul.f32 %v301, %v327
    %v330 = vld [vmem:[%s12] sm:$0xff]
    %v331 = vld [vmem:[%s12 + $0x8] sm:$0xff]
    %v332 = vld [vmem:[%s12 + $0x10] sm:$0xff]
    %v333 = vld [vmem:[%s12 + $0x18] sm:$0xff]
    %v334 = vld [vmem:[%s12 + $0x20] sm:$0xff]
    %v335 = vld [vmem:[%s12 + $0x28] sm:$0xff]
    %v336 = vld [vmem:[%s12 + $0x30] sm:$0xff]
    %v337 = vld [vmem:[%s12 + $0x38] sm:$0xff]
    %v338 = vld [vmem:[%s12 + $0x40] sm:$0xff]
    %v339 = vld [vmem:[%s12 + $0x48] sm:$0xff]
    %v340 = vld [vmem:[%s12 + $0x50] sm:$0xff]
    %v341 = vld [vmem:[%s12 + $0x58] sm:$0xff]
    %v342 = vld [vmem:[%s12 + $0x60] sm:$0xff]
    %v343 = vld [vmem:[%s12 + $0x68] sm:$0xff]
    %v344 = vld [vmem:[%s12 + $0x70] sm:$0xff]
    %v345 = vld [vmem:[%s12 + $0x78] sm:$0xff]
    %v346 = vld [vmem:[%s12 + $0x80] sm:$0xff]
    %v347 = vld [vmem:[%s12 + $0x88] sm:$0xff]
    %v348 = vld [vmem:[%s12 + $0x90] sm:$0xff]
    %v349 = vld [vmem:[%s12 + $0x98] sm:$0xff]
    %v350 = vld [vmem:[%s12 + $0xa0] sm:$0xff]
    %v351 = vld [vmem:[%s12 + $0xa8] sm:$0xff]
    %v352 = vld [vmem:[%s12 + $0xb0] sm:$0xff]
    %v353 = vld [vmem:[%s12 + $0xb8] sm:$0xff]
    %v354 = vld [vmem:[%s12 + $0xc0] sm:$0xff]
    %v355 = vld [vmem:[%s12 + $0xc8] sm:$0xff]
    %v356 = vld [vmem:[%s12 + $0xd0] sm:$0xff]
    %v357 = vld [vmem:[%s12 + $0xd8] sm:$0xff]
    %v358 = vld [vmem:[%s12 + $0xe0] sm:$0xff]
    %v359 = vld [vmem:[%s12 + $0xe8] sm:$0xff]
    %v360 = vld [vmem:[%s12 + $0xf0] sm:$0xff]
    %v361 = vld [vmem:[%s12 + $0xf8] sm:$0xff]
    %362 = vmatpush.msra.mxu0 %v345
    %363 = vmatpush.msra.mxu0 %v344
    %364 = vmatpush.msra.mxu0 %v343
    %365 = vmatpush.msra.mxu0 %v342
    %366 = vmatpush.msra.mxu0 %v341
    %367 = vmatpush.msra.mxu0 %v340
    %368 = vmatpush.msra.mxu0 %v339
    %369 = vmatpush.msra.mxu0 %v338
    %370 = vmatpush.msra.mxu0 %v337
    %371 = vmatpush.msra.mxu0 %v336
    %372 = vmatpush.msra.mxu0 %v335
    %373 = vmatpush.msra.mxu0 %v334
    %374 = vmatpush.msra.mxu0 %v333
    %375 = vmatpush.msra.mxu0 %v332
    %376 = vmatpush.msra.mxu0 %v331
    %377 = vmatpush.msra.mxu0 %v330
    %378 = vmatmul.f32.gmra.mxu0 %v282
    %v379 = vpop.f32.mrf.mxu0
    %v380 = vadd.f32 0.0, %v379
    %381 = vdwg.mxu0
    %382 = vmatpush.msra.mxu0 %v361
    %383 = vmatpush.msra.mxu0 %v360
    %384 = vmatpush.msra.mxu0 %v359
    %385 = vmatpush.msra.mxu0 %v358
    %386 = vmatpush.msra.mxu0 %v357
    %387 = vmatpush.msra.mxu0 %v356
    %388 = vmatpush.msra.mxu0 %v355
    %389 = vmatpush.msra.mxu0 %v354
    %390 = vmatpush.msra.mxu0 %v353
    %391 = vmatpush.msra.mxu0 %v352
    %392 = vmatpush.msra.mxu0 %v351
    %393 = vmatpush.msra.mxu0 %v350
    %394 = vmatpush.msra.mxu0 %v349
    %395 = vmatpush.msra.mxu0 %v348
    %396 = vmatpush.msra.mxu0 %v347
    %397 = vmatpush.msra.mxu0 %v346
    %398 = vmatmul.f32.gmra.mxu0 %v283
    %v399 = vpop.f32.mrf.mxu0
    %v400 = vadd.f32 %v380, %v399
    %401 = vdwg.mxu0
    %403 = vrot.lane.b32.xlu0 %v400, 9
    %v404 = vpop.permute.xlu0 %403
    %vm406 = vcmask 591944
    %407 = vst.msk [vmem:[#allocation2] sm:$0x7] %vm406, %v404
    %408 = vmatpush.msra.mxu0 %v345
    %409 = vmatpush.msra.mxu0 %v344
    %410 = vmatpush.msra.mxu0 %v343
    %411 = vmatpush.msra.mxu0 %v342
    %412 = vmatpush.msra.mxu0 %v341
    %413 = vmatpush.msra.mxu0 %v340
    %414 = vmatpush.msra.mxu0 %v339
    %415 = vmatpush.msra.mxu0 %v338
    %416 = vmatpush.msra.mxu0 %v337
    %417 = vmatpush.msra.mxu0 %v336
    %418 = vmatpush.msra.mxu0 %v335
    %419 = vmatpush.msra.mxu0 %v334
    %420 = vmatpush.msra.mxu0 %v333
    %421 = vmatpush.msra.mxu0 %v332
    %422 = vmatpush.msra.mxu0 %v331
    %423 = vmatpush.msra.mxu0 %v330
    %424 = vmatmul.f32.gmra.mxu0 %v328
    %v425 = vpop.f32.mrf.mxu0
    %v426 = vadd.f32 0.0, %v425
    %427 = vdwg.mxu0
    %428 = vmatpush.msra.mxu0 %v361
    %429 = vmatpush.msra.mxu0 %v360
    %430 = vmatpush.msra.mxu0 %v359
    %431 = vmatpush.msra.mxu0 %v358
    %432 = vmatpush.msra.mxu0 %v357
    %433 = vmatpush.msra.mxu0 %v356
    %434 = vmatpush.msra.mxu0 %v355
    %435 = vmatpush.msra.mxu0 %v354
    %436 = vmatpush.msra.mxu0 %v353
    %437 = vmatpush.msra.mxu0 %v352
    %438 = vmatpush.msra.mxu0 %v351
    %439 = vmatpush.msra.mxu0 %v350
    %440 = vmatpush.msra.mxu0 %v349
    %441 = vmatpush.msra.mxu0 %v348
    %442 = vmatpush.msra.mxu0 %v347
    %443 = vmatpush.msra.mxu0 %v346
    %444 = vmatmul.f32.gmra.mxu0 %v329
    %v445 = vpop.f32.mrf.mxu0
    %v446 = vadd.f32 %v426, %v445
    %447 = vdwg.mxu0
    %449 = vrot.lane.b32.xlu0 %v446, 9
    %v450 = vpop.permute.xlu0 %449
    %vm452 = vcmask 589896
    %453 = vst.msk [vmem:[#allocation2 + $0x3] sm:$0x1] %vm452, %v450
    %454 = vmatpush.msra.mxu0 %v345
    %455 = vmatpush.msra.mxu0 %v344
    %456 = vmatpush.msra.mxu0 %v343
    %457 = vmatpush.msra.mxu0 %v342
    %458 = vmatpush.msra.mxu0 %v341
    %459 = vmatpush.msra.mxu0 %v340
    %460 = vmatpush.msra.mxu0 %v339
    %461 = vmatpush.msra.mxu0 %v338
    %462 = vmatpush.msra.mxu0 %v337
    %463 = vmatpush.msra.mxu0 %v336
    %464 = vmatpush.msra.mxu0 %v335
    %465 = vmatpush.msra.mxu0 %v334
    %466 = vmatpush.msra.mxu0 %v333
    %467 = vmatpush.msra.mxu0 %v332
    %468 = vmatpush.msra.mxu0 %v331
    %469 = vmatpush.msra.mxu0 %v330
    %470 = vmatmul.f32.gmra.mxu0 %v284
    %v471 = vpop.f32.mrf.mxu0
    %v472 = vadd.f32 0.0, %v471
    %473 = vdwg.mxu0
    %474 = vmatpush.msra.mxu0 %v361
    %475 = vmatpush.msra.mxu0 %v360
    %476 = vmatpush.msra.mxu0 %v359
    %477 = vmatpush.msra.mxu0 %v358
    %478 = vmatpush.msra.mxu0 %v357
    %479 = vmatpush.msra.mxu0 %v356
    %480 = vmatpush.msra.mxu0 %v355
    %481 = vmatpush.msra.mxu0 %v354
    %482 = vmatpush.msra.mxu0 %v353
    %483 = vmatpush.msra.mxu0 %v352
    %484 = vmatpush.msra.mxu0 %v351
    %485 = vmatpush.msra.mxu0 %v350
    %486 = vmatpush.msra.mxu0 %v349
    %487 = vmatpush.msra.mxu0 %v348
    %488 = vmatpush.msra.mxu0 %v347
    %489 = vmatpush.msra.mxu0 %v346
    %490 = vmatmul.f32.gmra.mxu0 %v285
    %v491 = vpop.f32.mrf.mxu0
    %v492 = vadd.f32 %v472, %v491
    %493 = vdwg.mxu0
    %495 = vrot.lane.b32.xlu0 %v492, 73
    %v496 = vpop.permute.xlu0 %495
    %vm498 = vcmask 1043016
    %499 = vst.msk [vmem:[#allocation2] sm:$0x7] %vm498, %v496
    %vm500 = vcmask 67584
    %501 = vst.msk [vmem:[#allocation2 + $0x8] sm:$0x7] %vm500, %v496
    %v504 = vrot.slane %v328, 1
    %v505 = vrot.slane %v329, 1
    %508 = vmatpush.msra.mxu0 %v345
    %509 = vmatpush.msra.mxu0 %v344
    %510 = vmatpush.msra.mxu0 %v343
    %511 = vmatpush.msra.mxu0 %v342
    %512 = vmatpush.msra.mxu0 %v341
    %513 = vmatpush.msra.mxu0 %v340
    %514 = vmatpush.msra.mxu0 %v339
    %515 = vmatpush.msra.mxu0 %v338
    %516 = vmatpush.msra.mxu0 %v337
    %517 = vmatpush.msra.mxu0 %v336
    %518 = vmatpush.msra.mxu0 %v335
    %519 = vmatpush.msra.mxu0 %v334
    %520 = vmatpush.msra.mxu0 %v333
    %521 = vmatpush.msra.mxu0 %v332
    %522 = vmatpush.msra.mxu0 %v331
    %523 = vmatpush.msra.mxu0 %v330
    %524 = vmatmul.f32.gmra.mxu0 %v504
    %v525 = vpop.f32.mrf.mxu0
    %v526 = vadd.f32 0.0, %v525
    %527 = vdwg.mxu0
    %528 = vmatpush.msra.mxu0 %v361
    %529 = vmatpush.msra.mxu0 %v360
    %530 = vmatpush.msra.mxu0 %v359
    %531 = vmatpush.msra.mxu0 %v358
    %532 = vmatpush.msra.mxu0 %v357
    %533 = vmatpush.msra.mxu0 %v356
    %534 = vmatpush.msra.mxu0 %v355
    %535 = vmatpush.msra.mxu0 %v354
    %536 = vmatpush.msra.mxu0 %v353
    %537 = vmatpush.msra.mxu0 %v352
    %538 = vmatpush.msra.mxu0 %v351
    %539 = vmatpush.msra.mxu0 %v350
    %540 = vmatpush.msra.mxu0 %v349
    %541 = vmatpush.msra.mxu0 %v348
    %542 = vmatpush.msra.mxu0 %v347
    %543 = vmatpush.msra.mxu0 %v346
    %544 = vmatmul.f32.gmra.mxu0 %v505
    %v545 = vpop.f32.mrf.mxu0
    %v546 = vadd.f32 %v526, %v545
    %547 = vdwg.mxu0
    %549 = vrot.lane.b32.xlu0 %v546, 73
    %v550 = vpop.permute.xlu0 %549
    %vm552 = vcmask 1040968
    %553 = vst.msk [vmem:[#allocation2 + $0x3] sm:$0x1] %vm552, %v550
    %vm554 = vcmask 65536
    %555 = vst.msk [vmem:[#allocation2 + $0xb] sm:$0x1] %vm554, %v550
    %v556 = vld [vmem:[%s14] sm:$0xff]
    %v557 = vld [vmem:[%s14 + $0x8] sm:$0x1]
    %v558 = vld [vmem:[#allocation2] sm:$0xf]
    %v559 = vperm.slane %v556, 0
    %v560 = vmul.f32 %v558, %v559
    %561 = vst [vmem:[#allocation3] sm:$0xf] %v560
    %v562 = vld [vmem:[#allocation2] sm:$0xf]
    %v563 = vld [vmem:[#allocation2 + $0x8] sm:$0xf]
    %v564 = vperm.slane %v556, 1
    %566 = vrot.lane.b32.xlu0 %v564, 1
    %v567 = vpop.permute.xlu0 %566
    %v569 = vmul.f32 %v562, %v567
    %v570 = vmul.f32 %v563, %v567
    %573 = vrot.lane.b32.xlu0 %v569, 127
    %v574 = vpop.permute.xlu0 %573
    %575 = vrot.lane.b32.xlu0 %v570, 127
    %v576 = vpop.permute.xlu0 %575
    %vm577 = vcmask 1039360
    %v578 = vsel %vm577, %v574, %v576
    %580 = vst [vmem:[#allocation3 + $0x4] sm:$0xf] %v578
    %v581 = vld [vmem:[#allocation2] sm:$0xf]
    %v582 = vld [vmem:[#allocation2 + $0x8] sm:$0xf]
    %v583 = vperm.slane %v556, 2
    %585 = vrot.lane.b32.xlu0 %v583, 2
    %v586 = vpop.permute.xlu0 %585
    %v588 = vmul.f32 %v581, %v586
    %v589 = vmul.f32 %v582, %v586
    %592 = vrot.lane.b32.xlu0 %v588, 126
    %v593 = vpop.permute.xlu0 %592
    %594 = vrot.lane.b32.xlu0 %v589, 126
    %v595 = vpop.permute.xlu0 %594
    %vm596 = vcmask 1031168
    %v597 = vsel %vm596, %v593, %v595
    %599 = vst [vmem:[#allocation3 + $0x8] sm:$0xf] %v597
    %v600 = vld [vmem:[#allocation2] sm:$0xf]
    %v601 = vld [vmem:[#allocation2 + $0x8] sm:$0xf]
    %v602 = vperm.slane %v556, 3
    %604 = vrot.lane.b32.xlu0 %v602, 8
    %v605 = vpop.permute.xlu0 %604
    %v607 = vmul.f32 %v600, %v605
    %v608 = vmul.f32 %v601, %v605
    %611 = vrot.lane.b32.xlu0 %v607, 120
    %v612 = vpop.permute.xlu0 %611
    %613 = vrot.lane.b32.xlu0 %v608, 120
    %v614 = vpop.permute.xlu0 %613
    %vm615 = vcmask 982016
    %v616 = vsel %vm615, %v612, %v614
    %618 = vst [vmem:[#allocation3 + $0xc] sm:$0xf] %v616
    %v619 = vld [vmem:[#allocation2] sm:$0xf]
    %v620 = vld [vmem:[#allocation2 + $0x8] sm:$0xf]
    %v621 = vperm.slane %v556, 4
    %623 = vrot.lane.b32.xlu0 %v621, 9
    %v624 = vpop.permute.xlu0 %623
    %v626 = vmul.f32 %v619, %v624
    %v627 = vmul.f32 %v620, %v624
    %630 = vrot.lane.b32.xlu0 %v626, 119
    %v631 = vpop.permute.xlu0 %630
    %632 = vrot.lane.b32.xlu0 %v627, 119
    %v633 = vpop.permute.xlu0 %632
    %vm634 = vcmask 973824
    %v635 = vsel %vm634, %v631, %v633
    %637 = vst [vmem:[#allocation3 + $0x10] sm:$0xf] %v635
    %v638 = vld [vmem:[#allocation2] sm:$0xf]
    %v639 = vld [vmem:[#allocation2 + $0x8] sm:$0xf]
    %v640 = vperm.slane %v556, 5
    %642 = vrot.lane.b32.xlu0 %v640, 10
    %v643 = vpop.permute.xlu0 %642
    %v645 = vmul.f32 %v638, %v643
    %v646 = vmul.f32 %v639, %v643
    %649 = vrot.lane.b32.xlu0 %v645, 118
    %v650 = vpop.permute.xlu0 %649
    %651 = vrot.lane.b32.xlu0 %v646, 118
    %v652 = vpop.permute.xlu0 %651
    %vm653 = vcmask 965632
    %v654 = vsel %vm653, %v650, %v652
    %656 = vst [vmem:[#allocation3 + $0x14] sm:$0xf] %v654
    %v657 = vld [vmem:[#allocation2] sm:$0xf]
    %v658 = vld [vmem:[#allocation2 + $0x8] sm:$0xf]
    %v659 = vperm.slane %v556, 6
    %661 = vrot.lane.b32.xlu0 %v659, 16
    %v662 = vpop.permute.xlu0 %661
    %v664 = vmul.f32 %v657, %v662
    %v665 = vmul.f32 %v658, %v662
    %668 = vrot.lane.b32.xlu0 %v664, 112
    %v669 = vpop.permute.xlu0 %668
    %670 = vrot.lane.b32.xlu0 %v665, 112
    %v671 = vpop.permute.xlu0 %670
    %vm672 = vcmask 916480
    %v673 = vsel %vm672, %v669, %v671
    %675 = vst [vmem:[#allocation3 + $0x18] sm:$0xf] %v673
    %v676 = vld [vmem:[#allocation2] sm:$0xf]
    %v677 = vld [vmem:[#allocation2 + $0x8] sm:$0xf]
    %v678 = vperm.slane %v556, 7
    %680 = vrot.lane.b32.xlu0 %v678, 17
    %v681 = vpop.permute.xlu0 %680
    %v683 = vmul.f32 %v676, %v681
    %v684 = vmul.f32 %v677, %v681
    %687 = vrot.lane.b32.xlu0 %v683, 111
    %v688 = vpop.permute.xlu0 %687
    %689 = vrot.lane.b32.xlu0 %v684, 111
    %v690 = vpop.permute.xlu0 %689
    %vm691 = vcmask 908288
    %v692 = vsel %vm691, %v688, %v690
    %694 = vst [vmem:[#allocation3 + $0x1c] sm:$0xf] %v692
    %v695 = vld [vmem:[#allocation2] sm:$0xf]
    %v696 = vld [vmem:[#allocation2 + $0x8] sm:$0xf]
    %v697 = vperm.slane %v557, 0
    %699 = vrot.lane.b32.xlu0 %v697, 18
    %v700 = vpop.permute.xlu0 %699
    %v702 = vmul.f32 %v695, %v700
    %v703 = vmul.f32 %v696, %v700
    %706 = vrot.lane.b32.xlu0 %v702, 110
    %v707 = vpop.permute.xlu0 %706
    %708 = vrot.lane.b32.xlu0 %v703, 110
    %v709 = vpop.permute.xlu0 %708
    %vm710 = vcmask 900096
    %v711 = vsel %vm710, %v707, %v709
    %713 = vst [vmem:[#allocation3 + $0x20] sm:$0xf] %v711
    %v714 = vld [vmem:[%s7] sm:$0xff]
    %v715 = vld [vmem:[#allocation3] sm:$0xff]
    %v716 = vld [vmem:[#allocation3 + $0x8] sm:$0xff]
    %v717 = vld [vmem:[#allocation3 + $0x10] sm:$0xff]
    %v718 = vld [vmem:[#allocation3 + $0x18] sm:$0xff]
    %v719 = vld [vmem:[#allocation3 + $0x20] sm:$0xf]
    %vm720 = vcmask 293888
    %v722 = vsel %vm720, %v714, 0
    %v725 = vsel %vm198, %v719, 0
    %727 = vmatpush.msra.mxu0 0.0
    %728 = vmatpush.msra.mxu0 0.0
    %729 = vmatpush.msra.mxu0 0.0
    %730 = vmatpush.msra.mxu0 0.0
    %731 = vmatpush.msra.mxu0 0.0
    %732 = vmatpush.msra.mxu0 0.0
    %733 = vmatpush.msra.mxu0 0.0
    %734 = vmatpush.msra.mxu0 0.0
    %735 = vmatpush.msra.mxu0 0.0
    %736 = vmatpush.msra.mxu0 0.0
    %737 = vmatpush.msra.mxu0 0.0
    %738 = vmatpush.msra.mxu0 %v725
    %739 = vmatpush.msra.mxu0 %v718
    %740 = vmatpush.msra.mxu0 %v717
    %741 = vmatpush.msra.mxu0 %v716
    %742 = vmatpush.msra.mxu0 %v715
    %743 = vmatmul.f32.gmra.mxu0 %v722
    %v744 = vpop.f32.mrf.mxu0
    %v745 = vadd.f32 0.0, %v744
    %746 = vdwg.mxu0
    %747 = vadd.xlane.f32.xlu0 %v745
    %v748 = vpop.xlane.xlu0 %747
    %v749 = vmul.f32 %v748, 0.0078125
    %v750 = vsub.f32 %v745, %v749
    %v751 = vmul.f32 %v750, %v750
    %752 = vadd.xlane.f32.xlu0 %v751
    %v753 = vpop.xlane.xlu0 %752
    %v754 = vmul.f32 %v753, 0.0078125
    %v755 = vadd.f32 %v754, 1e-05
    %v756 = vrsqrt.pop %v755
    %v757 = vmul.f32 %v756, %v755
    %v758 = vmul.f32 %v757, %v756
    %v759 = vmul.f32 0.5, %v758
    %v760 = vsub.f32 1.5, %v759
    %v761 = vmul.f32 %v756, %v760
    %vm762 = vweird.f32 %v755
    %vm763 = vweird.f32 %v756
    %vm764 = vmor %vm762, %vm763
    %v765 = vsel %vm764, %v756, %v761
    %v766 = vmul.f32 %v750, %v765
    %vm767 = vcmp.ge.f32.partialorder %v766, 0.0
    %v768 = vmul.f32 %v766, 0.2
    %v769 = vsel %vm767, %v766, %v768
    %v770 = vld [vmem:[%s13] sm:$0xff]
    %v771 = vld [vmem:[%s13 + $0x8] sm:$0xff]
    %v772 = vld [vmem:[%s13 + $0x10] sm:$0xff]
    %v773 = vld [vmem:[%s13 + $0x18] sm:$0xff]
    %v774 = vld [vmem:[%s13 + $0x20] sm:$0xff]
    %v775 = vld [vmem:[%s13 + $0x28] sm:$0xff]
    %v776 = vld [vmem:[%s13 + $0x30] sm:$0xff]
    %v777 = vld [vmem:[%s13 + $0x38] sm:$0xff]
    %vm778 = vcmask 523264
    %v780 = vsel %vm778, %v769, 0
    %782 = vmatpush.msra.mxu0 0.0
    %783 = vmatpush.msra.mxu0 0.0
    %784 = vmatpush.msra.mxu0 0.0
    %785 = vmatpush.msra.mxu0 0.0
    %786 = vmatpush.msra.mxu0 0.0
    %787 = vmatpush.msra.mxu0 0.0
    %788 = vmatpush.msra.mxu0 0.0
    %789 = vmatpush.msra.mxu0 0.0
    %790 = vmatpush.msra.mxu0 %v777
    %791 = vmatpush.msra.mxu0 %v776
    %792 = vmatpush.msra.mxu0 %v775
    %793 = vmatpush.msra.mxu0 %v774
    %794 = vmatpush.msra.mxu0 %v773
    %795 = vmatpush.msra.mxu0 %v772
    %796 = vmatpush.msra.mxu0 %v771
    %797 = vmatpush.msra.mxu0 %v770
    %798 = vmatmul.f32.gmra.mxu0 %v780
    %v799 = vpop.f32.mrf.mxu0
    %v800 = vadd.f32 0.0, %v799
    %801 = vdwg.mxu0
    %803 = vrot.lane.b32.xlu0 %v800, 9
    %v804 = vpop.permute.xlu0 %803
    %vm806 = vcmask 203848
    %807 = vst.msk [vmem:[#allocation2] sm:$0xff] %vm806, %v804
    %808 = vrot.lane.b32.xlu0 %v769, 64
    %v809 = vpop.permute.xlu0 %808
    %v810 = vsel %vm778, %v809, 0
    %812 = vmatpush.msra.mxu0 0.0
    %813 = vmatpush.msra.mxu0 0.0
    %814 = vmatpush.msra.mxu0 0.0
    %815 = vmatpush.msra.mxu0 0.0
    %816 = vmatpush.msra.mxu0 0.0
    %817 = vmatpush.msra.mxu0 0.0
    %818 = vmatpush.msra.mxu0 0.0
    %819 = vmatpush.msra.mxu0 0.0
    %820 = vmatpush.msra.mxu0 %v777
    %821 = vmatpush.msra.mxu0 %v776
    %822 = vmatpush.msra.mxu0 %v775
    %823 = vmatpush.msra.mxu0 %v774
    %824 = vmatpush.msra.mxu0 %v773
    %825 = vmatpush.msra.mxu0 %v772
    %826 = vmatpush.msra.mxu0 %v771
    %827 = vmatpush.msra.mxu0 %v770
    %828 = vmatmul.f32.gmra.mxu0 %v810
    %v829 = vpop.f32.mrf.mxu0
    %v830 = vadd.f32 0.0, %v829
    %831 = vdwg.mxu0
    %833 = vrot.lane.b32.xlu0 %v830, 25
    %v834 = vpop.permute.xlu0 %833
    %vm836 = vcmask 335048
    %837 = vst.msk [vmem:[#allocation2] sm:$0xff] %vm836, %v834
    %v838 = vld [vmem:[%s15] sm:$0xff]
    %v839 = vld [vmem:[%s15 + $0x8] sm:$0x1]
    %v840 = vld [vmem:[#allocation2] sm:$0xff]
    %v841 = vperm.slane %v838, 0
    %843 = vrot.lane.b32.xlu0 %v841, 4
    %v844 = vpop.permute.xlu0 %843
    %v846 = vmul.f32 %v840, %v844
    %848 = vrot.lane.b32.xlu0 %v846, 124
    %v849 = vpop.permute.xlu0 %848
    %vm851 = vcmask 261120
    %852 = vst.msk [vmem:[#allocation3] sm:$0xff] %vm851, %v849
    %v853 = vld [vmem:[#allocation2] sm:$0xff]
    %v854 = vperm.slane %v838, 1
    %856 = vrot.lane.b32.xlu0 %v854, 5
    %v857 = vpop.permute.xlu0 %856
    %v859 = vmul.f32 %v853, %v857
    %861 = vrot.lane.b32.xlu0 %v859, 123
    %v862 = vpop.permute.xlu0 %861
    %864 = vst.msk [vmem:[#allocation3 + $0x8] sm:$0xff] %vm851, %v862
    %v865 = vld [vmem:[#allocation2] sm:$0xff]
    %v866 = vperm.slane %v838, 2
    %868 = vrot.lane.b32.xlu0 %v866, 6
    %v869 = vpop.permute.xlu0 %868
    %v871 = vmul.f32 %v865, %v869
    %873 = vrot.lane.b32.xlu0 %v871, 122
    %v874 = vpop.permute.xlu0 %873
    %876 = vst.msk [vmem:[#allocation3 + $0x10] sm:$0xff] %vm851, %v874
    %v877 = vld [vmem:[#allocation2] sm:$0xff]
    %v878 = vperm.slane %v838, 3
    %880 = vrot.lane.b32.xlu0 %v878, 8
    %v881 = vpop.permute.xlu0 %880
    %v883 = vmul.f32 %v877, %v881
    %885 = vrot.lane.b32.xlu0 %v883, 120
    %v886 = vpop.permute.xlu0 %885
    %888 = vst.msk [vmem:[#allocation3 + $0x18] sm:$0xff] %vm851, %v886
    %v889 = vld [vmem:[#allocation2] sm:$0xff]
    %v890 = vperm.slane %v838, 4
    %892 = vrot.lane.b32.xlu0 %v890, 9
    %v893 = vpop.permute.xlu0 %892
    %v895 = vmul.f32 %v889, %v893
    %897 = vrot.lane.b32.xlu0 %v895, 119
    %v898 = vpop.permute.xlu0 %897
    %900 = vst.msk [vmem:[#allocation3 + $0x20] sm:$0xff] %vm851, %v898
    %v901 = vld [vmem:[#allocation2] sm:$0xff]
    %v902 = vperm.slane %v838, 5
    %904 = vrot.lane.b32.xlu0 %v902, 10
    %v905 = vpop.permute.xlu0 %904
    %v907 = vmul.f32 %v901, %v905
    %909 = vrot.lane.b32.xlu0 %v907, 118
    %v910 = vpop.permute.xlu0 %909
    %912 = vst.msk [vmem:[#allocation3 + $0x28] sm:$0xff] %vm851, %v910
    %v913 = vld [vmem:[#allocation2] sm:$0xff]
    %v914 = vperm.slane %v838, 6
    %916 = vrot.lane.b32.xlu0 %v914, 12
    %v917 = vpop.permute.xlu0 %916
    %v919 = vmul.f32 %v913, %v917
    %921 = vrot.lane.b32.xlu0 %v919, 116
    %v922 = vpop.permute.xlu0 %921
    %924 = vst.msk [vmem:[#allocation3 + $0x30] sm:$0xff] %vm851, %v922
    %v925 = vld [vmem:[#allocation2] sm:$0xff]
    %v926 = vperm.slane %v838, 7
    %928 = vrot.lane.b32.xlu0 %v926, 13
    %v929 = vpop.permute.xlu0 %928
    %v931 = vmul.f32 %v925, %v929
    %933 = vrot.lane.b32.xlu0 %v931, 115
    %v934 = vpop.permute.xlu0 %933
    %936 = vst.msk [vmem:[#allocation3 + $0x38] sm:$0xff] %vm851, %v934
    %v937 = vld [vmem:[#allocation2] sm:$0xff]
    %v938 = vperm.slane %v839, 0
    %940 = vrot.lane.b32.xlu0 %v938, 14
    %v941 = vpop.permute.xlu0 %940
    %v943 = vmul.f32 %v937, %v941
    %945 = vrot.lane.b32.xlu0 %v943, 114
    %v946 = vpop.permute.xlu0 %945
    %948 = vst.msk [vmem:[#allocation3 + $0x40] sm:$0xff] %vm851, %v946
    %v949 = vld [vmem:[%s8] sm:$0xff]
    %v950 = vld [vmem:[%s8 + $0x8] sm:$0xff]
    %v951 = vld [vmem:[#allocation3] sm:$0xff]
    %v952 = vld [vmem:[#allocation3 + $0x8] sm:$0xff]
    %v953 = vld [vmem:[#allocation3 + $0x10] sm:$0xff]
    %v954 = vld [vmem:[#allocation3 + $0x18] sm:$0xff]
    %v955 = vld [vmem:[#allocation3 + $0x20] sm:$0xff]
    %v956 = vld [vmem:[#allocation3 + $0x28] sm:$0xff]
    %v957 = vld [vmem:[#allocation3 + $0x30] sm:$0xff]
    %v958 = vld [vmem:[#allocation3 + $0x38] sm:$0xff]
    %v959 = vld [vmem:[#allocation3 + $0x40] sm:$0xff]
    %vm960 = vcmask 588800
    %v962 = vsel %vm960, %v949, 0
    %v965 = vsel %vm960, %v950, 0
    %967 = vmatpush.msra.mxu0 0.0
    %968 = vmatpush.msra.mxu0 0.0
    %969 = vmatpush.msra.mxu0 0.0
    %970 = vmatpush.msra.mxu0 0.0
    %971 = vmatpush.msra.mxu0 0.0
    %972 = vmatpush.msra.mxu0 0.0
    %973 = vmatpush.msra.mxu0 0.0
    %974 = vmatpush.msra.mxu0 %v959
    %975 = vmatpush.msra.mxu0 %v958
    %976 = vmatpush.msra.mxu0 %v957
    %977 = vmatpush.msra.mxu0 %v956
    %978 = vmatpush.msra.mxu0 %v955
    %979 = vmatpush.msra.mxu0 %v954
    %980 = vmatpush.msra.mxu0 %v953
    %981 = vmatpush.msra.mxu0 %v952
    %982 = vmatpush.msra.mxu0 %v951
    %983 = vmatmul.f32.gmra.mxu0 %v962
    %v984 = vpop.f32.mrf.mxu0
    %v985 = vadd.f32 0.0, %v984
    %986 = vmatmul.f32.gmra.mxu0 %v965
    %v987 = vpop.f32.mrf.mxu0
    %v988 = vadd.f32 0.0, %v987
    %989 = vdwg.mxu0
    %v990 = vsel %vm851, %v985, 0.0
    %991 = vadd.xlane.f32.xlu0 %v990
    %v992 = vpop.xlane.xlu0 %991
    %v993 = vsel %vm851, %v988, 0.0
    %994 = vadd.xlane.f32.xlu0 %v993
    %v995 = vpop.xlane.xlu0 %994
    %v996 = vmul.f32 %v992, 0.03125
    %v997 = vmul.f32 %v995, 0.03125
    %v998 = vsub.f32 %v985, %v996
    %v999 = vsub.f32 %v988, %v997
    %v1000 = vmul.f32 %v998, %v998
    %v1001 = vmul.f32 %v999, %v999
    %v1002 = vsel %vm851, %v1000, 0.0
    %1003 = vadd.xlane.f32.xlu0 %v1002
    %v1004 = vpop.xlane.xlu0 %1003
    %v1005 = vsel %vm851, %v1001, 0.0
    %1006 = vadd.xlane.f32.xlu0 %v1005
    %v1007 = vpop.xlane.xlu0 %1006
    %v1008 = vmul.f32 %v1004, 0.03125
    %v1009 = vmul.f32 %v1007, 0.03125
    %v1010 = vadd.f32 %v1008, 1e-05
    %v1011 = vadd.f32 %v1009, 1e-05
    %v1012 = vrsqrt.pop %v1010
    %v1013 = vmul.f32 %v1012, %v1010
    %v1014 = vmul.f32 %v1013, %v1012
    %v1015 = vmul.f32 0.5, %v1014
    %v1016 = vsub.f32 1.5, %v1015
    %v1017 = vmul.f32 %v1012, %v1016
    %vm1018 = vweird.f32 %v1010
    %vm1019 = vweird.f32 %v1012
    %vm1020 = vmor %vm1018, %vm1019
    %v1021 = vsel %vm1020, %v1012, %v1017
    %v1022 = vrsqrt.pop %v1011
    %v1023 = vmul.f32 %v1022, %v1011
    %v1024 = vmul.f32 %v1023, %v1022
    %v1025 = vmul.f32 0.5, %v1024
    %v1026 = vsub.f32 1.5, %v1025
    %v1027 = vmul.f32 %v1022, %v1026
    %vm1028 = vweird.f32 %v1011
    %vm1029 = vweird.f32 %v1022
    %vm1030 = vmor %vm1028, %vm1029
    %v1031 = vsel %vm1030, %v1022, %v1027
    %v1032 = vmul.f32 %v998, %v1021
    %v1033 = vmul.f32 %v999, %v1031
    %vm1034 = vcmp.ge.f32.partialorder %v1032, 0.0
    %vm1035 = vcmp.ge.f32.partialorder %v1033, 0.0
    %v1036 = vmul.f32 %v1032, 0.2
    %v1037 = vmul.f32 %v1033, 0.2
    %v1038 = vsel %vm1034, %v1032, %v1036
    %v1039 = vsel %vm1035, %v1033, %v1037
    %1042 = vrot.lane.b32.xlu0 %v1038, 9
    %v1043 = vpop.permute.xlu0 %1042
    %1044 = vrot.lane.b32.xlu0 %v1039, 9
    %v1045 = vpop.permute.xlu0 %1044
    %vm1048 = vcmask 334920
    %1049 = vst.msk [vmem:[#allocation2] sm:$0xff] %vm1048, %v1043
    %1050 = vst.msk [vmem:[#allocation2 + $0x10] sm:$0xff] %vm1048, %v1045
    %v1051 = vld [vmem:[%s16] sm:$0xff]
    %v1052 = vld [vmem:[%s16 + $0x8] sm:$0x1]
    %v1053 = vld [vmem:[#allocation2] sm:$0xff]
    %v1054 = vld [vmem:[#allocation2 + $0x10] sm:$0xff]
    %v1055 = vperm.slane %v1051, 0
    %1057 = vrot.lane.b32.xlu0 %v1055, 4
    %v1058 = vpop.permute.xlu0 %1057
    %v1060 = vmul.f32 %v1053, %v1058
    %v1061 = vmul.f32 %v1054, %v1058
    %1064 = vrot.lane.b32.xlu0 %v1060, 124
    %v1065 = vpop.permute.xlu0 %1064
    %1066 = vrot.lane.b32.xlu0 %v1061, 124
    %v1067 = vpop.permute.xlu0 %1066
    %1070 = vst.msk [vmem:[#allocation3] sm:$0xff] %vm851, %v1065
    %1071 = vst.msk [vmem:[#allocation3 + $0x8] sm:$0xff] %vm851, %v1067
    %v1072 = vld [vmem:[#allocation2] sm:$0xff]
    %v1073 = vld [vmem:[#allocation2 + $0x10] sm:$0xff]
    %v1074 = vperm.slane %v1051, 1
    %1076 = vrot.lane.b32.xlu0 %v1074, 5
    %v1077 = vpop.permute.xlu0 %1076
    %v1079 = vmul.f32 %v1072, %v1077
    %v1080 = vmul.f32 %v1073, %v1077
    %1083 = vrot.lane.b32.xlu0 %v1079, 123
    %v1084 = vpop.permute.xlu0 %1083
    %1085 = vrot.lane.b32.xlu0 %v1080, 123
    %v1086 = vpop.permute.xlu0 %1085
    %1089 = vst.msk [vmem:[#allocation3 + $0x10] sm:$0xff] %vm851, %v1084
    %1090 = vst.msk [vmem:[#allocation3 + $0x18] sm:$0xff] %vm851, %v1086
    %v1091 = vld [vmem:[#allocation2] sm:$0xff]
    %v1092 = vld [vmem:[#allocation2 + $0x10] sm:$0xff]
    %v1093 = vperm.slane %v1051, 2
    %1095 = vrot.lane.b32.xlu0 %v1093, 6
    %v1096 = vpop.permute.xlu0 %1095
    %v1098 = vmul.f32 %v1091, %v1096
    %v1099 = vmul.f32 %v1092, %v1096
    %1102 = vrot.lane.b32.xlu0 %v1098, 122
    %v1103 = vpop.permute.xlu0 %1102
    %1104 = vrot.lane.b32.xlu0 %v1099, 122
    %v1105 = vpop.permute.xlu0 %1104
    %1108 = vst.msk [vmem:[#allocation3 + $0x20] sm:$0xff] %vm851, %v1103
    %1109 = vst.msk [vmem:[#allocation3 + $0x28] sm:$0xff] %vm851, %v1105
    %v1110 = vld [vmem:[#allocation2] sm:$0xff]
    %v1111 = vld [vmem:[#allocation2 + $0x10] sm:$0xff]
    %v1112 = vperm.slane %v1051, 3
    %1114 = vrot.lane.b32.xlu0 %v1112, 8
    %v1115 = vpop.permute.xlu0 %1114
    %v1117 = vmul.f32 %v1110, %v1115
    %v1118 = vmul.f32 %v1111, %v1115
    %1121 = vrot.lane.b32.xlu0 %v1117, 120
    %v1122 = vpop.permute.xlu0 %1121
    %1123 = vrot.lane.b32.xlu0 %v1118, 120
    %v1124 = vpop.permute.xlu0 %1123
    %1127 = vst.msk [vmem:[#allocation3 + $0x30] sm:$0xff] %vm851, %v1122
    %1128 = vst.msk [vmem:[#allocation3 + $0x38] sm:$0xff] %vm851, %v1124
    %v1129 = vld [vmem:[#allocation2] sm:$0xff]
    %v1130 = vld [vmem:[#allocation2 + $0x10] sm:$0xff]
    %v1131 = vperm.slane %v1051, 4
    %1133 = vrot.lane.b32.xlu0 %v1131, 9
    %v1134 = vpop.permute.xlu0 %1133
    %v1136 = vmul.f32 %v1129, %v1134
    %v1137 = vmul.f32 %v1130, %v1134
    %1140 = vrot.lane.b32.xlu0 %v1136, 119
    %v1141 = vpop.permute.xlu0 %1140
    %1142 = vrot.lane.b32.xlu0 %v1137, 119
    %v1143 = vpop.permute.xlu0 %1142
    %1146 = vst.msk [vmem:[#allocation3 + $0x40] sm:$0xff] %vm851, %v1141
    %1147 = vst.msk [vmem:[#allocation3 + $0x48] sm:$0xff] %vm851, %v1143
    %v1148 = vld [vmem:[#allocation2] sm:$0xff]
    %v1149 = vld [vmem:[#allocation2 + $0x10] sm:$0xff]
    %v1150 = vperm.slane %v1051, 5
    %1152 = vrot.lane.b32.xlu0 %v1150, 10
    %v1153 = vpop.permute.xlu0 %1152
    %v1155 = vmul.f32 %v1148, %v1153
    %v1156 = vmul.f32 %v1149, %v1153
    %1159 = vrot.lane.b32.xlu0 %v1155, 118
    %v1160 = vpop.permute.xlu0 %1159
    %1161 = vrot.lane.b32.xlu0 %v1156, 118
    %v1162 = vpop.permute.xlu0 %1161
    %1165 = vst.msk [vmem:[#allocation3 + $0x50] sm:$0xff] %vm851, %v1160
    %1166 = vst.msk [vmem:[#allocation3 + $0x58] sm:$0xff] %vm851, %v1162
    %v1167 = vld [vmem:[#allocation2] sm:$0xff]
    %v1168 = vld [vmem:[#allocation2 + $0x10] sm:$0xff]
    %v1169 = vperm.slane %v1051, 6
    %1171 = vrot.lane.b32.xlu0 %v1169, 12
    %v1172 = vpop.permute.xlu0 %1171
    %v1174 = vmul.f32 %v1167, %v1172
    %v1175 = vmul.f32 %v1168, %v1172
    %1178 = vrot.lane.b32.xlu0 %v1174, 116
    %v1179 = vpop.permute.xlu0 %1178
    %1180 = vrot.lane.b32.xlu0 %v1175, 116
    %v1181 = vpop.permute.xlu0 %1180
    %1184 = vst.msk [vmem:[#allocation3 + $0x60] sm:$0xff] %vm851, %v1179
    %1185 = vst.msk [vmem:[#allocation3 + $0x68] sm:$0xff] %vm851, %v1181
    %v1186 = vld [vmem:[#allocation2] sm:$0xff]
    %v1187 = vld [vmem:[#allocation2 + $0x10] sm:$0xff]
    %v1188 = vperm.slane %v1051, 7
    %1190 = vrot.lane.b32.xlu0 %v1188, 13
    %v1191 = vpop.permute.xlu0 %1190
    %v1193 = vmul.f32 %v1186, %v1191
    %v1194 = vmul.f32 %v1187, %v1191
    %1197 = vrot.lane.b32.xlu0 %v1193, 115
    %v1198 = vpop.permute.xlu0 %1197
    %1199 = vrot.lane.b32.xlu0 %v1194, 115
    %v1200 = vpop.permute.xlu0 %1199
    %1203 = vst.msk [vmem:[#allocation3 + $0x70] sm:$0xff] %vm851, %v1198
    %1204 = vst.msk [vmem:[#allocation3 + $0x78] sm:$0xff] %vm851, %v1200
    %v1205 = vld [vmem:[#allocation2] sm:$0xff]
    %v1206 = vld [vmem:[#allocation2 + $0x10] sm:$0xff]
    %v1207 = vperm.slane %v1052, 0
    %1209 = vrot.lane.b32.xlu0 %v1207, 14
    %v1210 = vpop.permute.xlu0 %1209
    %v1212 = vmul.f32 %v1205, %v1210
    %v1213 = vmul.f32 %v1206, %v1210
    %1216 = vrot.lane.b32.xlu0 %v1212, 114
    %v1217 = vpop.permute.xlu0 %1216
    %1218 = vrot.lane.b32.xlu0 %v1213, 114
    %v1219 = vpop.permute.xlu0 %1218
    %1222 = vst.msk [vmem:[#allocation3 + $0x80] sm:$0xff] %vm851, %v1217
    %1223 = vst.msk [vmem:[#allocation3 + $0x88] sm:$0xff] %vm851, %v1219
    %v1224 = vld [vmem:[%s9] sm:$0xff]
    %v1225 = vld [vmem:[%s9 + $0x8] sm:$0xff]
    %v1226 = vld [vmem:[%s9 + $0x10] sm:$0xff]
    %v1227 = vld [vmem:[%s9 + $0x18] sm:$0xff]
    %v1228 = vld [vmem:[#allocation3] sm:$0xff]
    %v1229 = vld [vmem:[#allocation3 + $0x8] sm:$0xff]
    %v1230 = vld [vmem:[#allocation3 + $0x10] sm:$0xff]
    %v1231 = vld [vmem:[#allocation3 + $0x18] sm:$0xff]
    %v1232 = vld [vmem:[#allocation3 + $0x20] sm:$0xff]
    %v1233 = vld [vmem:[#allocation3 + $0x28] sm:$0xff]
    %v1234 = vld [vmem:[#allocation3 + $0x30] sm:$0xff]
    %v1235 = vld [vmem:[#allocation3 + $0x38] sm:$0xff]
    %v1236 = vld [vmem:[#allocation3 + $0x40] sm:$0xff]
    %v1237 = vld [vmem:[#allocation3 + $0x48] sm:$0xff]
    %v1238 = vld [vmem:[#allocation3 + $0x50] sm:$0xff]
    %v1239 = vld [vmem:[#allocation3 + $0x58] sm:$0xff]
    %v1240 = vld [vmem:[#allocation3 + $0x60] sm:$0xff]
    %v1241 = vld [vmem:[#allocation3 + $0x68] sm:$0xff]
    %v1242 = vld [vmem:[#allocation3 + $0x70] sm:$0xff]
    %v1243 = vld [vmem:[#allocation3 + $0x78] sm:$0xff]
    %v1244 = vld [vmem:[#allocation3 + $0x80] sm:$0xff]
    %v1245 = vld [vmem:[#allocation3 + $0x88] sm:$0xff]
    %vm1246 = vcmask 130048
    %v1248 = vsel %vm1246, %v1225, 0
    %v1251 = vsel %vm1246, %v1227, 0
    %1253 = vmatpush.msra.mxu0 %v1243
    %1254 = vmatpush.msra.mxu0 %v1242
    %1255 = vmatpush.msra.mxu0 %v1241
    %1256 = vmatpush.msra.mxu0 %v1240
    %1257 = vmatpush.msra.mxu0 %v1239
    %1258 = vmatpush.msra.mxu0 %v1238
    %1259 = vmatpush.msra.mxu0 %v1237
    %1260 = vmatpush.msra.mxu0 %v1236
    %1261 = vmatpush.msra.mxu0 %v1235
    %1262 = vmatpush.msra.mxu0 %v1234
    %1263 = vmatpush.msra.mxu0 %v1233
    %1264 = vmatpush.msra.mxu0 %v1232
    %1265 = vmatpush.msra.mxu0 %v1231
    %1266 = vmatpush.msra.mxu0 %v1230
    %1267 = vmatpush.msra.mxu0 %v1229
    %1268 = vmatpush.msra.mxu0 %v1228
    %1269 = vmatmul.f32.gmra.mxu0 %v1224
    %v1270 = vpop.f32.mrf.mxu0
    %v1271 = vadd.f32 0.0, %v1270
    %1272 = vmatmul.f32.gmra.mxu0 %v1226
    %v1273 = vpop.f32.mrf.mxu0
    %v1274 = vadd.f32 0.0, %v1273
    %1275 = vdwg.mxu0
    %1276 = vmatpush.msra.mxu0 0.0
    %1277 = vmatpush.msra.mxu0 0.0
    %1278 = vmatpush.msra.mxu0 0.0
    %1279 = vmatpush.msra.mxu0 0.0
    %1280 = vmatpush.msra.mxu0 0.0
    %1281 = vmatpush.msra.mxu0 0.0
    %1282 = vmatpush.msra.mxu0 0.0
    %1283 = vmatpush.msra.mxu0 0.0
    %1284 = vmatpush.msra.mxu0 0.0
    %1285 = vmatpush.msra.mxu0 0.0
    %1286 = vmatpush.msra.mxu0 0.0
    %1287 = vmatpush.msra.mxu0 0.0
    %1288 = vmatpush.msra.mxu0 0.0
    %1289 = vmatpush.msra.mxu0 0.0
    %1290 = vmatpush.msra.mxu0 %v1245
    %1291 = vmatpush.msra.mxu0 %v1244
    %1292 = vmatmul.f32.gmra.mxu0 %v1248
    %v1293 = vpop.f32.mrf.mxu0
    %v1294 = vadd.f32 %v1271, %v1293
    %1295 = vmatmul.f32.gmra.mxu0 %v1251
    %v1296 = vpop.f32.mrf.mxu0
    %v1297 = vadd.f32 %v1274, %v1296
    %1298 = vdwg.mxu0
    %v1299 = vsel %vm851, %v1294, 0.0
    %1300 = vadd.xlane.f32.xlu0 %v1299
    %v1301 = vpop.xlane.xlu0 %1300
    %v1302 = vsel %vm851, %v1297, 0.0
    %1303 = vadd.xlane.f32.xlu0 %v1302
    %v1304 = vpop.xlane.xlu0 %1303
    %v1305 = vmul.f32 %v1301, 0.03125
    %v1306 = vmul.f32 %v1304, 0.03125
    %v1307 = vsub.f32 %v1294, %v1305
    %v1308 = vsub.f32 %v1297, %v1306
    %v1309 = vmul.f32 %v1307, %v1307
    %v1310 = vmul.f32 %v1308, %v1308
    %v1311 = vsel %vm851, %v1309, 0.0
    %1312 = vadd.xlane.f32.xlu0 %v1311
    %v1313 = vpop.xlane.xlu0 %1312
    %v1314 = vsel %vm851, %v1310, 0.0
    %1315 = vadd.xlane.f32.xlu0 %v1314
    %v1316 = vpop.xlane.xlu0 %1315
    %v1317 = vmul.f32 %v1313, 0.03125
    %v1318 = vmul.f32 %v1316, 0.03125
    %v1319 = vadd.f32 %v1317, 1e-05
    %v1320 = vadd.f32 %v1318, 1e-05
    %v1321 = vrsqrt.pop %v1319
    %v1322 = vmul.f32 %v1321, %v1319
    %v1323 = vmul.f32 %v1322, %v1321
    %v1324 = vmul.f32 0.5, %v1323
    %v1325 = vsub.f32 1.5, %v1324
    %v1326 = vmul.f32 %v1321, %v1325
    %vm1327 = vweird.f32 %v1319
    %vm1328 = vweird.f32 %v1321
    %vm1329 = vmor %vm1327, %vm1328
    %v1330 = vsel %vm1329, %v1321, %v1326
    %v1331 = vrsqrt.pop %v1320
    %v1332 = vmul.f32 %v1331, %v1320
    %v1333 = vmul.f32 %v1332, %v1331
    %v1334 = vmul.f32 0.5, %v1333
    %v1335 = vsub.f32 1.5, %v1334
    %v1336 = vmul.f32 %v1331, %v1335
    %vm1337 = vweird.f32 %v1320
    %vm1338 = vweird.f32 %v1331
    %vm1339 = vmor %vm1337, %vm1338
    %v1340 = vsel %vm1339, %v1331, %v1336
    %v1341 = vmul.f32 %v1307, %v1330
    %v1342 = vmul.f32 %v1308, %v1340
    %vm1343 = vcmp.ge.f32.partialorder %v1341, 0.0
    %vm1344 = vcmp.ge.f32.partialorder %v1342, 0.0
    %v1345 = vmul.f32 %v1341, 0.2
    %v1346 = vmul.f32 %v1342, 0.2
    %v1347 = vsel %vm1343, %v1341, %v1345
    %v1348 = vsel %vm1344, %v1342, %v1346
    %1351 = vrot.lane.b32.xlu0 %v1347, 9
    %v1352 = vpop.permute.xlu0 %1351
    %1353 = vrot.lane.b32.xlu0 %v1348, 9
    %v1354 = vpop.permute.xlu0 %1353
    %1357 = vst.msk [vmem:[#allocation2] sm:$0xff] %vm1048, %v1352
    %1358 = vst.msk [vmem:[#allocation2 + $0x10] sm:$0xff] %vm1048, %v1354
    %v1359 = vld [vmem:[%s17] sm:$0xff]
    %v1360 = vld [vmem:[%s17 + $0x8] sm:$0x1]
    %v1361 = vld [vmem:[#allocation2] sm:$0xff]
    %v1362 = vld [vmem:[#allocation2 + $0x10] sm:$0xff]
    %v1363 = vperm.slane %v1359, 0
    %1365 = vrot.lane.b32.xlu0 %v1363, 4
    %v1366 = vpop.permute.xlu0 %1365
    %v1368 = vmul.f32 %v1361, %v1366
    %v1369 = vmul.f32 %v1362, %v1366
    %1372 = vrot.lane.b32.xlu0 %v1368, 124
    %v1373 = vpop.permute.xlu0 %1372
    %1374 = vrot.lane.b32.xlu0 %v1369, 124
    %v1375 = vpop.permute.xlu0 %1374
    %1378 = vst.msk [vmem:[#allocation3] sm:$0xff] %vm851, %v1373
    %1379 = vst.msk [vmem:[#allocation3 + $0x8] sm:$0xff] %vm851, %v1375
    %v1380 = vld [vmem:[#allocation2] sm:$0xff]
    %v1381 = vld [vmem:[#allocation2 + $0x10] sm:$0xff]
    %v1382 = vperm.slane %v1359, 1
    %1384 = vrot.lane.b32.xlu0 %v1382, 5
    %v1385 = vpop.permute.xlu0 %1384
    %v1387 = vmul.f32 %v1380, %v1385
    %v1388 = vmul.f32 %v1381, %v1385
    %1391 = vrot.lane.b32.xlu0 %v1387, 123
    %v1392 = vpop.permute.xlu0 %1391
    %1393 = vrot.lane.b32.xlu0 %v1388, 123
    %v1394 = vpop.permute.xlu0 %1393
    %1397 = vst.msk [vmem:[#allocation3 + $0x10] sm:$0xff] %vm851, %v1392
    %1398 = vst.msk [vmem:[#allocation3 + $0x18] sm:$0xff] %vm851, %v1394
    %v1399 = vld [vmem:[#allocation2] sm:$0xff]
    %v1400 = vld [vmem:[#allocation2 + $0x10] sm:$0xff]
    %v1401 = vperm.slane %v1359, 2
    %1403 = vrot.lane.b32.xlu0 %v1401, 6
    %v1404 = vpop.permute.xlu0 %1403
    %v1406 = vmul.f32 %v1399, %v1404
    %v1407 = vmul.f32 %v1400, %v1404
    %1410 = vrot.lane.b32.xlu0 %v1406, 122
    %v1411 = vpop.permute.xlu0 %1410
    %1412 = vrot.lane.b32.xlu0 %v1407, 122
    %v1413 = vpop.permute.xlu0 %1412
    %1416 = vst.msk [vmem:[#allocation3 + $0x20] sm:$0xff] %vm851, %v1411
    %1417 = vst.msk [vmem:[#allocation3 + $0x28] sm:$0xff] %vm851, %v1413
    %v1418 = vld [vmem:[#allocation2] sm:$0xff]
    %v1419 = vld [vmem:[#allocation2 + $0x10] sm:$0xff]
    %v1420 = vperm.slane %v1359, 3
    %1422 = vrot.lane.b32.xlu0 %v1420, 8
    %v1423 = vpop.permute.xlu0 %1422
    %v1425 = vmul.f32 %v1418, %v1423
    %v1426 = vmul.f32 %v1419, %v1423
    %1429 = vrot.lane.b32.xlu0 %v1425, 120
    %v1430 = vpop.permute.xlu0 %1429
    %1431 = vrot.lane.b32.xlu0 %v1426, 120
    %v1432 = vpop.permute.xlu0 %1431
    %1435 = vst.msk [vmem:[#allocation3 + $0x30] sm:$0xff] %vm851, %v1430
    %1436 = vst.msk [vmem:[#allocation3 + $0x38] sm:$0xff] %vm851, %v1432
    %v1437 = vld [vmem:[#allocation2] sm:$0xff]
    %v1438 = vld [vmem:[#allocation2 + $0x10] sm:$0xff]
    %v1439 = vperm.slane %v1359, 4
    %1441 = vrot.lane.b32.xlu0 %v1439, 9
    %v1442 = vpop.permute.xlu0 %1441
    %v1444 = vmul.f32 %v1437, %v1442
    %v1445 = vmul.f32 %v1438, %v1442
    %1448 = vrot.lane.b32.xlu0 %v1444, 119
    %v1449 = vpop.permute.xlu0 %1448
    %1450 = vrot.lane.b32.xlu0 %v1445, 119
    %v1451 = vpop.permute.xlu0 %1450
    %1454 = vst.msk [vmem:[#allocation3 + $0x40] sm:$0xff] %vm851, %v1449
    %1455 = vst.msk [vmem:[#allocation3 + $0x48] sm:$0xff] %vm851, %v1451
    %v1456 = vld [vmem:[#allocation2] sm:$0xff]
    %v1457 = vld [vmem:[#allocation2 + $0x10] sm:$0xff]
    %v1458 = vperm.slane %v1359, 5
    %1460 = vrot.lane.b32.xlu0 %v1458, 10
    %v1461 = vpop.permute.xlu0 %1460
    %v1463 = vmul.f32 %v1456, %v1461
    %v1464 = vmul.f32 %v1457, %v1461
    %1467 = vrot.lane.b32.xlu0 %v1463, 118
    %v1468 = vpop.permute.xlu0 %1467
    %1469 = vrot.lane.b32.xlu0 %v1464, 118
    %v1470 = vpop.permute.xlu0 %1469
    %1473 = vst.msk [vmem:[#allocation3 + $0x50] sm:$0xff] %vm851, %v1468
    %1474 = vst.msk [vmem:[#allocation3 + $0x58] sm:$0xff] %vm851, %v1470
    %v1475 = vld [vmem:[#allocation2] sm:$0xff]
    %v1476 = vld [vmem:[#allocation2 + $0x10] sm:$0xff]
    %v1477 = vperm.slane %v1359, 6
    %1479 = vrot.lane.b32.xlu0 %v1477, 12
    %v1480 = vpop.permute.xlu0 %1479
    %v1482 = vmul.f32 %v1475, %v1480
    %v1483 = vmul.f32 %v1476, %v1480
    %1486 = vrot.lane.b32.xlu0 %v1482, 116
    %v1487 = vpop.permute.xlu0 %1486
    %1488 = vrot.lane.b32.xlu0 %v1483, 116
    %v1489 = vpop.permute.xlu0 %1488
    %1492 = vst.msk [vmem:[#allocation3 + $0x60] sm:$0xff] %vm851, %v1487
    %1493 = vst.msk [vmem:[#allocation3 + $0x68] sm:$0xff] %vm851, %v1489
    %v1494 = vld [vmem:[#allocation2] sm:$0xff]
    %v1495 = vld [vmem:[#allocation2 + $0x10] sm:$0xff]
    %v1496 = vperm.slane %v1359, 7
    %1498 = vrot.lane.b32.xlu0 %v1496, 13
    %v1499 = vpop.permute.xlu0 %1498
    %v1501 = vmul.f32 %v1494, %v1499
    %v1502 = vmul.f32 %v1495, %v1499
    %1505 = vrot.lane.b32.xlu0 %v1501, 115
    %v1506 = vpop.permute.xlu0 %1505
    %1507 = vrot.lane.b32.xlu0 %v1502, 115
    %v1508 = vpop.permute.xlu0 %1507
    %1511 = vst.msk [vmem:[#allocation3 + $0x70] sm:$0xff] %vm851, %v1506
    %1512 = vst.msk [vmem:[#allocation3 + $0x78] sm:$0xff] %vm851, %v1508
    %v1513 = vld [vmem:[#allocation2] sm:$0xff]
    %v1514 = vld [vmem:[#allocation2 + $0x10] sm:$0xff]
    %v1515 = vperm.slane %v1360, 0
    %1517 = vrot.lane.b32.xlu0 %v1515, 14
    %v1518 = vpop.permute.xlu0 %1517
    %v1520 = vmul.f32 %v1513, %v1518
    %v1521 = vmul.f32 %v1514, %v1518
    %1524 = vrot.lane.b32.xlu0 %v1520, 114
    %v1525 = vpop.permute.xlu0 %1524
    %1526 = vrot.lane.b32.xlu0 %v1521, 114
    %v1527 = vpop.permute.xlu0 %1526
    %1530 = vst.msk [vmem:[#allocation3 + $0x80] sm:$0xff] %vm851, %v1525
    %1531 = vst.msk [vmem:[#allocation3 + $0x88] sm:$0xff] %vm851, %v1527
    %v1532 = vld [vmem:[%s10] sm:$0xff]
    %v1533 = vld [vmem:[%s10 + $0x8] sm:$0xff]
    %v1534 = vld [vmem:[%s10 + $0x10] sm:$0xff]
    %v1535 = vld [vmem:[%s10 + $0x18] sm:$0xff]
    %v1536 = vld [vmem:[#allocation3] sm:$0xff]
    %v1537 = vld [vmem:[#allocation3 + $0x8] sm:$0xff]
    %v1538 = vld [vmem:[#allocation3 + $0x10] sm:$0xff]
    %v1539 = vld [vmem:[#allocation3 + $0x18] sm:$0xff]
    %v1540 = vld [vmem:[#allocation3 + $0x20] sm:$0xff]
    %v1541 = vld [vmem:[#allocation3 + $0x28] sm:$0xff]
    %v1542 = vld [vmem:[#allocation3 + $0x30] sm:$0xff]
    %v1543 = vld [vmem:[#allocation3 + $0x38] sm:$0xff]
    %v1544 = vld [vmem:[#allocation3 + $0x40] sm:$0xff]
    %v1545 = vld [vmem:[#allocation3 + $0x48] sm:$0xff]
    %v1546 = vld [vmem:[#allocation3 + $0x50] sm:$0xff]
    %v1547 = vld [vmem:[#allocation3 + $0x58] sm:$0xff]
    %v1548 = vld [vmem:[#allocation3 + $0x60] sm:$0xff]
    %v1549 = vld [vmem:[#allocation3 + $0x68] sm:$0xff]
    %v1550 = vld [vmem:[#allocation3 + $0x70] sm:$0xff]
    %v1551 = vld [vmem:[#allocation3 + $0x78] sm:$0xff]
    %v1552 = vld [vmem:[#allocation3 + $0x80] sm:$0xff]
    %v1553 = vld [vmem:[#allocation3 + $0x88] sm:$0xff]
    %v1554 = vld [vmem:[%s11] sm:$0xff]
    %v1555 = vld [vmem:[%s11 + $0x8] sm:$0xff]
    %1557 = vset.pattern.permute.xlu0 0
    %1558 = vperm.xlu0 %1557, %v1554
    %v1559 = vpop.permute.xlu0 %1558
    %1562 = vset.pattern.permute.xlu0 0
    %1563 = vperm.xlu0 %1562, %v1555
    %v1564 = vpop.permute.xlu0 %1563
    %v1567 = vsel %vm1246, %v1533, 0
    %v1570 = vsel %vm1246, %v1535, 0
    %1572 = vmatpush.msra.mxu0 %v1551
    %1573 = vmatpush.msra.mxu0 %v1550
    %1574 = vmatpush.msra.mxu0 %v1549
    %1575 = vmatpush.msra.mxu0 %v1548
    %1576 = vmatpush.msra.mxu0 %v1547
    %1577 = vmatpush.msra.mxu0 %v1546
    %1578 = vmatpush.msra.mxu0 %v1545
    %1579 = vmatpush.msra.mxu0 %v1544
    %1580 = vmatpush.msra.mxu0 %v1543
    %1581 = vmatpush.msra.mxu0 %v1542
    %1582 = vmatpush.msra.mxu0 %v1541
    %1583 = vmatpush.msra.mxu0 %v1540
    %1584 = vmatpush.msra.mxu0 %v1539
    %1585 = vmatpush.msra.mxu0 %v1538
    %1586 = vmatpush.msra.mxu0 %v1537
    %1587 = vmatpush.msra.mxu0 %v1536
    %1588 = vmatmul.f32.gmra.mxu0 %v1532
    %v1589 = vpop.f32.mrf.mxu0
    %v1590 = vadd.f32 %v1559, %v1589
    %1591 = vmatmul.f32.gmra.mxu0 %v1534
    %v1592 = vpop.f32.mrf.mxu0
    %v1593 = vadd.f32 %v1564, %v1592
    %1594 = vdwg.mxu0
    %1595 = vmatpush.msra.mxu0 0.0
    %1596 = vmatpush.msra.mxu0 0.0
    %1597 = vmatpush.msra.mxu0 0.0
    %1598 = vmatpush.msra.mxu0 0.0
    %1599 = vmatpush.msra.mxu0 0.0
    %1600 = vmatpush.msra.mxu0 0.0
    %1601 = vmatpush.msra.mxu0 0.0
    %1602 = vmatpush.msra.mxu0 0.0
    %1603 = vmatpush.msra.mxu0 0.0
    %1604 = vmatpush.msra.mxu0 0.0
    %1605 = vmatpush.msra.mxu0 0.0
    %1606 = vmatpush.msra.mxu0 0.0
    %1607 = vmatpush.msra.mxu0 0.0
    %1608 = vmatpush.msra.mxu0 0.0
    %1609 = vmatpush.msra.mxu0 %v1553
    %1610 = vmatpush.msra.mxu0 %v1552
    %1611 = vmatmul.f32.gmra.mxu0 %v1567
    %v1612 = vpop.f32.mrf.mxu0
    %v1613 = vadd.f32 %v1590, %v1612
    %1614 = vmatmul.f32.gmra.mxu0 %v1570
    %v1615 = vpop.f32.mrf.mxu0
    %v1616 = vadd.f32 %v1593, %v1615
    %1617 = vdwg.mxu0
    %v1618 = vsel %vm851, %v1613, 0.0
    %1619 = vadd.xlane.f32.xlu0 %v1618
    %v1620 = vpop.xlane.xlu0 %1619
    %v1621 = vsel %vm851, %v1616, 0.0
    %1622 = vadd.xlane.f32.xlu0 %v1621
    %v1623 = vpop.xlane.xlu0 %1622
    %v1624 = vmul.f32 %v1620, 0.03125
    %v1625 = vmul.f32 %v1623, 0.03125
    %v1626 = vsub.f32 %v1613, %v1624
    %v1627 = vsub.f32 %v1616, %v1625
    %v1628 = vmul.f32 %v1626, %v1626
    %v1629 = vmul.f32 %v1627, %v1627
    %v1630 = vsel %vm851, %v1628, 0.0
    %1631 = vadd.xlane.f32.xlu0 %v1630
    %v1632 = vpop.xlane.xlu0 %1631
    %v1633 = vsel %vm851, %v1629, 0.0
    %1634 = vadd.xlane.f32.xlu0 %v1633
    %v1635 = vpop.xlane.xlu0 %1634
    %v1636 = vmul.f32 %v1632, 0.03125
    %v1637 = vmul.f32 %v1635, 0.03125
    %v1638 = vadd.f32 %v1636, 1e-05
    %v1639 = vadd.f32 %v1637, 1e-05
    %v1640 = vrsqrt.pop %v1638
    %v1641 = vmul.f32 %v1640, %v1638
    %v1642 = vmul.f32 %v1641, %v1640
    %v1643 = vmul.f32 0.5, %v1642
    %v1644 = vsub.f32 1.5, %v1643
    %v1645 = vmul.f32 %v1640, %v1644
    %vm1646 = vweird.f32 %v1638
    %vm1647 = vweird.f32 %v1640
    %vm1648 = vmor %vm1646, %vm1647
    %v1649 = vsel %vm1648, %v1640, %v1645
    %v1650 = vrsqrt.pop %v1639
    %v1651 = vmul.f32 %v1650, %v1639
    %v1652 = vmul.f32 %v1651, %v1650
    %v1653 = vmul.f32 0.5, %v1652
    %v1654 = vsub.f32 1.5, %v1653
    %v1655 = vmul.f32 %v1650, %v1654
    %vm1656 = vweird.f32 %v1639
    %vm1657 = vweird.f32 %v1650
    %vm1658 = vmor %vm1656, %vm1657
    %v1659 = vsel %vm1658, %v1650, %v1655
    %v1660 = vmul.f32 %v1626, %v1649
    %v1661 = vmul.f32 %v1627, %v1659
    %v1662 = vtanh.pop %v1660
    %v1663 = vtanh.pop %v1661
    %vm1664 = vcmask 122880
    %1665 = vst.msk [vmem:[#allocation4] sm:$0x1] %vm1664, %v1662
    %v1667 = vrot.slane %v1662, 7
    %v1668 = vrot.slane %v1667, 2
    %1669 = vrot.lane.b32.xlu0 %v1668, 16
    %v1670 = vpop.permute.xlu0 %1669
    %vm1672 = vcmask 254080
    %1673 = vst.msk [vmem:[#allocation4] sm:$0x1] %vm1672, %v1670
    %1674 = vst.sshfl [vmem:[#allocation1] sm:$0xff pattern:$0x73625140] %v1662
    %s1675 = scalar_lea.vmem [#allocation1], 1
    %v1676 = vld [vmem:[%s1675] ss:$4 sm:$0xff]
    %1677 = vrot.lane.b32.xlu0 %v1676, 32
    %v1678 = vpop.permute.xlu0 %1677
    %vm1680 = vcmask 385280
    %1681 = vst.msk [vmem:[#allocation4] sm:$0x1] %vm1680, %v1678
    %1682 = vst.sshfl [vmem:[#allocation1] sm:$0xff pattern:$0x73625140] %v1662
    %s1683 = scalar_lea.vmem [#allocation1], 1
    %v1684 = vld [vmem:[%s1683] ss:$4 sm:$0xff]
    %v1685 = vrot.slane %v1684, 7
    %v1686 = vrot.slane %v1685, 2
    %1687 = vrot.lane.b32.xlu0 %v1686, 48
    %v1688 = vpop.permute.xlu0 %1687
    %vm1690 = vcmask 516480
    %1691 = vst.msk [vmem:[#allocation4] sm:$0x1] %vm1690, %v1688
    %1692 = vst.sshfl [vmem:[#allocation1] sm:$0xff pattern:$0x73625140] %v1662
    %s1693 = scalar_lea.vmem [#allocation1], 2
    %v1694 = vld [vmem:[%s1693] ss:$4 sm:$0xff]
    %1695 = vrot.lane.b32.xlu0 %v1694, 64
    %v1696 = vpop.permute.xlu0 %1695
    %vm1698 = vcmask 647680
    %1699 = vst.msk [vmem:[#allocation4] sm:$0x1] %vm1698, %v1696
    %1700 = vst.sshfl [vmem:[#allocation1] sm:$0xff pattern:$0x73625140] %v1662
    %s1701 = scalar_lea.vmem [#allocation1], 2
    %v1702 = vld [vmem:[%s1701] ss:$4 sm:$0xff]
    %v1703 = vrot.slane %v1702, 7
    %v1704 = vrot.slane %v1703, 2
    %1705 = vrot.lane.b32.xlu0 %v1704, 80
    %v1706 = vpop.permute.xlu0 %1705
    %vm1708 = vcmask 778880
    %1709 = vst.msk [vmem:[#allocation4] sm:$0x1] %vm1708, %v1706
    %1710 = vst.sshfl [vmem:[#allocation1] sm:$0xff pattern:$0x73625140] %v1662
    %s1711 = scalar_lea.vmem [#allocation1], 3
    %v1712 = vld [vmem:[%s1711] ss:$4 sm:$0xff]
    %1713 = vrot.lane.b32.xlu0 %v1712, 96
    %v1714 = vpop.permute.xlu0 %1713
    %vm1716 = vcmask 910080
    %1717 = vst.msk [vmem:[#allocation4] sm:$0x1] %vm1716, %v1714
    %1718 = vst.sshfl [vmem:[#allocation1] sm:$0xff pattern:$0x73625140] %v1662
    %s1719 = scalar_lea.vmem [#allocation1], 3
    %v1720 = vld [vmem:[%s1719] ss:$4 sm:$0xff]
    %v1721 = vrot.slane %v1720, 7
    %v1722 = vrot.slane %v1721, 2
    %1723 = vrot.lane.b32.xlu0 %v1722, 112
    %v1724 = vpop.permute.xlu0 %1723
    %vm1726 = vcmask 1041280
    %1727 = vst.msk [vmem:[#allocation4] sm:$0x1] %vm1726, %v1724
    %1728 = vst.msk [vmem:[#allocation4 + $0x2] sm:$0x1] %vm1664, %v1663
    %v1730 = vrot.slane %v1663, 7
    %v1731 = vrot.slane %v1730, 2
    %1732 = vrot.lane.b32.xlu0 %v1731, 16
    %v1733 = vpop.permute.xlu0 %1732
    %1735 = vst.msk [vmem:[#allocation4 + $0x2] sm:$0x1] %vm1672, %v1733
    %1736 = vst.sshfl [vmem:[#allocation1] sm:$0xff pattern:$0x73625140] %v1663
    %s1737 = scalar_lea.vmem [#allocation1], 1
    %v1738 = vld [vmem:[%s1737] ss:$4 sm:$0xff]
    %1739 = vrot.lane.b32.xlu0 %v1738, 32
    %v1740 = vpop.permute.xlu0 %1739
    %1742 = vst.msk [vmem:[#allocation4 + $0x2] sm:$0x1] %vm1680, %v1740
    %1743 = vst.sshfl [vmem:[#allocation1] sm:$0xff pattern:$0x73625140] %v1663
    %s1744 = scalar_lea.vmem [#allocation1], 1
    %v1745 = vld [vmem:[%s1744] ss:$4 sm:$0xff]
    %v1746 = vrot.slane %v1745, 7
    %v1747 = vrot.slane %v1746, 2
    %1748 = vrot.lane.b32.xlu0 %v1747, 48
    %v1749 = vpop.permute.xlu0 %1748
    %1751 = vst.msk [vmem:[#allocation4 + $0x2] sm:$0x1] %vm1690, %v1749
    %1752 = vst.sshfl [vmem:[#allocation1] sm:$0xff pattern:$0x73625140] %v1663
    %s1753 = scalar_lea.vmem [#allocation1], 2
    %v1754 = vld [vmem:[%s1753] ss:$4 sm:$0xff]
    %1755 = vrot.lane.b32.xlu0 %v1754, 64
    %v1756 = vpop.permute.xlu0 %1755
    %1758 = vst.msk [vmem:[#allocation4 + $0x2] sm:$0x1] %vm1698, %v1756
    %1759 = vst.sshfl [vmem:[#allocation1] sm:$0xff pattern:$0x73625140] %v1663
    %s1760 = scalar_lea.vmem [#allocation1], 2
    %v1761 = vld [vmem:[%s1760] ss:$4 sm:$0xff]
    %v1762 = vrot.slane %v1761, 7
    %v1763 = vrot.slane %v1762, 2
    %1764 = vrot.lane.b32.xlu0 %v1763, 80
    %v1765 = vpop.permute.xlu0 %1764
    %1767 = vst.msk [vmem:[#allocation4 + $0x2] sm:$0x1] %vm1708, %v1765
    %1768 = vst.sshfl [vmem:[#allocation1] sm:$0xff pattern:$0x73625140] %v1663
    %s1769 = scalar_lea.vmem [#allocation1], 3
    %v1770 = vld [vmem:[%s1769] ss:$4 sm:$0xff]
    %1771 = vrot.lane.b32.xlu0 %v1770, 96
    %v1772 = vpop.permute.xlu0 %1771
    %1774 = vst.msk [vmem:[#allocation4 + $0x2] sm:$0x1] %vm1716, %v1772
    %1775 = vst.sshfl [vmem:[#allocation1] sm:$0xff pattern:$0x73625140] %v1663
    %s1776 = scalar_lea.vmem [#allocation1], 3
    %v1777 = vld [vmem:[%s1776] ss:$4 sm:$0xff]
    %v1778 = vrot.slane %v1777, 7
    %v1779 = vrot.slane %v1778, 2
    %1780 = vrot.lane.b32.xlu0 %v1779, 112
    %v1781 = vpop.permute.xlu0 %1780
    %1783 = vst.msk [vmem:[#allocation4 + $0x2] sm:$0x1] %vm1726, %v1781
    %1784 = vrot.lane.b32.xlu0 %v1662, 112
    %v1785 = vpop.permute.xlu0 %1784
    %1787 = vst.msk [vmem:[#allocation4 + $0x1] sm:$0x1] %vm1664, %v1785
    %1789 = vst.msk [vmem:[#allocation4 + $0x1] sm:$0x1] %vm1672, %v1668
    %1790 = vst.sshfl [vmem:[#allocation1] sm:$0xff pattern:$0x73625140] %v1662
    %s1791 = scalar_lea.vmem [#allocation1], 1
    %v1792 = vld [vmem:[%s1791] ss:$4 sm:$0xff]
    %1793 = vrot.lane.b32.xlu0 %v1792, 16
    %v1794 = vpop.permute.xlu0 %1793
    %1796 = vst.msk [vmem:[#allocation4 + $0x1] sm:$0x1] %vm1680, %v1794
    %1797 = vst.sshfl [vmem:[#allocation1] sm:$0xff pattern:$0x73625140] %v1662
    %s1798 = scalar_lea.vmem [#allocation1], 1
    %v1799 = vld [vmem:[%s1798] ss:$4 sm:$0xff]
    %v1800 = vrot.slane %v1799, 7
    %v1801 = vrot.slane %v1800, 2
    %1802 = vrot.lane.b32.xlu0 %v1801, 32
    %v1803 = vpop.permute.xlu0 %1802
    %1805 = vst.msk [vmem:[#allocation4 + $0x1] sm:$0x1] %vm1690, %v1803
    %1806 = vst.sshfl [vmem:[#allocation1] sm:$0xff pattern:$0x73625140] %v1662
    %s1807 = scalar_lea.vmem [#allocation1], 2
    %v1808 = vld [vmem:[%s1807] ss:$4 sm:$0xff]
    %1809 = vrot.lane.b32.xlu0 %v1808, 48
    %v1810 = vpop.permute.xlu0 %1809
    %1812 = vst.msk [vmem:[#allocation4 + $0x1] sm:$0x1] %vm1698, %v1810
    %1813 = vst.sshfl [vmem:[#allocation1] sm:$0xff pattern:$0x73625140] %v1662
    %s1814 = scalar_lea.vmem [#allocation1], 2
    %v1815 = vld [vmem:[%s1814] ss:$4 sm:$0xff]
    %v1816 = vrot.slane %v1815, 7
    %v1817 = vrot.slane %v1816, 2
    %1818 = vrot.lane.b32.xlu0 %v1817, 64
    %v1819 = vpop.permute.xlu0 %1818
    %1821 = vst.msk [vmem:[#allocation4 + $0x1] sm:$0x1] %vm1708, %v1819
    %1822 = vst.sshfl [vmem:[#allocation1] sm:$0xff pattern:$0x73625140] %v1662
    %s1823 = scalar_lea.vmem [#allocation1], 3
    %v1824 = vld [vmem:[%s1823] ss:$4 sm:$0xff]
    %1825 = vrot.lane.b32.xlu0 %v1824, 80
    %v1826 = vpop.permute.xlu0 %1825
    %1828 = vst.msk [vmem:[#allocation4 + $0x1] sm:$0x1] %vm1716, %v1826
    %1829 = vst.sshfl [vmem:[#allocation1] sm:$0xff pattern:$0x73625140] %v1662
    %s1830 = scalar_lea.vmem [#allocation1], 3
    %v1831 = vld [vmem:[%s1830] ss:$4 sm:$0xff]
    %v1832 = vrot.slane %v1831, 7
    %v1833 = vrot.slane %v1832, 2
    %1834 = vrot.lane.b32.xlu0 %v1833, 96
    %v1835 = vpop.permute.xlu0 %1834
    %1837 = vst.msk [vmem:[#allocation4 + $0x1] sm:$0x1] %vm1726, %v1835
    %1838 = vrot.lane.b32.xlu0 %v1663, 112
    %v1839 = vpop.permute.xlu0 %1838
    %1841 = vst.msk [vmem:[#allocation4 + $0x3] sm:$0x1] %vm1664, %v1839
    %1843 = vst.msk [vmem:[#allocation4 + $0x3] sm:$0x1] %vm1672, %v1731
    %1844 = vst.sshfl [vmem:[#allocation1] sm:$0xff pattern:$0x73625140] %v1663
    %s1845 = scalar_lea.vmem [#allocation1], 1
    %v1846 = vld [vmem:[%s1845] ss:$4 sm:$0xff]
    %1847 = vrot.lane.b32.xlu0 %v1846, 16
    %v1848 = vpop.permute.xlu0 %1847
    %1850 = vst.msk [vmem:[#allocation4 + $0x3] sm:$0x1] %vm1680, %v1848
    %1851 = vst.sshfl [vmem:[#allocation1] sm:$0xff pattern:$0x73625140] %v1663
    %s1852 = scalar_lea.vmem [#allocation1], 1
    %v1853 = vld [vmem:[%s1852] ss:$4 sm:$0xff]
    %v1854 = vrot.slane %v1853, 7
    %v1855 = vrot.slane %v1854, 2
    %1856 = vrot.lane.b32.xlu0 %v1855, 32
    %v1857 = vpop.permute.xlu0 %1856
    %1859 = vst.msk [vmem:[#allocation4 + $0x3] sm:$0x1] %vm1690, %v1857
    %1860 = vst.sshfl [vmem:[#allocation1] sm:$0xff pattern:$0x73625140] %v1663
    %s1861 = scalar_lea.vmem [#allocation1], 2
    %v1862 = vld [vmem:[%s1861] ss:$4 sm:$0xff]
    %1863 = vrot.lane.b32.xlu0 %v1862, 48
    %v1864 = vpop.permute.xlu0 %1863
    %1866 = vst.msk [vmem:[#allocation4 + $0x3] sm:$0x1] %vm1698, %v1864
    %1867 = vst.sshfl [vmem:[#allocation1] sm:$0xff pattern:$0x73625140] %v1663
    %s1868 = scalar_lea.vmem [#allocation1], 2
    %v1869 = vld [vmem:[%s1868] ss:$4 sm:$0xff]
    %v1870 = vrot.slane %v1869, 7
    %v1871 = vrot.slane %v1870, 2
    %1872 = vrot.lane.b32.xlu0 %v1871, 64
    %v1873 = vpop.permute.xlu0 %1872
    %1875 = vst.msk [vmem:[#allocation4 + $0x3] sm:$0x1] %vm1708, %v1873
    %1876 = vst.sshfl [vmem:[#allocation1] sm:$0xff pattern:$0x73625140] %v1663
    %s1877 = scalar_lea.vmem [#allocation1], 3
    %v1878 = vld [vmem:[%s1877] ss:$4 sm:$0xff]
    %1879 = vrot.lane.b32.xlu0 %v1878, 80
    %v1880 = vpop.permute.xlu0 %1879
    %1882 = vst.msk [vmem:[#allocation4 + $0x3] sm:$0x1] %vm1716, %v1880
    %1883 = vst.sshfl [vmem:[#allocation1] sm:$0xff pattern:$0x73625140] %v1663
    %s1884 = scalar_lea.vmem [#allocation1], 3
    %v1885 = vld [vmem:[%s1884] ss:$4 sm:$0xff]
    %v1886 = vrot.slane %v1885, 7
    %v1887 = vrot.slane %v1886, 2
    %1888 = vrot.lane.b32.xlu0 %v1887, 96
    %v1889 = vpop.permute.xlu0 %1888
    %1891 = vst.msk [vmem:[#allocation4 + $0x3] sm:$0x1] %vm1726, %v1889
    %v1892 = vld [vmem:[#allocation4] sm:$0xf]
    %v1893 = vld [vmem:[%s18] sm:$0xff]
    %v1894 = vld [vmem:[%s18 + $0x8] sm:$0xff]
    %v1895 = vld [vmem:[%s18 + $0x10] sm:$0xff]
    %v1896 = vld [vmem:[%s18 + $0x18] sm:$0xff]
    %v1897 = vld [vmem:[%s18 + $0x20] sm:$0xff]
    %v1898 = vld [vmem:[%s18 + $0x28] sm:$0xff]
    %v1899 = vld [vmem:[%s18 + $0x30] sm:$0xff]
    %v1900 = vld [vmem:[%s18 + $0x38] sm:$0xff]
    %v1901 = vld [vmem:[%s18 + $0x40] sm:$0xff]
    %v1902 = vld [vmem:[%s18 + $0x48] sm:$0xff]
    %v1903 = vld [vmem:[%s18 + $0x50] sm:$0xff]
    %v1904 = vld [vmem:[%s18 + $0x58] sm:$0xff]
    %v1905 = vld [vmem:[%s18 + $0x60] sm:$0xff]
    %v1906 = vld [vmem:[%s18 + $0x68] sm:$0xff]
    %v1907 = vld [vmem:[%s18 + $0x70] sm:$0xff]
    %v1908 = vld [vmem:[%s18 + $0x78] sm:$0xff]
    %v1909 = vld [vmem:[%s18 + $0x80] sm:$0xff]
    %v1910 = vld [vmem:[%s18 + $0x88] sm:$0xff]
    %v1911 = vld [vmem:[%s18 + $0x90] sm:$0xff]
    %v1912 = vld [vmem:[%s18 + $0x98] sm:$0xff]
    %v1913 = vld [vmem:[%s18 + $0xa0] sm:$0xff]
    %v1914 = vld [vmem:[%s18 + $0xa8] sm:$0xff]
    %v1915 = vld [vmem:[%s18 + $0xb0] sm:$0xff]
    %v1916 = vld [vmem:[%s18 + $0xb8] sm:$0xff]
    %v1917 = vld [vmem:[%s18 + $0xc0] sm:$0xff]
    %v1918 = vld [vmem:[%s18 + $0xc8] sm:$0xff]
    %v1919 = vld [vmem:[%s18 + $0xd0] sm:$0xff]
    %v1920 = vld [vmem:[%s18 + $0xd8] sm:$0xff]
    %v1921 = vld [vmem:[%s18 + $0xe0] sm:$0xff]
    %v1922 = vld [vmem:[%s18 + $0xe8] sm:$0xff]
    %v1923 = vld [vmem:[%s18 + $0xf0] sm:$0xff]
    %v1924 = vld [vmem:[%s18 + $0xf8] sm:$0xff]
    %v1925 = vld [vmem:[%s19] sm:$0x1]
    %v1927 = vperm.slane %v1925, 0
    %1930 = vst [vmem:[#allocation1] ss:$4 sm:$0xff] %v1892
    %v1931 = vld.sshfl [vmem:[#allocation1] sm:$0xff pattern:$0x73625140]
    %v1932 = vld.sshfl [vmem:[#allocation1 + $0x8] sm:$0xff pattern:$0x73625140]
    %1935 = vmatpush.msra.mxu0 %v1908
    %1936 = vmatpush.msra.mxu0 %v1907
    %1937 = vmatpush.msra.mxu0 %v1906
    %1938 = vmatpush.msra.mxu0 %v1905
    %1939 = vmatpush.msra.mxu0 %v1904
    %1940 = vmatpush.msra.mxu0 %v1903
    %1941 = vmatpush.msra.mxu0 %v1902
    %1942 = vmatpush.msra.mxu0 %v1901
    %1943 = vmatpush.msra.mxu0 %v1900
    %1944 = vmatpush.msra.mxu0 %v1899
    %1945 = vmatpush.msra.mxu0 %v1898
    %1946 = vmatpush.msra.mxu0 %v1897
    %1947 = vmatpush.msra.mxu0 %v1896
    %1948 = vmatpush.msra.mxu0 %v1895
    %1949 = vmatpush.msra.mxu0 %v1894
    %1950 = vmatpush.msra.mxu0 %v1893
    %1951 = vmatmul.f32.gmra.mxu0 %v1931
    %v1952 = vpop.f32.mrf.mxu0
    %v1953 = vadd.f32 %v1927, %v1952
    %1954 = vdwg.mxu0
    %1955 = vmatpush.msra.mxu0 %v1924
    %1956 = vmatpush.msra.mxu0 %v1923
    %1957 = vmatpush.msra.mxu0 %v1922
    %1958 = vmatpush.msra.mxu0 %v1921
    %1959 = vmatpush.msra.mxu0 %v1920
    %1960 = vmatpush.msra.mxu0 %v1919
    %1961 = vmatpush.msra.mxu0 %v1918
    %1962 = vmatpush.msra.mxu0 %v1917
    %1963 = vmatpush.msra.mxu0 %v1916
    %1964 = vmatpush.msra.mxu0 %v1915
    %1965 = vmatpush.msra.mxu0 %v1914
    %1966 = vmatpush.msra.mxu0 %v1913
    %1967 = vmatpush.msra.mxu0 %v1912
    %1968 = vmatpush.msra.mxu0 %v1911
    %1969 = vmatpush.msra.mxu0 %v1910
    %1970 = vmatpush.msra.mxu0 %v1909
    %1971 = vmatmul.f32.gmra.mxu0 %v1932
    %v1972 = vpop.f32.mrf.mxu0
    %v1973 = vadd.f32 %v1953, %v1972
    %1974 = vdwg.mxu0
    %v1975 = vmax.f32 %v1973, -5.0
    %v1976 = vmin.f32 %v1975, 3.0
    %v1977 = vld [vmem:[%s2] sm:$0x3]
    %v1978 = vmax.f32 %v1977, -10.0
    %v1979 = vmin.f32 %v1978, 10.0
    %v1980 = vmul.f32 %v1976, 0.5
    %v1981 = vmul.f32 %v1980, 1.442695
    %v1982 = vpow.pop %v1981
    %1984 = vrot.lane.b32.xlu0 %v1982, 120
    %v1985 = vpop.permute.xlu0 %1984
    %v1987 = vmul.f32 %v1979, %v1985
    %v1988 = vadd.f32 %v1987, %v1973
    %vm1989 = vcmask 58368
    %1990 = vst.msk [vmem:[#allocation5] sm:$0x3] %vm1989, %v1988
    // Predicated region
    $region82: #{forward.1} parent=1 // pred_check
      _
    $region83: #{forward.1} parent=1 // pred_check_branch
      %1992 = sbr.rel (0) target = $region85
    $region84: #{forward.1} parent=1 // pred_region
      %1994 = vsyncadd [#allocation6], 0
      %s1996 = sshll.u32 [#allocation5], 4
      %s1997 = int_to_ptr.vmem [resolvable:$true] %s1996
      %s1998 = sshll.u32 %s20, 4
      %s1999 = int_to_ptr.hbm [resolvable:$true] %s1998
      %2001 = dma.vmem_to_hbm [thread:$0]  %s1997, 32, %s1999, [#allocation6]
    $region85: #{forward.1} parent=1 // pred_fallthru
      _
    // Predicated region
    $region86: #{forward.1} parent=1 // pred_check
      _
    $region87: #{forward.1} parent=1 // pred_check_branch
      %2003 = sbr.rel (0) target = $region89
    $region88: #{forward.1} parent=1 // pred_region
      %2005 = dma.done [#allocation6], 32
    $region89: #{forward.1} parent=1 // pred_fallthru
      _
    %2006 = vsyncpa [#allocation6], 1

</llo_original>
